<compile_context>
chip_gen: v7x
topology: tpu7x:2x2x1
jax: 0.10.0
libtpu: 0.0.40
codegen_flags: <defaults>
</compile_context>

<pallas_src>
import functools

import numpy as np
import jax
import jax.numpy as jnp
from jax.experimental import pallas as pl
from jax.experimental.pallas import tpu as pltpu


# ----------------------------------------------------------------------------- #
# Fused encoder kernel: one image per grid step, everything VMEM-resident
# ----------------------------------------------------------------------------- #
def _encoder_kernel(p1_ref, w1_ref, b1_ref,
                    gh2_ref, wr2_ref, b2_ref,
                    gh3_ref, wr3_ref, b3_ref,
                    r1aw_ref, r1ab_ref, r1bw_ref, r1bb_ref,
                    r2aw_ref, r2ab_ref, r2bw_ref, r2bb_ref,
                    o_ref):
    f32 = jnp.float32

    def mm(a, b):
        return jnp.dot(a, b, preferred_element_type=f32)

    def relu(v):
        return jnp.maximum(v, 0.0)

    def conv_rows(x, gh_ref, wr_ref, b_ref):
        # y = sum_kh (Gh_kh @ x) @ Wr_kh + b
        #   Gh_kh : (Ho, Hi) 0/1 row-gather (vertical tap + zero padding, exact)
        #   Wr_kh : (Wi*Ci, Wo*Co) dense weight with all horizontal taps folded in
        acc = None
        for kh in range(gh_ref.shape[0]):
            t = mm(mm(gh_ref[kh], x), wr_ref[kh])
            acc = t if acc is None else acc + t
        return acc + b_ref[...]

    x1 = p1_ref[0]                                              # (H1, W1*K1*K1*Cin)
    # conv1 (4x4, s2, p1): wrapper-side im2col -> single lane-dense matmul
    h1 = relu(mm(x1, w1_ref[...]) + b1_ref[...])                # (H1, W1*n_hid)
    # conv2 (4x4, s2, p1)
    h2 = relu(conv_rows(h1, gh2_ref, wr2_ref, b2_ref))          # (H2, W2*c2)
    # conv3 (3x3, s1, p1)
    h3 = relu(conv_rows(h2, gh3_ref, wr3_ref, b3_ref))          # (H3, W3*c2)
    # ResBlock 1: relu(conv1x1(relu(conv3x3(x))) + x)
    t1 = relu(conv_rows(h3, gh3_ref, r1aw_ref, r1ab_ref))       # (H3, W3*cb)
    h4 = relu(mm(t1, r1bw_ref[...]) + r1bb_ref[...] + h3)
    # ResBlock 2
    t2 = relu(conv_rows(h4, gh3_ref, r2aw_ref, r2ab_ref))
    h5 = relu(mm(t2, r2bw_ref[...]) + r2bb_ref[...] + h4)

    o_ref[0] = h5.astype(o_ref.dtype)


# ----------------------------------------------------------------------------- #
# Trace-time helpers (pure numpy constants + tiny XLA glue).  All constants are
# per-image (independent of batch size N).
# ----------------------------------------------------------------------------- #
@functools.lru_cache(maxsize=None)
def _height_gather(K, S, P, Hi):
    """0/1 matrices (K, Ho, Hi): row ho of tap kh selects input row ho*S+kh-P
    (all-zero row for padded taps)."""
    Ho = (Hi + 2 * P - K) // S + 1
    G = np.zeros((K, Ho, Hi), np.float32)
    for kh in range(K):
        for ho in range(Ho):
            hi = ho * S + kh - P
            if 0 <= hi < Hi:
                G[kh, ho, hi] = 1.0
    return G, Ho


@functools.lru_cache(maxsize=None)
def _width_select(K, S, P, Wi):
    """0/1 selection tensor (K, Wi, Wo): S[kw, wi, wo] = 1 iff wi == wo*S+kw-P."""
    Wo = (Wi + 2 * P - K) // S + 1
    Ssel = np.zeros((K, Wi, Wo), np.float32)
    for kw in range(K):
        for wo in range(Wo):
            wi = wo * S + kw - P
            if 0 <= wi < Wi:
                Ssel[kw, wi, wo] = 1.0
    return Ssel, Wo


def _fold_width(w_hwio, S, P, Wi):
    """(K,K,Ci,Co) -> (K, Wi*Ci, Wo*Co): all horizontal taps and padding folded
    into one dense right-matrix per vertical tap, for the (w, c)-minor layout."""
    K, _, Ci, Co = w_hwio.shape
    Ssel, Wo = _width_select(K, S, P, Wi)
    R = jnp.einsum("kab,hkio->haibo", jnp.asarray(Ssel), w_hwio)  # (K,Wi,Ci,Wo,Co)
    return R.reshape(K, Wi * Ci, Wo * Co), Wo


def _extract_patches(x_nhwc, K, S, P):
    """im2col for the HBM-resident network input.
    NHWC -> (N, Ho, Wo*K*K*C), column order (wo, kh, kw, c)."""
    N, H, W, C = x_nhwc.shape
    xp = jnp.pad(x_nhwc, ((0, 0), (P, P), (P, P), (0, 0)))
    Ho = (H + 2 * P - K) // S + 1
    Wo = (W + 2 * P - K) // S + 1
    cols = []
    for kh in range(K):
        for kw in range(K):
            cols.append(xp[:, kh:kh + Ho * S:S, kw:kw + Wo * S:S, :])
    p = jnp.stack(cols, axis=3)                       # (N, Ho, Wo, K*K, C)
    return p.reshape(N, Ho, Wo * K * K * C), Ho, Wo


# ----------------------------------------------------------------------------- #
# Model: DeepMindEncoder
# ----------------------------------------------------------------------------- #
def init_params(key, input_channels=3, n_hid=16):
    def conv_w(k, kh, kw, cin, cout, scale=0.08):
        return scale * jax.random.normal(k, (kh, kw, cin, cout), jnp.float32)

    keys = jax.random.split(key, 14)
    c2 = 2 * n_hid
    cb = c2 // 4
    return {
        "w1": conv_w(keys[0], 4, 4, input_channels, n_hid),
        "b1": 0.01 * jax.random.normal(keys[1], (n_hid,), jnp.float32),
        "w2": conv_w(keys[2], 4, 4, n_hid, c2),
        "b2": 0.01 * jax.random.normal(keys[3], (c2,), jnp.float32),
        "w3": conv_w(keys[4], 3, 3, c2, c2),
        "b3": 0.01 * jax.random.normal(keys[5], (c2,), jnp.float32),
        # ResBlock 1
        "rb1_wa": conv_w(keys[6], 3, 3, c2, cb),
        "rb1_ba": 0.01 * jax.random.normal(keys[7], (cb,), jnp.float32),
        "rb1_wb": conv_w(keys[8], 1, 1, cb, c2),
        "rb1_bb": 0.01 * jax.random.normal(keys[9], (c2,), jnp.float32),
        # ResBlock 2
        "rb2_wa": conv_w(keys[10], 3, 3, c2, cb),
        "rb2_ba": 0.01 * jax.random.normal(keys[11], (cb,), jnp.float32),
        "rb2_wb": conv_w(keys[12], 1, 1, cb, c2),
        "rb2_bb": 0.01 * jax.random.normal(keys[13], (c2,), jnp.float32),
    }


@jax.jit
def deepmind_encoder(x_nchw, params):
    f32 = jnp.float32
    N, Cin, H, W = x_nchw.shape
    K1 = params["w1"].shape[0]
    n_hid = params["w1"].shape[-1]
    c2 = 2 * n_hid
    cb = c2 // 4

    x = jnp.transpose(x_nchw, (0, 2, 3, 1)).astype(f32)           # NCHW -> NHWC

    # ---- conv1: im2col in the wrapper (its input is the only HBM activation) ----
    patches, H1, W1 = _extract_patches(x, K=K1, S=2, P=1)         # (N, H1, W1*K1*K1*Cin)
    w1_bd = jnp.kron(jnp.eye(W1, dtype=f32),
                     params["w1"].reshape(K1 * K1 * Cin, n_hid))  # block-diag over w_out
    b1r = jnp.tile(params["b1"], W1).reshape(1, -1)

    # ---- conv2 (4x4, s2, p1) ----
    gh2_np, H2 = _height_gather(4, 2, 1, H1)
    wr2, W2 = _fold_width(params["w2"], 2, 1, W1)                 # (4, W1*n_hid, W2*c2)
    b2r = jnp.tile(params["b2"], W2).reshape(1, -1)

    # ---- conv3 + both ResBlock 3x3 convs share (3x3, s1, p1) geometry ----
    gh3_np, H3 = _height_gather(3, 1, 1, H2)
    wr3, W3 = _fold_width(params["w3"], 1, 1, W2)                 # (3, W2*c2, W3*c2)
    b3r = jnp.tile(params["b3"], W3).reshape(1, -1)

    r1aw, _ = _fold_width(params["rb1_wa"], 1, 1, W3)             # (3, W3*c2, W3*cb)
    r1ab = jnp.tile(params["rb1_ba"], W3).reshape(1, -1)
    r1bw = jnp.kron(jnp.eye(W3, dtype=f32), params["rb1_wb"].reshape(cb, c2))
    r1bb = jnp.tile(params["rb1_bb"], W3).reshape(1, -1)
    r2aw, _ = _fold_width(params["rb2_wa"], 1, 1, W3)
    r2ab = jnp.tile(params["rb2_ba"], W3).reshape(1, -1)
    r2bw = jnp.kron(jnp.eye(W3, dtype=f32), params["rb2_wb"].reshape(cb, c2))
    r2bb = jnp.tile(params["rb2_bb"], W3).reshape(1, -1)

    gh2 = jnp.asarray(gh2_np)                                     # (4, H2, H1) per-image
    gh3 = jnp.asarray(gh3_np)                                     # (3, H3, H2) per-image

    args = (patches, w1_bd, b1r,
            gh2, wr2, b2r,
            gh3, wr3, b3r,
            r1aw, r1ab, r1bw, r1bb,
            r2aw, r2ab, r2bw, r2bb)

    # Per-image parallel grid; weights / gather constants get constant index_maps
    # so they stay VMEM-resident across grid steps.
    def img_map(i):
        return (i, 0, 0)

    def const_map(ndim):
        return lambda i: (0,) * ndim

    in_specs = [pl.BlockSpec((1,) + patches.shape[1:], img_map)]
    for a in args[1:]:
        in_specs.append(pl.BlockSpec(a.shape, const_map(a.ndim)))
    out_specs = pl.BlockSpec((1, H3, W3 * c2), img_map)

    def mmf(m, k, n):
        return 2 * m * k * n

    flops_img = (mmf(H1, patches.shape[-1], W1 * n_hid)
                 + 4 * (mmf(H2, H1, W1 * n_hid) + mmf(H2, W1 * n_hid, W2 * c2))
                 + 3 * (mmf(H3, H2, W2 * c2) + mmf(H3, W2 * c2, W3 * c2))
                 + 2 * (3 * (mmf(H3, H3, W3 * c2) + mmf(H3, W3 * c2, W3 * cb))
                        + mmf(H3, W3 * cb, W3 * c2)))
    bytes_accessed = 4 * (sum(int(np.prod(a.shape)) for a in args) + N * H3 * W3 * c2)

    out_flat = pl.pallas_call(
        _encoder_kernel,
        out_shape=jax.ShapeDtypeStruct((N, H3, W3 * c2), f32),
        grid=(N,),
        in_specs=in_specs,
        out_specs=out_specs,
        compiler_params=pltpu.CompilerParams(
            dimension_semantics=("parallel",)),
        cost_estimate=pl.CostEstimate(flops=N * flops_img,
                                      transcendentals=0,
                                      bytes_accessed=bytes_accessed),
    )(*args)

    out = out_flat.reshape(N, H3, W3, c2)                          # cols (w, c) -> NHWC
    return jnp.transpose(out, (0, 3, 1, 2))                        # NHWC -> NCHW


# ----------------------------------------------------------------------------- #
# Pure-JAX (XLA conv) reference for correctness checking
# ----------------------------------------------------------------------------- #
def _conv_ref(x_nhwc, w_hwio, b, S, P):
    y = jax.lax.conv_general_dilated(
        x_nhwc, w_hwio, (S, S), [(P, P), (P, P)],
        dimension_numbers=("NHWC", "HWIO", "NHWC"))
    return y + b


def deepmind_encoder_ref(x_nchw, p):
    x = jnp.transpose(x_nchw, (0, 2, 3, 1))
    x = jax.nn.relu(_conv_ref(x, p["w1"], p["b1"], 2, 1))
    x = jax.nn.relu(_conv_ref(x, p["w2"], p["b2"], 2, 1))
    x = jax.nn.relu(_conv_ref(x, p["w3"], p["b3"], 1, 1))
    for k in ("rb1", "rb2"):
        h = jax.nn.relu(_conv_ref(x, p[f"{k}_wa"], p[f"{k}_ba"], 1, 1))
        x = jax.nn.relu(_conv_ref(h, p[f"{k}_wb"], p[f"{k}_bb"], 1, 0) + x)
    return jnp.transpose(x, (0, 3, 1, 2))


# ----------------------------------------------------------------------------- #
if __name__ == "__main__":
    key = jax.random.PRNGKey(0)
    k_x, k_p = jax.random.split(key)

    input_channels, n_hid = 3, 16
    x = jax.random.normal(k_x, (2, input_channels, 16, 16), jnp.float32)  # NCHW
    params = init_params(k_p, input_channels=input_channels, n_hid=n_hid)

    out = jax.block_until_ready(deepmind_encoder(x, params))

    # shape check: output_channels = 2*n_hid, output_stride = 4
    assert out.shape == (2, 2 * n_hid, 4, 4), out.shape

    ref = jax.block_until_ready(deepmind_encoder_ref(x, params))
    assert jnp.allclose(out, ref, rtol=1e-4, atol=1e-4), float(jnp.max(jnp.abs(out - ref)))

    print("KERNEL_OK")
</pallas_src>

<mosaic_0001>
module attributes {stable_mosaic.version = 11 : i64} {
  func.func @_encoder_kernel(%arg0: i32, %arg1: memref<1x8x384xf32, #tpu.memory_space<vmem>>, %arg2: memref<384x128xf32, #tpu.memory_space<vmem>>, %arg3: memref<1x128xf32, #tpu.memory_space<vmem>>, %arg4: memref<4x4x8xf32, #tpu.memory_space<vmem>>, %arg5: memref<4x128x128xf32, #tpu.memory_space<vmem>>, %arg6: memref<1x128xf32, #tpu.memory_space<vmem>>, %arg7: memref<3x4x4xf32, #tpu.memory_space<vmem>>, %arg8: memref<3x128x128xf32, #tpu.memory_space<vmem>>, %arg9: memref<1x128xf32, #tpu.memory_space<vmem>>, %arg10: memref<3x128x32xf32, #tpu.memory_space<vmem>>, %arg11: memref<1x32xf32, #tpu.memory_space<vmem>>, %arg12: memref<32x128xf32, #tpu.memory_space<vmem>>, %arg13: memref<1x128xf32, #tpu.memory_space<vmem>>, %arg14: memref<3x128x32xf32, #tpu.memory_space<vmem>>, %arg15: memref<1x32xf32, #tpu.memory_space<vmem>>, %arg16: memref<32x128xf32, #tpu.memory_space<vmem>>, %arg17: memref<1x128xf32, #tpu.memory_space<vmem>>, %arg18: memref<1x4x128xf32, #tpu.memory_space<vmem>>) attributes {dimension_semantics = [#tpu.dimension_semantics<parallel>], iteration_bounds = array<i64: 2>, scalar_prefetch = 0 : i64, scratch_operands = 0 : i64, tpu.core_type = #tpu.core_type<tc>, window_params = [{transform_indices = @transform_0, window_bounds = array<i64: 1, 8, 384>}, {pipeline_mode = #tpu.pipeline_mode<synchronous>, transform_indices = @transform_1, window_bounds = array<i64: 384, 128>}, {pipeline_mode = #tpu.pipeline_mode<synchronous>, transform_indices = @transform_2, window_bounds = array<i64: 1, 128>}, {pipeline_mode = #tpu.pipeline_mode<synchronous>, transform_indices = @transform_3, window_bounds = array<i64: 4, 4, 8>}, {pipeline_mode = #tpu.pipeline_mode<synchronous>, transform_indices = @transform_4, window_bounds = array<i64: 4, 128, 128>}, {pipeline_mode = #tpu.pipeline_mode<synchronous>, transform_indices = @transform_5, window_bounds = array<i64: 1, 128>}, {pipeline_mode = #tpu.pipeline_mode<synchronous>, transform_indices = @transform_6, window_bounds = array<i64: 3, 4, 4>}, {pipeline_mode = #tpu.pipeline_mode<synchronous>, transform_indices = @transform_7, window_bounds = array<i64: 3, 128, 128>}, {pipeline_mode = #tpu.pipeline_mode<synchronous>, transform_indices = @transform_8, window_bounds = array<i64: 1, 128>}, {pipeline_mode = #tpu.pipeline_mode<synchronous>, transform_indices = @transform_9, window_bounds = array<i64: 3, 128, 32>}, {pipeline_mode = #tpu.pipeline_mode<synchronous>, transform_indices = @transform_10, window_bounds = array<i64: 1, 32>}, {pipeline_mode = #tpu.pipeline_mode<synchronous>, transform_indices = @transform_11, window_bounds = array<i64: 32, 128>}, {pipeline_mode = #tpu.pipeline_mode<synchronous>, transform_indices = @transform_12, window_bounds = array<i64: 1, 128>}, {pipeline_mode = #tpu.pipeline_mode<synchronous>, transform_indices = @transform_13, window_bounds = array<i64: 3, 128, 32>}, {pipeline_mode = #tpu.pipeline_mode<synchronous>, transform_indices = @transform_14, window_bounds = array<i64: 1, 32>}, {pipeline_mode = #tpu.pipeline_mode<synchronous>, transform_indices = @transform_15, window_bounds = array<i64: 32, 128>}, {pipeline_mode = #tpu.pipeline_mode<synchronous>, transform_indices = @transform_16, window_bounds = array<i64: 1, 128>}, {transform_indices = @transform_17, window_bounds = array<i64: 1, 4, 128>}]} {
    %c0 = arith.constant 0 : index
    %c0_0 = arith.constant 0 : index
    %c0_1 = arith.constant 0 : index
    %0 = vector.load %arg1[%c0, %c0_0, %c0_1] : memref<1x8x384xf32, #tpu.memory_space<vmem>>, vector<1x8x384xf32>
    %1 = vector.shape_cast %0 : vector<1x8x384xf32> to vector<8x384xf32>
    %c0_2 = arith.constant 0 : index
    %c0_3 = arith.constant 0 : index
    %2 = vector.load %arg2[%c0_2, %c0_3] : memref<384x128xf32, #tpu.memory_space<vmem>>, vector<384x128xf32>
    %cst = arith.constant dense<0.000000e+00> : vector<8x128xf32>
    %3 = tpu.matmul %1, %2, %cst {dimension_numbers = #tpu.dot_dimension_numbers<[1], [0], [0], [1], [0, 0, 1, 1], [], []>} : vector<8x384xf32>, vector<384x128xf32>, vector<8x128xf32> -> vector<8x128xf32>
    %c0_4 = arith.constant 0 : index
    %c0_5 = arith.constant 0 : index
    %4 = vector.load %arg3[%c0_4, %c0_5] : memref<1x128xf32, #tpu.memory_space<vmem>>, vector<1x128xf32>
    %5 = vector.broadcast %4 : vector<1x128xf32> to vector<8x128xf32>
    %6 = arith.addf %3, %5 : vector<8x128xf32>
    %cst_6 = arith.constant 0.000000e+00 : f32
    %7 = vector.broadcast %cst_6 : f32 to vector<8x128xf32>
    %8 = arith.maximumf %6, %7 : vector<8x128xf32>
    %c0_7 = arith.constant 0 : index
    %c0_8 = arith.constant 0 : index
    %c0_9 = arith.constant 0 : index
    %9 = vector.load %arg4[%c0_7, %c0_8, %c0_9] : memref<4x4x8xf32, #tpu.memory_space<vmem>>, vector<1x4x8xf32>
    %10 = vector.shape_cast %9 : vector<1x4x8xf32> to vector<4x8xf32>
    %cst_10 = arith.constant dense<0.000000e+00> : vector<4x128xf32>
    %11 = tpu.matmul %10, %8, %cst_10 {dimension_numbers = #tpu.dot_dimension_numbers<[1], [0], [0], [1], [0, 0, 1, 1], [], []>} : vector<4x8xf32>, vector<8x128xf32>, vector<4x128xf32> -> vector<4x128xf32>
    %c0_11 = arith.constant 0 : index
    %c0_12 = arith.constant 0 : index
    %c0_13 = arith.constant 0 : index
    %12 = vector.load %arg5[%c0_11, %c0_12, %c0_13] : memref<4x128x128xf32, #tpu.memory_space<vmem>>, vector<1x128x128xf32>
    %13 = vector.shape_cast %12 : vector<1x128x128xf32> to vector<128x128xf32>
    %cst_14 = arith.constant dense<0.000000e+00> : vector<4x128xf32>
    %14 = tpu.matmul %11, %13, %cst_14 {dimension_numbers = #tpu.dot_dimension_numbers<[1], [0], [0], [1], [0, 0, 1, 1], [], []>} : vector<4x128xf32>, vector<128x128xf32>, vector<4x128xf32> -> vector<4x128xf32>
    %c1 = arith.constant 1 : index
    %c0_15 = arith.constant 0 : index
    %c0_16 = arith.constant 0 : index
    %15 = vector.load %arg4[%c1, %c0_15, %c0_16] : memref<4x4x8xf32, #tpu.memory_space<vmem>>, vector<1x4x8xf32>
    %16 = vector.shape_cast %15 : vector<1x4x8xf32> to vector<4x8xf32>
    %cst_17 = arith.constant dense<0.000000e+00> : vector<4x128xf32>
    %17 = tpu.matmul %16, %8, %cst_17 {dimension_numbers = #tpu.dot_dimension_numbers<[1], [0], [0], [1], [0, 0, 1, 1], [], []>} : vector<4x8xf32>, vector<8x128xf32>, vector<4x128xf32> -> vector<4x128xf32>
    %c1_18 = arith.constant 1 : index
    %c0_19 = arith.constant 0 : index
    %c0_20 = arith.constant 0 : index
    %18 = vector.load %arg5[%c1_18, %c0_19, %c0_20] : memref<4x128x128xf32, #tpu.memory_space<vmem>>, vector<1x128x128xf32>
    %19 = vector.shape_cast %18 : vector<1x128x128xf32> to vector<128x128xf32>
    %cst_21 = arith.constant dense<0.000000e+00> : vector<4x128xf32>
    %20 = tpu.matmul %17, %19, %cst_21 {dimension_numbers = #tpu.dot_dimension_numbers<[1], [0], [0], [1], [0, 0, 1, 1], [], []>} : vector<4x128xf32>, vector<128x128xf32>, vector<4x128xf32> -> vector<4x128xf32>
    %21 = arith.addf %14, %20 : vector<4x128xf32>
    %c2 = arith.constant 2 : index
    %c0_22 = arith.constant 0 : index
    %c0_23 = arith.constant 0 : index
    %22 = vector.load %arg4[%c2, %c0_22, %c0_23] : memref<4x4x8xf32, #tpu.memory_space<vmem>>, vector<1x4x8xf32>
    %23 = vector.shape_cast %22 : vector<1x4x8xf32> to vector<4x8xf32>
    %cst_24 = arith.constant dense<0.000000e+00> : vector<4x128xf32>
    %24 = tpu.matmul %23, %8, %cst_24 {dimension_numbers = #tpu.dot_dimension_numbers<[1], [0], [0], [1], [0, 0, 1, 1], [], []>} : vector<4x8xf32>, vector<8x128xf32>, vector<4x128xf32> -> vector<4x128xf32>
    %c2_25 = arith.constant 2 : index
    %c0_26 = arith.constant 0 : index
    %c0_27 = arith.constant 0 : index
    %25 = vector.load %arg5[%c2_25, %c0_26, %c0_27] : memref<4x128x128xf32, #tpu.memory_space<vmem>>, vector<1x128x128xf32>
    %26 = vector.shape_cast %25 : vector<1x128x128xf32> to vector<128x128xf32>
    %cst_28 = arith.constant dense<0.000000e+00> : vector<4x128xf32>
    %27 = tpu.matmul %24, %26, %cst_28 {dimension_numbers = #tpu.dot_dimension_numbers<[1], [0], [0], [1], [0, 0, 1, 1], [], []>} : vector<4x128xf32>, vector<128x128xf32>, vector<4x128xf32> -> vector<4x128xf32>
    %28 = arith.addf %21, %27 : vector<4x128xf32>
    %c3 = arith.constant 3 : index
    %c0_29 = arith.constant 0 : index
    %c0_30 = arith.constant 0 : index
    %29 = vector.load %arg4[%c3, %c0_29, %c0_30] : memref<4x4x8xf32, #tpu.memory_space<vmem>>, vector<1x4x8xf32>
    %30 = vector.shape_cast %29 : vector<1x4x8xf32> to vector<4x8xf32>
    %cst_31 = arith.constant dense<0.000000e+00> : vector<4x128xf32>
    %31 = tpu.matmul %30, %8, %cst_31 {dimension_numbers = #tpu.dot_dimension_numbers<[1], [0], [0], [1], [0, 0, 1, 1], [], []>} : vector<4x8xf32>, vector<8x128xf32>, vector<4x128xf32> -> vector<4x128xf32>
    %c3_32 = arith.constant 3 : index
    %c0_33 = arith.constant 0 : index
    %c0_34 = arith.constant 0 : index
    %32 = vector.load %arg5[%c3_32, %c0_33, %c0_34] : memref<4x128x128xf32, #tpu.memory_space<vmem>>, vector<1x128x128xf32>
    %33 = vector.shape_cast %32 : vector<1x128x128xf32> to vector<128x128xf32>
    %cst_35 = arith.constant dense<0.000000e+00> : vector<4x128xf32>
    %34 = tpu.matmul %31, %33, %cst_35 {dimension_numbers = #tpu.dot_dimension_numbers<[1], [0], [0], [1], [0, 0, 1, 1], [], []>} : vector<4x128xf32>, vector<128x128xf32>, vector<4x128xf32> -> vector<4x128xf32>
    %35 = arith.addf %28, %34 : vector<4x128xf32>
    %c0_36 = arith.constant 0 : index
    %c0_37 = arith.constant 0 : index
    %36 = vector.load %arg6[%c0_36, %c0_37] : memref<1x128xf32, #tpu.memory_space<vmem>>, vector<1x128xf32>
    %37 = vector.broadcast %36 : vector<1x128xf32> to vector<4x128xf32>
    %38 = arith.addf %35, %37 : vector<4x128xf32>
    %cst_38 = arith.constant 0.000000e+00 : f32
    %39 = vector.broadcast %cst_38 : f32 to vector<4x128xf32>
    %40 = arith.maximumf %38, %39 : vector<4x128xf32>
    %c0_39 = arith.constant 0 : index
    %c0_40 = arith.constant 0 : index
    %c0_41 = arith.constant 0 : index
    %41 = vector.load %arg7[%c0_39, %c0_40, %c0_41] : memref<3x4x4xf32, #tpu.memory_space<vmem>>, vector<1x4x4xf32>
    %42 = vector.shape_cast %41 : vector<1x4x4xf32> to vector<4x4xf32>
    %cst_42 = arith.constant dense<0.000000e+00> : vector<4x128xf32>
    %43 = tpu.matmul %42, %40, %cst_42 {dimension_numbers = #tpu.dot_dimension_numbers<[1], [0], [0], [1], [0, 0, 1, 1], [], []>} : vector<4x4xf32>, vector<4x128xf32>, vector<4x128xf32> -> vector<4x128xf32>
    %c0_43 = arith.constant 0 : index
    %c0_44 = arith.constant 0 : index
    %c0_45 = arith.constant 0 : index
    %44 = vector.load %arg8[%c0_43, %c0_44, %c0_45] : memref<3x128x128xf32, #tpu.memory_space<vmem>>, vector<1x128x128xf32>
    %45 = vector.shape_cast %44 : vector<1x128x128xf32> to vector<128x128xf32>
    %cst_46 = arith.constant dense<0.000000e+00> : vector<4x128xf32>
    %46 = tpu.matmul %43, %45, %cst_46 {dimension_numbers = #tpu.dot_dimension_numbers<[1], [0], [0], [1], [0, 0, 1, 1], [], []>} : vector<4x128xf32>, vector<128x128xf32>, vector<4x128xf32> -> vector<4x128xf32>
    %c1_47 = arith.constant 1 : index
    %c0_48 = arith.constant 0 : index
    %c0_49 = arith.constant 0 : index
    %47 = vector.load %arg7[%c1_47, %c0_48, %c0_49] : memref<3x4x4xf32, #tpu.memory_space<vmem>>, vector<1x4x4xf32>
    %48 = vector.shape_cast %47 : vector<1x4x4xf32> to vector<4x4xf32>
    %cst_50 = arith.constant dense<0.000000e+00> : vector<4x128xf32>
    %49 = tpu.matmul %48, %40, %cst_50 {dimension_numbers = #tpu.dot_dimension_numbers<[1], [0], [0], [1], [0, 0, 1, 1], [], []>} : vector<4x4xf32>, vector<4x128xf32>, vector<4x128xf32> -> vector<4x128xf32>
    %c1_51 = arith.constant 1 : index
    %c0_52 = arith.constant 0 : index
    %c0_53 = arith.constant 0 : index
    %50 = vector.load %arg8[%c1_51, %c0_52, %c0_53] : memref<3x128x128xf32, #tpu.memory_space<vmem>>, vector<1x128x128xf32>
    %51 = vector.shape_cast %50 : vector<1x128x128xf32> to vector<128x128xf32>
    %cst_54 = arith.constant dense<0.000000e+00> : vector<4x128xf32>
    %52 = tpu.matmul %49, %51, %cst_54 {dimension_numbers = #tpu.dot_dimension_numbers<[1], [0], [0], [1], [0, 0, 1, 1], [], []>} : vector<4x128xf32>, vector<128x128xf32>, vector<4x128xf32> -> vector<4x128xf32>
    %53 = arith.addf %46, %52 : vector<4x128xf32>
    %c2_55 = arith.constant 2 : index
    %c0_56 = arith.constant 0 : index
    %c0_57 = arith.constant 0 : index
    %54 = vector.load %arg7[%c2_55, %c0_56, %c0_57] : memref<3x4x4xf32, #tpu.memory_space<vmem>>, vector<1x4x4xf32>
    %55 = vector.shape_cast %54 : vector<1x4x4xf32> to vector<4x4xf32>
    %cst_58 = arith.constant dense<0.000000e+00> : vector<4x128xf32>
    %56 = tpu.matmul %55, %40, %cst_58 {dimension_numbers = #tpu.dot_dimension_numbers<[1], [0], [0], [1], [0, 0, 1, 1], [], []>} : vector<4x4xf32>, vector<4x128xf32>, vector<4x128xf32> -> vector<4x128xf32>
    %c2_59 = arith.constant 2 : index
    %c0_60 = arith.constant 0 : index
    %c0_61 = arith.constant 0 : index
    %57 = vector.load %arg8[%c2_59, %c0_60, %c0_61] : memref<3x128x128xf32, #tpu.memory_space<vmem>>, vector<1x128x128xf32>
    %58 = vector.shape_cast %57 : vector<1x128x128xf32> to vector<128x128xf32>
    %cst_62 = arith.constant dense<0.000000e+00> : vector<4x128xf32>
    %59 = tpu.matmul %56, %58, %cst_62 {dimension_numbers = #tpu.dot_dimension_numbers<[1], [0], [0], [1], [0, 0, 1, 1], [], []>} : vector<4x128xf32>, vector<128x128xf32>, vector<4x128xf32> -> vector<4x128xf32>
    %60 = arith.addf %53, %59 : vector<4x128xf32>
    %c0_63 = arith.constant 0 : index
    %c0_64 = arith.constant 0 : index
    %61 = vector.load %arg9[%c0_63, %c0_64] : memref<1x128xf32, #tpu.memory_space<vmem>>, vector<1x128xf32>
    %62 = vector.broadcast %61 : vector<1x128xf32> to vector<4x128xf32>
    %63 = arith.addf %60, %62 : vector<4x128xf32>
    %cst_65 = arith.constant 0.000000e+00 : f32
    %64 = vector.broadcast %cst_65 : f32 to vector<4x128xf32>
    %65 = arith.maximumf %63, %64 : vector<4x128xf32>
    %c0_66 = arith.constant 0 : index
    %c0_67 = arith.constant 0 : index
    %c0_68 = arith.constant 0 : index
    %66 = vector.load %arg7[%c0_66, %c0_67, %c0_68] : memref<3x4x4xf32, #tpu.memory_space<vmem>>, vector<1x4x4xf32>
    %67 = vector.shape_cast %66 : vector<1x4x4xf32> to vector<4x4xf32>
    %cst_69 = arith.constant dense<0.000000e+00> : vector<4x128xf32>
    %68 = tpu.matmul %67, %65, %cst_69 {dimension_numbers = #tpu.dot_dimension_numbers<[1], [0], [0], [1], [0, 0, 1, 1], [], []>} : vector<4x4xf32>, vector<4x128xf32>, vector<4x128xf32> -> vector<4x128xf32>
    %c0_70 = arith.constant 0 : index
    %c0_71 = arith.constant 0 : index
    %c0_72 = arith.constant 0 : index
    %69 = vector.load %arg10[%c0_70, %c0_71, %c0_72] : memref<3x128x32xf32, #tpu.memory_space<vmem>>, vector<1x128x32xf32>
    %70 = vector.shape_cast %69 : vector<1x128x32xf32> to vector<128x32xf32>
    %cst_73 = arith.constant dense<0.000000e+00> : vector<4x32xf32>
    %71 = tpu.matmul %68, %70, %cst_73 {dimension_numbers = #tpu.dot_dimension_numbers<[1], [0], [0], [1], [0, 0, 1, 1], [], []>} : vector<4x128xf32>, vector<128x32xf32>, vector<4x32xf32> -> vector<4x32xf32>
    %c1_74 = arith.constant 1 : index
    %c0_75 = arith.constant 0 : index
    %c0_76 = arith.constant 0 : index
    %72 = vector.load %arg7[%c1_74, %c0_75, %c0_76] : memref<3x4x4xf32, #tpu.memory_space<vmem>>, vector<1x4x4xf32>
    %73 = vector.shape_cast %72 : vector<1x4x4xf32> to vector<4x4xf32>
    %cst_77 = arith.constant dense<0.000000e+00> : vector<4x128xf32>
    %74 = tpu.matmul %73, %65, %cst_77 {dimension_numbers = #tpu.dot_dimension_numbers<[1], [0], [0], [1], [0, 0, 1, 1], [], []>} : vector<4x4xf32>, vector<4x128xf32>, vector<4x128xf32> -> vector<4x128xf32>
    %c1_78 = arith.constant 1 : index
    %c0_79 = arith.constant 0 : index
    %c0_80 = arith.constant 0 : index
    %75 = vector.load %arg10[%c1_78, %c0_79, %c0_80] : memref<3x128x32xf32, #tpu.memory_space<vmem>>, vector<1x128x32xf32>
    %76 = vector.shape_cast %75 : vector<1x128x32xf32> to vector<128x32xf32>
    %cst_81 = arith.constant dense<0.000000e+00> : vector<4x32xf32>
    %77 = tpu.matmul %74, %76, %cst_81 {dimension_numbers = #tpu.dot_dimension_numbers<[1], [0], [0], [1], [0, 0, 1, 1], [], []>} : vector<4x128xf32>, vector<128x32xf32>, vector<4x32xf32> -> vector<4x32xf32>
    %78 = arith.addf %71, %77 : vector<4x32xf32>
    %c2_82 = arith.constant 2 : index
    %c0_83 = arith.constant 0 : index
    %c0_84 = arith.constant 0 : index
    %79 = vector.load %arg7[%c2_82, %c0_83, %c0_84] : memref<3x4x4xf32, #tpu.memory_space<vmem>>, vector<1x4x4xf32>
    %80 = vector.shape_cast %79 : vector<1x4x4xf32> to vector<4x4xf32>
    %cst_85 = arith.constant dense<0.000000e+00> : vector<4x128xf32>
    %81 = tpu.matmul %80, %65, %cst_85 {dimension_numbers = #tpu.dot_dimension_numbers<[1], [0], [0], [1], [0, 0, 1, 1], [], []>} : vector<4x4xf32>, vector<4x128xf32>, vector<4x128xf32> -> vector<4x128xf32>
    %c2_86 = arith.constant 2 : index
    %c0_87 = arith.constant 0 : index
    %c0_88 = arith.constant 0 : index
    %82 = vector.load %arg10[%c2_86, %c0_87, %c0_88] : memref<3x128x32xf32, #tpu.memory_space<vmem>>, vector<1x128x32xf32>
    %83 = vector.shape_cast %82 : vector<1x128x32xf32> to vector<128x32xf32>
    %cst_89 = arith.constant dense<0.000000e+00> : vector<4x32xf32>
    %84 = tpu.matmul %81, %83, %cst_89 {dimension_numbers = #tpu.dot_dimension_numbers<[1], [0], [0], [1], [0, 0, 1, 1], [], []>} : vector<4x128xf32>, vector<128x32xf32>, vector<4x32xf32> -> vector<4x32xf32>
    %85 = arith.addf %78, %84 : vector<4x32xf32>
    %c0_90 = arith.constant 0 : index
    %c0_91 = arith.constant 0 : index
    %86 = vector.load %arg11[%c0_90, %c0_91] : memref<1x32xf32, #tpu.memory_space<vmem>>, vector<1x32xf32>
    %87 = vector.broadcast %86 : vector<1x32xf32> to vector<4x32xf32>
    %88 = arith.addf %85, %87 : vector<4x32xf32>
    %cst_92 = arith.constant 0.000000e+00 : f32
    %89 = vector.broadcast %cst_92 : f32 to vector<4x32xf32>
    %90 = arith.maximumf %88, %89 : vector<4x32xf32>
    %c0_93 = arith.constant 0 : index
    %c0_94 = arith.constant 0 : index
    %91 = vector.load %arg12[%c0_93, %c0_94] : memref<32x128xf32, #tpu.memory_space<vmem>>, vector<32x128xf32>
    %cst_95 = arith.constant dense<0.000000e+00> : vector<4x128xf32>
    %92 = tpu.matmul %90, %91, %cst_95 {dimension_numbers = #tpu.dot_dimension_numbers<[1], [0], [0], [1], [0, 0, 1, 1], [], []>} : vector<4x32xf32>, vector<32x128xf32>, vector<4x128xf32> -> vector<4x128xf32>
    %c0_96 = arith.constant 0 : index
    %c0_97 = arith.constant 0 : index
    %93 = vector.load %arg13[%c0_96, %c0_97] : memref<1x128xf32, #tpu.memory_space<vmem>>, vector<1x128xf32>
    %94 = vector.broadcast %93 : vector<1x128xf32> to vector<4x128xf32>
    %95 = arith.addf %92, %94 : vector<4x128xf32>
    %96 = arith.addf %95, %65 : vector<4x128xf32>
    %cst_98 = arith.constant 0.000000e+00 : f32
    %97 = vector.broadcast %cst_98 : f32 to vector<4x128xf32>
    %98 = arith.maximumf %96, %97 : vector<4x128xf32>
    %c0_99 = arith.constant 0 : index
    %c0_100 = arith.constant 0 : index
    %c0_101 = arith.constant 0 : index
    %99 = vector.load %arg7[%c0_99, %c0_100, %c0_101] : memref<3x4x4xf32, #tpu.memory_space<vmem>>, vector<1x4x4xf32>
    %100 = vector.shape_cast %99 : vector<1x4x4xf32> to vector<4x4xf32>
    %cst_102 = arith.constant dense<0.000000e+00> : vector<4x128xf32>
    %101 = tpu.matmul %100, %98, %cst_102 {dimension_numbers = #tpu.dot_dimension_numbers<[1], [0], [0], [1], [0, 0, 1, 1], [], []>} : vector<4x4xf32>, vector<4x128xf32>, vector<4x128xf32> -> vector<4x128xf32>
    %c0_103 = arith.constant 0 : index
    %c0_104 = arith.constant 0 : index
    %c0_105 = arith.constant 0 : index
    %102 = vector.load %arg14[%c0_103, %c0_104, %c0_105] : memref<3x128x32xf32, #tpu.memory_space<vmem>>, vector<1x128x32xf32>
    %103 = vector.shape_cast %102 : vector<1x128x32xf32> to vector<128x32xf32>
    %cst_106 = arith.constant dense<0.000000e+00> : vector<4x32xf32>
    %104 = tpu.matmul %101, %103, %cst_106 {dimension_numbers = #tpu.dot_dimension_numbers<[1], [0], [0], [1], [0, 0, 1, 1], [], []>} : vector<4x128xf32>, vector<128x32xf32>, vector<4x32xf32> -> vector<4x32xf32>
    %c1_107 = arith.constant 1 : index
    %c0_108 = arith.constant 0 : index
    %c0_109 = arith.constant 0 : index
    %105 = vector.load %arg7[%c1_107, %c0_108, %c0_109] : memref<3x4x4xf32, #tpu.memory_space<vmem>>, vector<1x4x4xf32>
    %106 = vector.shape_cast %105 : vector<1x4x4xf32> to vector<4x4xf32>
    %cst_110 = arith.constant dense<0.000000e+00> : vector<4x128xf32>
    %107 = tpu.matmul %106, %98, %cst_110 {dimension_numbers = #tpu.dot_dimension_numbers<[1], [0], [0], [1], [0, 0, 1, 1], [], []>} : vector<4x4xf32>, vector<4x128xf32>, vector<4x128xf32> -> vector<4x128xf32>
    %c1_111 = arith.constant 1 : index
    %c0_112 = arith.constant 0 : index
    %c0_113 = arith.constant 0 : index
    %108 = vector.load %arg14[%c1_111, %c0_112, %c0_113] : memref<3x128x32xf32, #tpu.memory_space<vmem>>, vector<1x128x32xf32>
    %109 = vector.shape_cast %108 : vector<1x128x32xf32> to vector<128x32xf32>
    %cst_114 = arith.constant dense<0.000000e+00> : vector<4x32xf32>
    %110 = tpu.matmul %107, %109, %cst_114 {dimension_numbers = #tpu.dot_dimension_numbers<[1], [0], [0], [1], [0, 0, 1, 1], [], []>} : vector<4x128xf32>, vector<128x32xf32>, vector<4x32xf32> -> vector<4x32xf32>
    %111 = arith.addf %104, %110 : vector<4x32xf32>
    %c2_115 = arith.constant 2 : index
    %c0_116 = arith.constant 0 : index
    %c0_117 = arith.constant 0 : index
    %112 = vector.load %arg7[%c2_115, %c0_116, %c0_117] : memref<3x4x4xf32, #tpu.memory_space<vmem>>, vector<1x4x4xf32>
    %113 = vector.shape_cast %112 : vector<1x4x4xf32> to vector<4x4xf32>
    %cst_118 = arith.constant dense<0.000000e+00> : vector<4x128xf32>
    %114 = tpu.matmul %113, %98, %cst_118 {dimension_numbers = #tpu.dot_dimension_numbers<[1], [0], [0], [1], [0, 0, 1, 1], [], []>} : vector<4x4xf32>, vector<4x128xf32>, vector<4x128xf32> -> vector<4x128xf32>
    %c2_119 = arith.constant 2 : index
    %c0_120 = arith.constant 0 : index
    %c0_121 = arith.constant 0 : index
    %115 = vector.load %arg14[%c2_119, %c0_120, %c0_121] : memref<3x128x32xf32, #tpu.memory_space<vmem>>, vector<1x128x32xf32>
    %116 = vector.shape_cast %115 : vector<1x128x32xf32> to vector<128x32xf32>
    %cst_122 = arith.constant dense<0.000000e+00> : vector<4x32xf32>
    %117 = tpu.matmul %114, %116, %cst_122 {dimension_numbers = #tpu.dot_dimension_numbers<[1], [0], [0], [1], [0, 0, 1, 1], [], []>} : vector<4x128xf32>, vector<128x32xf32>, vector<4x32xf32> -> vector<4x32xf32>
    %118 = arith.addf %111, %117 : vector<4x32xf32>
    %c0_123 = arith.constant 0 : index
    %c0_124 = arith.constant 0 : index
    %119 = vector.load %arg15[%c0_123, %c0_124] : memref<1x32xf32, #tpu.memory_space<vmem>>, vector<1x32xf32>
    %120 = vector.broadcast %119 : vector<1x32xf32> to vector<4x32xf32>
    %121 = arith.addf %118, %120 : vector<4x32xf32>
    %cst_125 = arith.constant 0.000000e+00 : f32
    %122 = vector.broadcast %cst_125 : f32 to vector<4x32xf32>
    %123 = arith.maximumf %121, %122 : vector<4x32xf32>
    %c0_126 = arith.constant 0 : index
    %c0_127 = arith.constant 0 : index
    %124 = vector.load %arg16[%c0_126, %c0_127] : memref<32x128xf32, #tpu.memory_space<vmem>>, vector<32x128xf32>
    %cst_128 = arith.constant dense<0.000000e+00> : vector<4x128xf32>
    %125 = tpu.matmul %123, %124, %cst_128 {dimension_numbers = #tpu.dot_dimension_numbers<[1], [0], [0], [1], [0, 0, 1, 1], [], []>} : vector<4x32xf32>, vector<32x128xf32>, vector<4x128xf32> -> vector<4x128xf32>
    %c0_129 = arith.constant 0 : index
    %c0_130 = arith.constant 0 : index
    %126 = vector.load %arg17[%c0_129, %c0_130] : memref<1x128xf32, #tpu.memory_space<vmem>>, vector<1x128xf32>
    %127 = vector.broadcast %126 : vector<1x128xf32> to vector<4x128xf32>
    %128 = arith.addf %125, %127 : vector<4x128xf32>
    %129 = arith.addf %128, %98 : vector<4x128xf32>
    %cst_131 = arith.constant 0.000000e+00 : f32
    %130 = vector.broadcast %cst_131 : f32 to vector<4x128xf32>
    %131 = arith.maximumf %129, %130 : vector<4x128xf32>
    %c0_132 = arith.constant 0 : index
    %c0_133 = arith.constant 0 : index
    %c0_134 = arith.constant 0 : index
    %132 = vector.load %arg18[%c0_132, %c0_133, %c0_134] : memref<1x4x128xf32, #tpu.memory_space<vmem>>, vector<1x4x128xf32>
    %133 = vector.shape_cast %132 : vector<1x4x128xf32> to vector<4x128xf32>
    %134 = vector.shape_cast %131 : vector<4x128xf32> to vector<1x4x128xf32>
    tpu.vector_store %arg18[%c0_132, %c0_133, %c0_134], %134 {strides = array<i32>} : memref<1x4x128xf32, #tpu.memory_space<vmem>>, vector<1x4x128xf32>,
    return
  }
  func.func @transform_0(%arg0: i32) -> (i32, i32, i32) {
    %c0_i32 = arith.constant 0 : i32
    %c0_i32_0 = arith.constant 0 : i32
    %c0_i32_1 = arith.constant 0 : i32
    return %arg0, %c0_i32, %c0_i32_0 : i32, i32, i32
  }
  func.func @transform_1(%arg0: i32) -> (i32, i32) {
    %c0_i32 = arith.constant 0 : i32
    %c0_i32_0 = arith.constant 0 : i32
    %c0_i32_1 = arith.constant 0 : i32
    return %c0_i32, %c0_i32_0 : i32, i32
  }
  func.func @transform_2(%arg0: i32) -> (i32, i32) {
    %c0_i32 = arith.constant 0 : i32
    %c0_i32_0 = arith.constant 0 : i32
    %c0_i32_1 = arith.constant 0 : i32
    return %c0_i32, %c0_i32_0 : i32, i32
  }
  func.func @transform_3(%arg0: i32) -> (i32, i32, i32) {
    %c0_i32 = arith.constant 0 : i32
    %c0_i32_0 = arith.constant 0 : i32
    %c0_i32_1 = arith.constant 0 : i32
    %c0_i32_2 = arith.constant 0 : i32
    return %c0_i32, %c0_i32_0, %c0_i32_1 : i32, i32, i32
  }
  func.func @transform_4(%arg0: i32) -> (i32, i32, i32) {
    %c0_i32 = arith.constant 0 : i32
    %c0_i32_0 = arith.constant 0 : i32
    %c0_i32_1 = arith.constant 0 : i32
    %c0_i32_2 = arith.constant 0 : i32
    return %c0_i32, %c0_i32_0, %c0_i32_1 : i32, i32, i32
  }
  func.func @transform_5(%arg0: i32) -> (i32, i32) {
    %c0_i32 = arith.constant 0 : i32
    %c0_i32_0 = arith.constant 0 : i32
    %c0_i32_1 = arith.constant 0 : i32
    return %c0_i32, %c0_i32_0 : i32, i32
  }
  func.func @transform_6(%arg0: i32) -> (i32, i32, i32) {
    %c0_i32 = arith.constant 0 : i32
    %c0_i32_0 = arith.constant 0 : i32
    %c0_i32_1 = arith.constant 0 : i32
    %c0_i32_2 = arith.constant 0 : i32
    return %c0_i32, %c0_i32_0, %c0_i32_1 : i32, i32, i32
  }
  func.func @transform_7(%arg0: i32) -> (i32, i32, i32) {
    %c0_i32 = arith.constant 0 : i32
    %c0_i32_0 = arith.constant 0 : i32
    %c0_i32_1 = arith.constant 0 : i32
    %c0_i32_2 = arith.constant 0 : i32
    return %c0_i32, %c0_i32_0, %c0_i32_1 : i32, i32, i32
  }
  func.func @transform_8(%arg0: i32) -> (i32, i32) {
    %c0_i32 = arith.constant 0 : i32
    %c0_i32_0 = arith.constant 0 : i32
    %c0_i32_1 = arith.constant 0 : i32
    return %c0_i32, %c0_i32_0 : i32, i32
  }
  func.func @transform_9(%arg0: i32) -> (i32, i32, i32) {
    %c0_i32 = arith.constant 0 : i32
    %c0_i32_0 = arith.constant 0 : i32
    %c0_i32_1 = arith.constant 0 : i32
    %c0_i32_2 = arith.constant 0 : i32
    return %c0_i32, %c0_i32_0, %c0_i32_1 : i32, i32, i32
  }
  func.func @transform_10(%arg0: i32) -> (i32, i32) {
    %c0_i32 = arith.constant 0 : i32
    %c0_i32_0 = arith.constant 0 : i32
    %c0_i32_1 = arith.constant 0 : i32
    return %c0_i32, %c0_i32_0 : i32, i32
  }
  func.func @transform_11(%arg0: i32) -> (i32, i32) {
    %c0_i32 = arith.constant 0 : i32
    %c0_i32_0 = arith.constant 0 : i32
    %c0_i32_1 = arith.constant 0 : i32
    return %c0_i32, %c0_i32_0 : i32, i32
  }
  func.func @transform_12(%arg0: i32) -> (i32, i32) {
    %c0_i32 = arith.constant 0 : i32
    %c0_i32_0 = arith.constant 0 : i32
    %c0_i32_1 = arith.constant 0 : i32
    return %c0_i32, %c0_i32_0 : i32, i32
  }
  func.func @transform_13(%arg0: i32) -> (i32, i32, i32) {
    %c0_i32 = arith.constant 0 : i32
    %c0_i32_0 = arith.constant 0 : i32
    %c0_i32_1 = arith.constant 0 : i32
    %c0_i32_2 = arith.constant 0 : i32
    return %c0_i32, %c0_i32_0, %c0_i32_1 : i32, i32, i32
  }
  func.func @transform_14(%arg0: i32) -> (i32, i32) {
    %c0_i32 = arith.constant 0 : i32
    %c0_i32_0 = arith.constant 0 : i32
    %c0_i32_1 = arith.constant 0 : i32
    return %c0_i32, %c0_i32_0 : i32, i32
  }
  func.func @transform_15(%arg0: i32) -> (i32, i32) {
    %c0_i32 = arith.constant 0 : i32
    %c0_i32_0 = arith.constant 0 : i32
    %c0_i32_1 = arith.constant 0 : i32
    return %c0_i32, %c0_i32_0 : i32, i32
  }
  func.func @transform_16(%arg0: i32) -> (i32, i32) {
    %c0_i32 = arith.constant 0 : i32
    %c0_i32_0 = arith.constant 0 : i32
    %c0_i32_1 = arith.constant 0 : i32
    return %c0_i32, %c0_i32_0 : i32, i32
  }
  func.func @transform_17(%arg0: i32) -> (i32, i32, i32) {
    %c0_i32 = arith.constant 0 : i32
    %c0_i32_0 = arith.constant 0 : i32
    %c0_i32_1 = arith.constant 0 : i32
    return %arg0, %c0_i32, %c0_i32_0 : i32, i32, i32
  }
}

</mosaic_0001>

<llo_original>
// kernel: mul.4
$region0: #{mul.4}
  %s0 = inlined_call_operand.vmem [shape: f32[4,4,3,16], index: 0, kind: input, shape index: {}]
  %s1 = inlined_call_operand.vmem [shape: f32[48,16], index: 1, kind: output, shape index: {}]
  $region1: #{mul.4} parent=0
    #allocation0 [shape = 'u8[65536]{0}', space=vmem, size = 0x10000, scoped, tag = 'scoped mem for input reshape']
    %s3 = sshllo.u32 0, 4
    %s4 = smul.addr 4, 15
    %s5 = scalar_lea.vmem %s0, %s4
    %v6 = vld [vmem:[%s5] sm:%s3]
    %s7 = scalar_lea.vmem [#allocation0], 120
    %8 = vst [vmem:[%s7] sm:%s3] %v6
    %s9 = smul.addr 4, 14
    %s10 = scalar_lea.vmem %s0, %s9
    %v11 = vld [vmem:[%s10] sm:%s3]
    %s12 = scalar_lea.vmem [#allocation0], 112
    %13 = vst [vmem:[%s12] sm:%s3] %v11
    %s14 = smul.addr 4, 13
    %s15 = scalar_lea.vmem %s0, %s14
    %v16 = vld [vmem:[%s15] sm:%s3]
    %s17 = scalar_lea.vmem [#allocation0], 104
    %18 = vst [vmem:[%s17] sm:%s3] %v16
    %s19 = smul.addr 4, 12
    %s20 = scalar_lea.vmem %s0, %s19
    %v21 = vld [vmem:[%s20] sm:%s3]
    %s22 = scalar_lea.vmem [#allocation0], 96
    %23 = vst [vmem:[%s22] sm:%s3] %v21
    %s24 = smul.addr 4, 11
    %s25 = scalar_lea.vmem %s0, %s24
    %v26 = vld [vmem:[%s25] sm:%s3]
    %s27 = scalar_lea.vmem [#allocation0], 88
    %28 = vst [vmem:[%s27] sm:%s3] %v26
    %s29 = smul.addr 4, 10
    %s30 = scalar_lea.vmem %s0, %s29
    %v31 = vld [vmem:[%s30] sm:%s3]
    %s32 = scalar_lea.vmem [#allocation0], 80
    %33 = vst [vmem:[%s32] sm:%s3] %v31
    %s34 = smul.addr 4, 9
    %s35 = scalar_lea.vmem %s0, %s34
    %v36 = vld [vmem:[%s35] sm:%s3]
    %s37 = scalar_lea.vmem [#allocation0], 72
    %38 = vst [vmem:[%s37] sm:%s3] %v36
    %s39 = smul.addr 4, 8
    %s40 = scalar_lea.vmem %s0, %s39
    %v41 = vld [vmem:[%s40] sm:%s3]
    %s42 = scalar_lea.vmem [#allocation0], 64
    %43 = vst [vmem:[%s42] sm:%s3] %v41
    %s44 = smul.addr 4, 7
    %s45 = scalar_lea.vmem %s0, %s44
    %v46 = vld [vmem:[%s45] sm:%s3]
    %s47 = scalar_lea.vmem [#allocation0], 56
    %48 = vst [vmem:[%s47] sm:%s3] %v46
    %s49 = smul.addr 4, 6
    %s50 = scalar_lea.vmem %s0, %s49
    %v51 = vld [vmem:[%s50] sm:%s3]
    %s52 = scalar_lea.vmem [#allocation0], 48
    %53 = vst [vmem:[%s52] sm:%s3] %v51
    %s54 = smul.addr 4, 5
    %s55 = scalar_lea.vmem %s0, %s54
    %v56 = vld [vmem:[%s55] sm:%s3]
    %s57 = scalar_lea.vmem [#allocation0], 40
    %58 = vst [vmem:[%s57] sm:%s3] %v56
    %s59 = smul.addr 4, 4
    %s60 = scalar_lea.vmem %s0, %s59
    %v61 = vld [vmem:[%s60] sm:%s3]
    %s62 = scalar_lea.vmem [#allocation0], 32
    %63 = vst [vmem:[%s62] sm:%s3] %v61
    %s64 = smul.addr 4, 3
    %s65 = scalar_lea.vmem %s0, %s64
    %v66 = vld [vmem:[%s65] sm:%s3]
    %s67 = scalar_lea.vmem [#allocation0], 24
    %68 = vst [vmem:[%s67] sm:%s3] %v66
    %s69 = smul.addr 4, 2
    %s70 = scalar_lea.vmem %s0, %s69
    %v71 = vld [vmem:[%s70] sm:%s3]
    %s72 = scalar_lea.vmem [#allocation0], 16
    %73 = vst [vmem:[%s72] sm:%s3] %v71
    %s74 = scalar_lea.vmem %s0, 4
    %v75 = vld [vmem:[%s74] sm:%s3]
    %s76 = scalar_lea.vmem [#allocation0], 8
    %77 = vst [vmem:[%s76] sm:%s3] %v75
    %v78 = vld [vmem:[%s0] sm:%s3]
    %79 = vst [vmem:[#allocation0] sm:%s3] %v78
    %v80 = vld [vmem:[#allocation0] sm:$0x7]
    %vm81 = vcmask 130048
    %82 = vst.msk [vmem:[%s1] sm:$0x7] %vm81, %v80
    %s83 = scalar_lea.vmem [#allocation0], 8
    %v84 = vld [vmem:[%s83] sm:$0x7]
    %vm85 = vcmask 130048
    %s86 = scalar_lea.vmem %s1, 3
    %87 = vst.msk [vmem:[%s86] sm:$0x7] %vm85, %v84
    %s88 = scalar_lea.vmem [#allocation0], 16
    %v89 = vld [vmem:[%s88] sm:$0x7]
    %vm90 = vcmask 130048
    %s91 = scalar_lea.vmem %s1, 6
    %92 = vst.msk [vmem:[%s91] sm:$0x7] %vm90, %v89
    %s93 = scalar_lea.vmem [#allocation0], 24
    %v94 = vld [vmem:[%s93] sm:$0x7]
    %vm95 = vcmask 130048
    %s96 = scalar_lea.vmem %s1, 9
    %97 = vst.msk [vmem:[%s96] sm:$0x7] %vm95, %v94
    %s98 = scalar_lea.vmem [#allocation0], 32
    %v99 = vld [vmem:[%s98] sm:$0x7]
    %vm100 = vcmask 130048
    %s101 = scalar_lea.vmem %s1, 12
    %102 = vst.msk [vmem:[%s101] sm:$0x7] %vm100, %v99
    %s103 = scalar_lea.vmem [#allocation0], 40
    %v104 = vld [vmem:[%s103] sm:$0x7]
    %vm105 = vcmask 130048
    %s106 = scalar_lea.vmem %s1, 15
    %107 = vst.msk [vmem:[%s106] sm:$0x7] %vm105, %v104
    %s108 = scalar_lea.vmem [#allocation0], 48
    %v109 = vld [vmem:[%s108] sm:$0x7]
    %vm110 = vcmask 130048
    %s111 = scalar_lea.vmem %s1, 18
    %112 = vst.msk [vmem:[%s111] sm:$0x7] %vm110, %v109
    %s113 = scalar_lea.vmem [#allocation0], 56
    %v114 = vld [vmem:[%s113] sm:$0x7]
    %vm115 = vcmask 130048
    %s116 = scalar_lea.vmem %s1, 21
    %117 = vst.msk [vmem:[%s116] sm:$0x7] %vm115, %v114
    %s118 = scalar_lea.vmem [#allocation0], 64
    %v119 = vld [vmem:[%s118] sm:$0x7]
    %vm120 = vcmask 130048
    %s121 = scalar_lea.vmem %s1, 24
    %122 = vst.msk [vmem:[%s121] sm:$0x7] %vm120, %v119
    %s123 = scalar_lea.vmem [#allocation0], 72
    %v124 = vld [vmem:[%s123] sm:$0x7]
    %vm125 = vcmask 130048
    %s126 = scalar_lea.vmem %s1, 27
    %127 = vst.msk [vmem:[%s126] sm:$0x7] %vm125, %v124
    %s128 = scalar_lea.vmem [#allocation0], 80
    %v129 = vld [vmem:[%s128] sm:$0x7]
    %vm130 = vcmask 130048
    %s131 = scalar_lea.vmem %s1, 30
    %132 = vst.msk [vmem:[%s131] sm:$0x7] %vm130, %v129
    %s133 = scalar_lea.vmem [#allocation0], 88
    %v134 = vld [vmem:[%s133] sm:$0x7]
    %vm135 = vcmask 130048
    %s136 = scalar_lea.vmem %s1, 33
    %137 = vst.msk [vmem:[%s136] sm:$0x7] %vm135, %v134
    %s138 = scalar_lea.vmem [#allocation0], 96
    %v139 = vld [vmem:[%s138] sm:$0x7]
    %vm140 = vcmask 130048
    %s141 = scalar_lea.vmem %s1, 36
    %142 = vst.msk [vmem:[%s141] sm:$0x7] %vm140, %v139
    %s143 = scalar_lea.vmem [#allocation0], 104
    %v144 = vld [vmem:[%s143] sm:$0x7]
    %vm145 = vcmask 130048
    %s146 = scalar_lea.vmem %s1, 39
    %147 = vst.msk [vmem:[%s146] sm:$0x7] %vm145, %v144
    %s148 = scalar_lea.vmem [#allocation0], 112
    %v149 = vld [vmem:[%s148] sm:$0x7]
    %vm150 = vcmask 130048
    %s151 = scalar_lea.vmem %s1, 42
    %152 = vst.msk [vmem:[%s151] sm:$0x7] %vm150, %v149
    %s153 = scalar_lea.vmem [#allocation0], 120
    %v154 = vld [vmem:[%s153] sm:$0x7]
    %vm155 = vcmask 130048
    %s156 = scalar_lea.vmem %s1, 45
    %157 = vst.msk [vmem:[%s156] sm:$0x7] %vm155, %v154

// kernel: tile.38
$region0: #{tile.38}
  #allocation0 [shape = 's32[1]{0}', space=sflag, size = 0x4, scoped, tag = 'scoped memory for tile.38']
  %s0 = inlined_call_operand.vmem [shape: f32[16], index: 0, kind: input, shape index: {}]
  %s1 = inlined_call_operand.vmem [shape: f32[8,16], index: 1, kind: output, shape index: {}]
  // Predicated region
  $region2: #{tile.38} parent=0 // pred_check
    _
  $region3: #{tile.38} parent=0 // pred_check_branch
    %3 = sbr.rel (0) target = $region5
  $region4: #{tile.38} parent=0 // pred_region
    _
  $region5: #{tile.38} parent=0 // pred_fallthru
    _
  %v4 = vld [vmem:[%s0] ss:$0 sm:$0xff]
  %5 = vst [vmem:[%s1] sm:$0xff] %v4

// kernel: tile.39
$region0: #{tile.39}
  %s0 = inlined_call_operand.vmem [shape: f32[8,16], index: 0, kind: input, shape index: {}]
  %s1 = inlined_call_operand.vmem [shape: f32[1,128], index: 1, kind: output, shape index: {}]
  $region1: #{tile.39} parent=0
    #allocation0 [shape = 'u8[4096]{0}', space=vmem, size = 0x1000, scoped, tag = 'scoped mem for output reshape']
    %v2 = vld [vmem:[%s0] sm:$0x1]
    %vm3 = vcmask 130048
    %4 = vst.msk [vmem:[#allocation0] sm:$0x1] %vm3, %v2
    %s5 = scalar_lea.vmem %s0, 7
    %v6 = vld [vmem:[%s5] sm:$0x1]
    %7 = vrot.lane.b32.xlu0 %v6, 112
    %v8 = vpop.permute.xlu0 %7
    %vm9 = vcmask 1048448
    %10 = vst.msk [vmem:[#allocation0] sm:$0x1] %vm9, %v8
    %s11 = scalar_lea.vmem %s0, 6
    %v12 = vld [vmem:[%s11] sm:$0x1]
    %13 = vrot.lane.b32.xlu0 %v12, 96
    %v14 = vpop.permute.xlu0 %13
    %vm15 = vcmask 917248
    %16 = vst.msk [vmem:[#allocation0] sm:$0x1] %vm15, %v14
    %s17 = scalar_lea.vmem %s0, 5
    %v18 = vld [vmem:[%s17] sm:$0x1]
    %19 = vrot.lane.b32.xlu0 %v18, 80
    %v20 = vpop.permute.xlu0 %19
    %vm21 = vcmask 786048
    %22 = vst.msk [vmem:[#allocation0] sm:$0x1] %vm21, %v20
    %s23 = scalar_lea.vmem %s0, 4
    %v24 = vld [vmem:[%s23] sm:$0x1]
    %25 = vrot.lane.b32.xlu0 %v24, 64
    %v26 = vpop.permute.xlu0 %25
    %vm27 = vcmask 654848
    %28 = vst.msk [vmem:[#allocation0] sm:$0x1] %vm27, %v26
    %s29 = scalar_lea.vmem %s0, 3
    %v30 = vld [vmem:[%s29] sm:$0x1]
    %31 = vrot.lane.b32.xlu0 %v30, 48
    %v32 = vpop.permute.xlu0 %31
    %vm33 = vcmask 523648
    %34 = vst.msk [vmem:[#allocation0] sm:$0x1] %vm33, %v32
    %s35 = scalar_lea.vmem %s0, 2
    %v36 = vld [vmem:[%s35] sm:$0x1]
    %37 = vrot.lane.b32.xlu0 %v36, 32
    %v38 = vpop.permute.xlu0 %37
    %vm39 = vcmask 392448
    %40 = vst.msk [vmem:[#allocation0] sm:$0x1] %vm39, %v38
    %s41 = scalar_lea.vmem %s0, 1
    %v42 = vld [vmem:[%s41] sm:$0x1]
    %43 = vrot.lane.b32.xlu0 %v42, 16
    %v44 = vpop.permute.xlu0 %43
    %vm45 = vcmask 261248
    %46 = vst.msk [vmem:[#allocation0] sm:$0x1] %vm45, %v44
    %s48 = sshllo.u32 0, 1
    %v50 = vld [vmem:[#allocation0] sm:%s48]
    %s51 = sshllo.u32 0, 1
    %52 = vst [vmem:[%s1] sm:%s51] %v50

// kernel: tile.43
$region0: #{tile.43}
  #allocation0 [shape = 's32[1]{0}', space=sflag, size = 0x4, scoped, tag = 'scoped memory for tile.43']
  %s0 = inlined_call_operand.vmem [shape: f32[32], index: 0, kind: input, shape index: {}]
  %s1 = inlined_call_operand.vmem [shape: f32[4,32], index: 1, kind: output, shape index: {}]
  // Predicated region
  $region2: #{tile.43} parent=0 // pred_check
    _
  $region3: #{tile.43} parent=0 // pred_check_branch
    %3 = sbr.rel (0) target = $region5
  $region4: #{tile.43} parent=0 // pred_region
    _
  $region5: #{tile.43} parent=0 // pred_fallthru
    _
  %v4 = vld [vmem:[%s0] ss:$0 sm:$0xff]
  %5 = vst [vmem:[%s1] sm:$0xf] %v4

// kernel: tile.44
$region0: #{tile.44}
  %s0 = inlined_call_operand.vmem [shape: f32[4,32], index: 0, kind: input, shape index: {}]
  %s1 = inlined_call_operand.vmem [shape: f32[1,128], index: 1, kind: output, shape index: {}]
  $region1: #{tile.44} parent=0
    #allocation0 [shape = 'u8[4096]{0}', space=vmem, size = 0x1000, scoped, tag = 'scoped mem for output reshape']
    #allocation1 [shape = 'u8[4096]{0}', space=vmem, size = 0x1000, scoped, tag = 'scoped mem for input reshape']
    %s3 = sshllo.u32 0, 4
    %v4 = vld [vmem:[%s0] sm:%s3]
    %5 = vst [vmem:[#allocation1] sm:%s3] %v4
    %v6 = vld [vmem:[#allocation1] sm:$0x1]
    %vm7 = vcmask 261120
    %8 = vst.msk [vmem:[#allocation0] sm:$0x1] %vm7, %v6
    %s9 = scalar_lea.vmem [#allocation1], 3
    %v10 = vld [vmem:[%s9] sm:$0x1]
    %11 = vrot.lane.b32.xlu0 %v10, 96
    %v12 = vpop.permute.xlu0 %11
    %vm13 = vcmask 1048320
    %14 = vst.msk [vmem:[#allocation0] sm:$0x1] %vm13, %v12
    %s15 = scalar_lea.vmem [#allocation1], 2
    %v16 = vld [vmem:[%s15] sm:$0x1]
    %17 = vrot.lane.b32.xlu0 %v16, 64
    %v18 = vpop.permute.xlu0 %17
    %vm19 = vcmask 785920
    %20 = vst.msk [vmem:[#allocation0] sm:$0x1] %vm19, %v18
    %s21 = scalar_lea.vmem [#allocation1], 1
    %v22 = vld [vmem:[%s21] sm:$0x1]
    %23 = vrot.lane.b32.xlu0 %v22, 32
    %v24 = vpop.permute.xlu0 %23
    %vm25 = vcmask 523520
    %26 = vst.msk [vmem:[#allocation0] sm:$0x1] %vm25, %v24
    %s28 = sshllo.u32 0, 1
    %v30 = vld [vmem:[#allocation0] sm:%s28]
    %s31 = sshllo.u32 0, 1
    %32 = vst [vmem:[%s1] sm:%s31] %v30

// kernel: tile.53
$region0: #{tile.53}
  #allocation0 [shape = 's32[1]{0}', space=sflag, size = 0x4, scoped, tag = 'scoped memory for tile.53']
  %s0 = inlined_call_operand.vmem [shape: f32[8], index: 0, kind: input, shape index: {}]
  %s1 = inlined_call_operand.vmem [shape: f32[4,8], index: 1, kind: output, shape index: {}]
  // Predicated region
  $region2: #{tile.53} parent=0 // pred_check
    _
  $region3: #{tile.53} parent=0 // pred_check_branch
    %3 = sbr.rel (0) target = $region5
  $region4: #{tile.53} parent=0 // pred_region
    _
  $region5: #{tile.53} parent=0 // pred_fallthru
    _
  %v4 = vld [vmem:[%s0] ss:$0 sm:$0xff]
  %5 = vst [vmem:[%s1] sm:$0xf] %v4

// kernel: tile.54
$region0: #{tile.54}
  %s0 = inlined_call_operand.vmem [shape: f32[4,8], index: 0, kind: input, shape index: {}]
  %s1 = inlined_call_operand.vmem [shape: f32[1,32], index: 1, kind: output, shape index: {}]
  $region1: #{tile.54} parent=0
    #allocation0 [shape = 'u8[4096]{0}', space=vmem, size = 0x1000, scoped, tag = 'scoped mem for output reshape']
    #allocation1 [shape = 'u8[4096]{0}', space=vmem, size = 0x1000, scoped, tag = 'scoped mem for input reshape']
    %s3 = sshllo.u32 0, 4
    %v4 = vld [vmem:[%s0] sm:%s3]
    %5 = vst [vmem:[#allocation1] sm:%s3] %v4
    %v6 = vld [vmem:[#allocation1] sm:$0x1]
    %vm7 = vcmask 64512
    %8 = vst.msk [vmem:[#allocation0] sm:$0x1] %vm7, %v6
    %s9 = scalar_lea.vmem [#allocation1], 3
    %v10 = vld [vmem:[%s9] sm:$0x1]
    %11 = vrot.lane.b32.xlu0 %v10, 24
    %v12 = vpop.permute.xlu0 %11
    %vm13 = vcmask 261312
    %14 = vst.msk [vmem:[#allocation0] sm:$0x1] %vm13, %v12
    %s15 = scalar_lea.vmem [#allocation1], 2
    %v16 = vld [vmem:[%s15] sm:$0x1]
    %17 = vrot.lane.b32.xlu0 %v16, 16
    %v18 = vpop.permute.xlu0 %17
    %vm19 = vcmask 195712
    %20 = vst.msk [vmem:[#allocation0] sm:$0x1] %vm19, %v18
    %s21 = scalar_lea.vmem [#allocation1], 1
    %v22 = vld [vmem:[%s21] sm:$0x1]
    %23 = vrot.lane.b32.xlu0 %v22, 8
    %v24 = vpop.permute.xlu0 %23
    %vm25 = vcmask 130112
    %26 = vst.msk [vmem:[#allocation0] sm:$0x1] %vm25, %v24
    %s28 = sshllo.u32 0, 1
    %v30 = vld [vmem:[#allocation0] sm:%s28]
    %s31 = sshllo.u32 0, 1
    %32 = vst [vmem:[%s1] sm:%s31] %v30

// kernel: deepmind_encoder.1
$region0: #{deepmind_encoder.1}
  #allocation0 [shape = 'u32[]', space=smem, size = 0x4, offset = 0x4, fixed_abs, tag = 'smem constant byte address 0x4 - core index']
  #allocation1 [shape = 'u32[144,128]{1,0:T(1,128)}', space=vmem, size = 0x12000, scoped, tag = 'internal scratch']
  %s0 = inlined_call_operand.vmem [shape: f32[2,8,384], index: 0, kind: input, shape index: {}]
  %s1 = inlined_call_operand.vmem [shape: f32[384,128], index: 1, kind: input, shape index: {}]
  %s2 = inlined_call_operand.vmem [shape: f32[1,128], index: 2, kind: input, shape index: {}]
  %s3 = inlined_call_operand.vmem [shape: f32[4,4,8], index: 3, kind: input, shape index: {}]
  %s4 = inlined_call_operand.vmem [shape: f32[4,128,128], index: 4, kind: input, shape index: {}]
  %s5 = inlined_call_operand.vmem [shape: f32[1,128], index: 5, kind: input, shape index: {}]
  %s6 = inlined_call_operand.vmem [shape: f32[3,4,4], index: 6, kind: input, shape index: {}]
  %s7 = inlined_call_operand.vmem [shape: f32[3,128,128], index: 7, kind: input, shape index: {}]
  %s8 = inlined_call_operand.vmem [shape: f32[1,128], index: 8, kind: input, shape index: {}]
  %s9 = inlined_call_operand.vmem [shape: f32[3,128,32], index: 9, kind: input, shape index: {}]
  %s10 = inlined_call_operand.vmem [shape: f32[1,32], index: 10, kind: input, shape index: {}]
  %s11 = inlined_call_operand.vmem [shape: f32[32,128], index: 11, kind: input, shape index: {}]
  %s12 = inlined_call_operand.vmem [shape: f32[1,128], index: 12, kind: input, shape index: {}]
  %s13 = inlined_call_operand.vmem [shape: f32[3,128,32], index: 13, kind: input, shape index: {}]
  %s14 = inlined_call_operand.vmem [shape: f32[1,32], index: 14, kind: input, shape index: {}]
  %s15 = inlined_call_operand.vmem [shape: f32[32,128], index: 15, kind: input, shape index: {}]
  %s16 = inlined_call_operand.vmem [shape: f32[1,128], index: 16, kind: input, shape index: {}]
  %s17 = inlined_call_operand.vmem [shape: f32[2,4,128], index: 17, kind: output, shape index: {}]
  %s18 = sld [smem:[#allocation0]]
  $region101: #{deepmind_encoder.1} parent=0
    _
  %s20 = ssub.s32 1, %s18
  %s21 = scalar_select 0, %s20, %s18
  loop: start=0, step=1, limit=4
  $region2: #{deepmind_encoder.1} parent=0 // loop_pre_header
    _
  $region3: #{deepmind_encoder.1} parent=0 // loop_header
    %s23 = sphi 0, %s27
    %p24 = scmp.ge.s32.totalorder %s23, 4
    %s33 = sphi 0, %s35
    %s36 = sphi 0, %s33
    %s37 = sphi 0, %s36
    %s53 = sphi 0, %s37
    %s57 = sphi 0, %s57
    %s59 = sphi 0, %s57
    %s60 = sphi 0, %s59
    %s74 = sphi 0, %s60
    %s78 = sphi 0, %s78
    %s80 = sphi 0, %s78
    %s81 = sphi 0, %s80
    %s95 = sphi 0, %s81
    %s99 = sphi 0, %s99
    %s101 = sphi 0, %s99
    %s102 = sphi 0, %s101
    %s116 = sphi 0, %s102
    %s120 = sphi 0, %s120
    %s122 = sphi 0, %s120
    %s123 = sphi 0, %s122
    %s137 = sphi 0, %s123
    %s141 = sphi 0, %s141
    %s143 = sphi 0, %s141
    %s144 = sphi 0, %s143
    %s158 = sphi 0, %s144
    %s162 = sphi 0, %s162
    %s164 = sphi 0, %s162
    %s165 = sphi 0, %s164
    %s179 = sphi 0, %s165
    %s183 = sphi 0, %s183
    %s185 = sphi 0, %s183
    %s186 = sphi 0, %s185
    %s200 = sphi 0, %s186
    %s204 = sphi 0, %s204
    %s206 = sphi 0, %s204
    %s207 = sphi 0, %s206
    %s221 = sphi 0, %s207
    %s225 = sphi 0, %s225
    %s227 = sphi 0, %s225
    %s228 = sphi 0, %s227
    %s242 = sphi 0, %s228
    %s246 = sphi 0, %s246
    %s248 = sphi 0, %s246
    %s249 = sphi 0, %s248
    %s263 = sphi 0, %s249
    %s267 = sphi 0, %s267
    %s269 = sphi 0, %s267
    %s270 = sphi 0, %s269
    %s284 = sphi 0, %s270
    %s288 = sphi 0, %s288
    %s290 = sphi 0, %s288
    %s291 = sphi 0, %s290
    %s305 = sphi 0, %s291
    %s309 = sphi 0, %s309
    %s311 = sphi 0, %s309
    %s312 = sphi 0, %s311
    %s326 = sphi 0, %s312
    %s330 = sphi 0, %s330
    %s332 = sphi 0, %s330
    %s333 = sphi 0, %s332
    %s347 = sphi 0, %s333
    %s351 = sphi 0, %s351
    %s353 = sphi 0, %s351
    %s354 = sphi 0, %s353
    %s368 = sphi 0, %s354
    %s372 = sphi 0, %s372
    %s374 = sphi 0, %s372
    %s375 = sphi 0, %s374
    %s389 = sphi 0, %s375
    %s395 = sphi 0, %s397
    %s398 = sphi 0, %s395
    %s399 = sphi 0, %s398
    %s415 = sphi 0, %s399
  $region4: #{deepmind_encoder.1} parent=0 // loop_header_branch
    %26 = sbr.rel (%p24) target = $region8
  $region5: #{deepmind_encoder.1} parent=0 // loop_body
    %s28 = ssub.s32 %s23, 1
    %s29 = ssub.s32 %s23, 2
    %s30 = sadd.s32 %s23, 1
    %s31 = ssub.s32 %s23, %s30
    %p32 = scmp.eq.s32.totalorder %s31, 0
    %s34 = sadd.s32 %s33, 1
    %s35 = scalar_select %p32, %s33, %s34
    %p38 = pneg %p32
    %p39 = scmp.eq.s32.totalorder %s23, 1
    %p40 = por %p38, %p39
    %p41 = scmp.ne.s32.totalorder %s33, %s36
    %p42 = scmp.eq.s32.totalorder %s23, 0
    %p43 = por %p41, %p42
    %p44 = scmp.ne.s32.totalorder %s33, %s36
    %p45 = scmp.eq.s32.totalorder %s28, 1
    %p46 = por %p44, %p45
    %p47 = scmp.ne.s32.totalorder %s36, %s37
    %p48 = scmp.eq.s32.totalorder %s28, 0
    %p49 = por %p47, %p48
    %p50 = scmp.ne.s32.totalorder %s36, %s37
    %p51 = scmp.eq.s32.totalorder %s29, 1
    %p52 = por %p50, %p51
    %p54 = scmp.ne.s32.totalorder %s37, %s53
    %p55 = scmp.eq.s32.totalorder %s29, 0
    %p56 = por %p54, %p55
    %s58 = sadd.s32 %s57, 1
    %p61 = scmp.eq.s32.totalorder %s23, 1
    %p62 = scmp.ne.s32.totalorder %s57, %s59
    %p63 = scmp.eq.s32.totalorder %s23, 0
    %p64 = por %p62, %p63
    %p65 = scmp.ne.s32.totalorder %s57, %s59
    %p66 = scmp.eq.s32.totalorder %s28, 1
    %p67 = por %p65, %p66
    %p68 = scmp.ne.s32.totalorder %s59, %s60
    %p69 = scmp.eq.s32.totalorder %s28, 0
    %p70 = por %p68, %p69
    %p71 = scmp.ne.s32.totalorder %s59, %s60
    %p72 = scmp.eq.s32.totalorder %s29, 1
    %p73 = por %p71, %p72
    %p75 = scmp.ne.s32.totalorder %s60, %s74
    %p76 = scmp.eq.s32.totalorder %s29, 0
    %p77 = por %p75, %p76
    %s79 = sadd.s32 %s78, 1
    %p82 = scmp.eq.s32.totalorder %s23, 1
    %p83 = scmp.ne.s32.totalorder %s78, %s80
    %p84 = scmp.eq.s32.totalorder %s23, 0
    %p85 = por %p83, %p84
    %p86 = scmp.ne.s32.totalorder %s78, %s80
    %p87 = scmp.eq.s32.totalorder %s28, 1
    %p88 = por %p86, %p87
    %p89 = scmp.ne.s32.totalorder %s80, %s81
    %p90 = scmp.eq.s32.totalorder %s28, 0
    %p91 = por %p89, %p90
    %p92 = scmp.ne.s32.totalorder %s80, %s81
    %p93 = scmp.eq.s32.totalorder %s29, 1
    %p94 = por %p92, %p93
    %p96 = scmp.ne.s32.totalorder %s81, %s95
    %p97 = scmp.eq.s32.totalorder %s29, 0
    %p98 = por %p96, %p97
    %s100 = sadd.s32 %s99, 1
    %p103 = scmp.eq.s32.totalorder %s23, 1
    %p104 = scmp.ne.s32.totalorder %s99, %s101
    %p105 = scmp.eq.s32.totalorder %s23, 0
    %p106 = por %p104, %p105
    %p107 = scmp.ne.s32.totalorder %s99, %s101
    %p108 = scmp.eq.s32.totalorder %s28, 1
    %p109 = por %p107, %p108
    %p110 = scmp.ne.s32.totalorder %s101, %s102
    %p111 = scmp.eq.s32.totalorder %s28, 0
    %p112 = por %p110, %p111
    %p113 = scmp.ne.s32.totalorder %s101, %s102
    %p114 = scmp.eq.s32.totalorder %s29, 1
    %p115 = por %p113, %p114
    %p117 = scmp.ne.s32.totalorder %s102, %s116
    %p118 = scmp.eq.s32.totalorder %s29, 0
    %p119 = por %p117, %p118
    %s121 = sadd.s32 %s120, 1
    %p124 = scmp.eq.s32.totalorder %s23, 1
    %p125 = scmp.ne.s32.totalorder %s120, %s122
    %p126 = scmp.eq.s32.totalorder %s23, 0
    %p127 = por %p125, %p126
    %p128 = scmp.ne.s32.totalorder %s120, %s122
    %p129 = scmp.eq.s32.totalorder %s28, 1
    %p130 = por %p128, %p129
    %p131 = scmp.ne.s32.totalorder %s122, %s123
    %p132 = scmp.eq.s32.totalorder %s28, 0
    %p133 = por %p131, %p132
    %p134 = scmp.ne.s32.totalorder %s122, %s123
    %p135 = scmp.eq.s32.totalorder %s29, 1
    %p136 = por %p134, %p135
    %p138 = scmp.ne.s32.totalorder %s123, %s137
    %p139 = scmp.eq.s32.totalorder %s29, 0
    %p140 = por %p138, %p139
    %s142 = sadd.s32 %s141, 1
    %p145 = scmp.eq.s32.totalorder %s23, 1
    %p146 = scmp.ne.s32.totalorder %s141, %s143
    %p147 = scmp.eq.s32.totalorder %s23, 0
    %p148 = por %p146, %p147
    %p149 = scmp.ne.s32.totalorder %s141, %s143
    %p150 = scmp.eq.s32.totalorder %s28, 1
    %p151 = por %p149, %p150
    %p152 = scmp.ne.s32.totalorder %s143, %s144
    %p153 = scmp.eq.s32.totalorder %s28, 0
    %p154 = por %p152, %p153
    %p155 = scmp.ne.s32.totalorder %s143, %s144
    %p156 = scmp.eq.s32.totalorder %s29, 1
    %p157 = por %p155, %p156
    %p159 = scmp.ne.s32.totalorder %s144, %s158
    %p160 = scmp.eq.s32.totalorder %s29, 0
    %p161 = por %p159, %p160
    %s163 = sadd.s32 %s162, 1
    %p166 = scmp.eq.s32.totalorder %s23, 1
    %p167 = scmp.ne.s32.totalorder %s162, %s164
    %p168 = scmp.eq.s32.totalorder %s23, 0
    %p169 = por %p167, %p168
    %p170 = scmp.ne.s32.totalorder %s162, %s164
    %p171 = scmp.eq.s32.totalorder %s28, 1
    %p172 = por %p170, %p171
    %p173 = scmp.ne.s32.totalorder %s164, %s165
    %p174 = scmp.eq.s32.totalorder %s28, 0
    %p175 = por %p173, %p174
    %p176 = scmp.ne.s32.totalorder %s164, %s165
    %p177 = scmp.eq.s32.totalorder %s29, 1
    %p178 = por %p176, %p177
    %p180 = scmp.ne.s32.totalorder %s165, %s179
    %p181 = scmp.eq.s32.totalorder %s29, 0
    %p182 = por %p180, %p181
    %s184 = sadd.s32 %s183, 1
    %p187 = scmp.eq.s32.totalorder %s23, 1
    %p188 = scmp.ne.s32.totalorder %s183, %s185
    %p189 = scmp.eq.s32.totalorder %s23, 0
    %p190 = por %p188, %p189
    %p191 = scmp.ne.s32.totalorder %s183, %s185
    %p192 = scmp.eq.s32.totalorder %s28, 1
    %p193 = por %p191, %p192
    %p194 = scmp.ne.s32.totalorder %s185, %s186
    %p195 = scmp.eq.s32.totalorder %s28, 0
    %p196 = por %p194, %p195
    %p197 = scmp.ne.s32.totalorder %s185, %s186
    %p198 = scmp.eq.s32.totalorder %s29, 1
    %p199 = por %p197, %p198
    %p201 = scmp.ne.s32.totalorder %s186, %s200
    %p202 = scmp.eq.s32.totalorder %s29, 0
    %p203 = por %p201, %p202
    %s205 = sadd.s32 %s204, 1
    %p208 = scmp.eq.s32.totalorder %s23, 1
    %p209 = scmp.ne.s32.totalorder %s204, %s206
    %p210 = scmp.eq.s32.totalorder %s23, 0
    %p211 = por %p209, %p210
    %p212 = scmp.ne.s32.totalorder %s204, %s206
    %p213 = scmp.eq.s32.totalorder %s28, 1
    %p214 = por %p212, %p213
    %p215 = scmp.ne.s32.totalorder %s206, %s207
    %p216 = scmp.eq.s32.totalorder %s28, 0
    %p217 = por %p215, %p216
    %p218 = scmp.ne.s32.totalorder %s206, %s207
    %p219 = scmp.eq.s32.totalorder %s29, 1
    %p220 = por %p218, %p219
    %p222 = scmp.ne.s32.totalorder %s207, %s221
    %p223 = scmp.eq.s32.totalorder %s29, 0
    %p224 = por %p222, %p223
    %s226 = sadd.s32 %s225, 1
    %p229 = scmp.eq.s32.totalorder %s23, 1
    %p230 = scmp.ne.s32.totalorder %s225, %s227
    %p231 = scmp.eq.s32.totalorder %s23, 0
    %p232 = por %p230, %p231
    %p233 = scmp.ne.s32.totalorder %s225, %s227
    %p234 = scmp.eq.s32.totalorder %s28, 1
    %p235 = por %p233, %p234
    %p236 = scmp.ne.s32.totalorder %s227, %s228
    %p237 = scmp.eq.s32.totalorder %s28, 0
    %p238 = por %p236, %p237
    %p239 = scmp.ne.s32.totalorder %s227, %s228
    %p240 = scmp.eq.s32.totalorder %s29, 1
    %p241 = por %p239, %p240
    %p243 = scmp.ne.s32.totalorder %s228, %s242
    %p244 = scmp.eq.s32.totalorder %s29, 0
    %p245 = por %p243, %p244
    %s247 = sadd.s32 %s246, 1
    %p250 = scmp.eq.s32.totalorder %s23, 1
    %p251 = scmp.ne.s32.totalorder %s246, %s248
    %p252 = scmp.eq.s32.totalorder %s23, 0
    %p253 = por %p251, %p252
    %p254 = scmp.ne.s32.totalorder %s246, %s248
    %p255 = scmp.eq.s32.totalorder %s28, 1
    %p256 = por %p254, %p255
    %p257 = scmp.ne.s32.totalorder %s248, %s249
    %p258 = scmp.eq.s32.totalorder %s28, 0
    %p259 = por %p257, %p258
    %p260 = scmp.ne.s32.totalorder %s248, %s249
    %p261 = scmp.eq.s32.totalorder %s29, 1
    %p262 = por %p260, %p261
    %p264 = scmp.ne.s32.totalorder %s249, %s263
    %p265 = scmp.eq.s32.totalorder %s29, 0
    %p266 = por %p264, %p265
    %s268 = sadd.s32 %s267, 1
    %p271 = scmp.eq.s32.totalorder %s23, 1
    %p272 = scmp.ne.s32.totalorder %s267, %s269
    %p273 = scmp.eq.s32.totalorder %s23, 0
    %p274 = por %p272, %p273
    %p275 = scmp.ne.s32.totalorder %s267, %s269
    %p276 = scmp.eq.s32.totalorder %s28, 1
    %p277 = por %p275, %p276
    %p278 = scmp.ne.s32.totalorder %s269, %s270
    %p279 = scmp.eq.s32.totalorder %s28, 0
    %p280 = por %p278, %p279
    %p281 = scmp.ne.s32.totalorder %s269, %s270
    %p282 = scmp.eq.s32.totalorder %s29, 1
    %p283 = por %p281, %p282
    %p285 = scmp.ne.s32.totalorder %s270, %s284
    %p286 = scmp.eq.s32.totalorder %s29, 0
    %p287 = por %p285, %p286
    %s289 = sadd.s32 %s288, 1
    %p292 = scmp.eq.s32.totalorder %s23, 1
    %p293 = scmp.ne.s32.totalorder %s288, %s290
    %p294 = scmp.eq.s32.totalorder %s23, 0
    %p295 = por %p293, %p294
    %p296 = scmp.ne.s32.totalorder %s288, %s290
    %p297 = scmp.eq.s32.totalorder %s28, 1
    %p298 = por %p296, %p297
    %p299 = scmp.ne.s32.totalorder %s290, %s291
    %p300 = scmp.eq.s32.totalorder %s28, 0
    %p301 = por %p299, %p300
    %p302 = scmp.ne.s32.totalorder %s290, %s291
    %p303 = scmp.eq.s32.totalorder %s29, 1
    %p304 = por %p302, %p303
    %p306 = scmp.ne.s32.totalorder %s291, %s305
    %p307 = scmp.eq.s32.totalorder %s29, 0
    %p308 = por %p306, %p307
    %s310 = sadd.s32 %s309, 1
    %p313 = scmp.eq.s32.totalorder %s23, 1
    %p314 = scmp.ne.s32.totalorder %s309, %s311
    %p315 = scmp.eq.s32.totalorder %s23, 0
    %p316 = por %p314, %p315
    %p317 = scmp.ne.s32.totalorder %s309, %s311
    %p318 = scmp.eq.s32.totalorder %s28, 1
    %p319 = por %p317, %p318
    %p320 = scmp.ne.s32.totalorder %s311, %s312
    %p321 = scmp.eq.s32.totalorder %s28, 0
    %p322 = por %p320, %p321
    %p323 = scmp.ne.s32.totalorder %s311, %s312
    %p324 = scmp.eq.s32.totalorder %s29, 1
    %p325 = por %p323, %p324
    %p327 = scmp.ne.s32.totalorder %s312, %s326
    %p328 = scmp.eq.s32.totalorder %s29, 0
    %p329 = por %p327, %p328
    %s331 = sadd.s32 %s330, 1
    %p334 = scmp.eq.s32.totalorder %s23, 1
    %p335 = scmp.ne.s32.totalorder %s330, %s332
    %p336 = scmp.eq.s32.totalorder %s23, 0
    %p337 = por %p335, %p336
    %p338 = scmp.ne.s32.totalorder %s330, %s332
    %p339 = scmp.eq.s32.totalorder %s28, 1
    %p340 = por %p338, %p339
    %p341 = scmp.ne.s32.totalorder %s332, %s333
    %p342 = scmp.eq.s32.totalorder %s28, 0
    %p343 = por %p341, %p342
    %p344 = scmp.ne.s32.totalorder %s332, %s333
    %p345 = scmp.eq.s32.totalorder %s29, 1
    %p346 = por %p344, %p345
    %p348 = scmp.ne.s32.totalorder %s333, %s347
    %p349 = scmp.eq.s32.totalorder %s29, 0
    %p350 = por %p348, %p349
    %s352 = sadd.s32 %s351, 1
    %p355 = scmp.eq.s32.totalorder %s23, 1
    %p356 = scmp.ne.s32.totalorder %s351, %s353
    %p357 = scmp.eq.s32.totalorder %s23, 0
    %p358 = por %p356, %p357
    %p359 = scmp.ne.s32.totalorder %s351, %s353
    %p360 = scmp.eq.s32.totalorder %s28, 1
    %p361 = por %p359, %p360
    %p362 = scmp.ne.s32.totalorder %s353, %s354
    %p363 = scmp.eq.s32.totalorder %s28, 0
    %p364 = por %p362, %p363
    %p365 = scmp.ne.s32.totalorder %s353, %s354
    %p366 = scmp.eq.s32.totalorder %s29, 1
    %p367 = por %p365, %p366
    %p369 = scmp.ne.s32.totalorder %s354, %s368
    %p370 = scmp.eq.s32.totalorder %s29, 0
    %p371 = por %p369, %p370
    %s373 = sadd.s32 %s372, 1
    %p376 = scmp.eq.s32.totalorder %s23, 1
    %p377 = scmp.ne.s32.totalorder %s372, %s374
    %p378 = scmp.eq.s32.totalorder %s23, 0
    %p379 = por %p377, %p378
    %p380 = scmp.ne.s32.totalorder %s372, %s374
    %p381 = scmp.eq.s32.totalorder %s28, 1
    %p382 = por %p380, %p381
    %p383 = scmp.ne.s32.totalorder %s374, %s375
    %p384 = scmp.eq.s32.totalorder %s28, 0
    %p385 = por %p383, %p384
    %p386 = scmp.ne.s32.totalorder %s374, %s375
    %p387 = scmp.eq.s32.totalorder %s29, 1
    %p388 = por %p386, %p387
    %p390 = scmp.ne.s32.totalorder %s375, %s389
    %p391 = scmp.eq.s32.totalorder %s29, 0
    %p392 = por %p390, %p391
    %s393 = ssub.s32 %s23, %s30
    %p394 = scmp.eq.s32.totalorder %s393, 0
    %s396 = sadd.s32 %s395, 1
    %s397 = scalar_select %p394, %s395, %s396
    %p400 = pneg %p394
    %p401 = scmp.eq.s32.totalorder %s23, 1
    %p402 = por %p400, %p401
    %p403 = scmp.ne.s32.totalorder %s395, %s398
    %p404 = scmp.eq.s32.totalorder %s23, 0
    %p405 = por %p403, %p404
    %p406 = scmp.ne.s32.totalorder %s395, %s398
    %p407 = scmp.eq.s32.totalorder %s28, 1
    %p408 = por %p406, %p407
    %p409 = scmp.ne.s32.totalorder %s398, %s399
    %p410 = scmp.eq.s32.totalorder %s28, 0
    %p411 = por %p409, %p410
    %p412 = scmp.ne.s32.totalorder %s398, %s399
    %p413 = scmp.eq.s32.totalorder %s29, 1
    %p414 = por %p412, %p413
    %p416 = scmp.ne.s32.totalorder %s399, %s415
    %p417 = scmp.eq.s32.totalorder %s29, 0
    %p418 = por %p416, %p417
    %p419 = scmp.le.s32.totalorder 1, %s23
    %p420 = scmp.lt.s32.totalorder %s23, 3
    %p421 = pnand %p419, %p420
    %p422 = pneg %p421
    // Predicated region
    $region9: #{deepmind_encoder.1} parent=5 // pred_check
      _
    $region10: #{deepmind_encoder.1} parent=5 // pred_check_branch
      %424 = sbr.rel (%p421) target = $region12
    $region11: #{deepmind_encoder.1} parent=5 // pred_region
      %s425 = ssub.s32 %s23, 1
      // Predicated region
      $region13: #{deepmind_encoder.1} parent=11 // pred_check
        %p426 = pneg %p70
      $region14: #{deepmind_encoder.1} parent=11 // pred_check_branch
        %428 = sbr.rel (%p426) target = $region16
      $region15: #{deepmind_encoder.1} parent=11 // pred_region
        _
      $region16: #{deepmind_encoder.1} parent=11 // pred_fallthru
        _
      // Predicated region
      $region17: #{deepmind_encoder.1} parent=11 // pred_check
        %p429 = pneg %p91
      $region18: #{deepmind_encoder.1} parent=11 // pred_check_branch
        %431 = sbr.rel (%p429) target = $region20
      $region19: #{deepmind_encoder.1} parent=11 // pred_region
        _
      $region20: #{deepmind_encoder.1} parent=11 // pred_fallthru
        _
      // Predicated region
      $region21: #{deepmind_encoder.1} parent=11 // pred_check
        %p432 = pneg %p112
      $region22: #{deepmind_encoder.1} parent=11 // pred_check_branch
        %434 = sbr.rel (%p432) target = $region24
      $region23: #{deepmind_encoder.1} parent=11 // pred_region
        _
      $region24: #{deepmind_encoder.1} parent=11 // pred_fallthru
        _
      // Predicated region
      $region25: #{deepmind_encoder.1} parent=11 // pred_check
        %p435 = pneg %p133
      $region26: #{deepmind_encoder.1} parent=11 // pred_check_branch
        %437 = sbr.rel (%p435) target = $region28
      $region27: #{deepmind_encoder.1} parent=11 // pred_region
        _
      $region28: #{deepmind_encoder.1} parent=11 // pred_fallthru
        _
      // Predicated region
      $region29: #{deepmind_encoder.1} parent=11 // pred_check
        %p438 = pneg %p154
      $region30: #{deepmind_encoder.1} parent=11 // pred_check_branch
        %440 = sbr.rel (%p438) target = $region32
      $region31: #{deepmind_encoder.1} parent=11 // pred_region
        _
      $region32: #{deepmind_encoder.1} parent=11 // pred_fallthru
        _
      // Predicated region
      $region33: #{deepmind_encoder.1} parent=11 // pred_check
        %p441 = pneg %p175
      $region34: #{deepmind_encoder.1} parent=11 // pred_check_branch
        %443 = sbr.rel (%p441) target = $region36
      $region35: #{deepmind_encoder.1} parent=11 // pred_region
        _
      $region36: #{deepmind_encoder.1} parent=11 // pred_fallthru
        _
      // Predicated region
      $region37: #{deepmind_encoder.1} parent=11 // pred_check
        %p444 = pneg %p196
      $region38: #{deepmind_encoder.1} parent=11 // pred_check_branch
        %446 = sbr.rel (%p444) target = $region40
      $region39: #{deepmind_encoder.1} parent=11 // pred_region
        _
      $region40: #{deepmind_encoder.1} parent=11 // pred_fallthru
        _
      // Predicated region
      $region41: #{deepmind_encoder.1} parent=11 // pred_check
        %p447 = pneg %p217
      $region42: #{deepmind_encoder.1} parent=11 // pred_check_branch
        %449 = sbr.rel (%p447) target = $region44
      $region43: #{deepmind_encoder.1} parent=11 // pred_region
        _
      $region44: #{deepmind_encoder.1} parent=11 // pred_fallthru
        _
      // Predicated region
      $region45: #{deepmind_encoder.1} parent=11 // pred_check
        %p450 = pneg %p238
      $region46: #{deepmind_encoder.1} parent=11 // pred_check_branch
        %452 = sbr.rel (%p450) target = $region48
      $region47: #{deepmind_encoder.1} parent=11 // pred_region
        _
      $region48: #{deepmind_encoder.1} parent=11 // pred_fallthru
        _
      // Predicated region
      $region49: #{deepmind_encoder.1} parent=11 // pred_check
        %p453 = pneg %p259
      $region50: #{deepmind_encoder.1} parent=11 // pred_check_branch
        %455 = sbr.rel (%p453) target = $region52
      $region51: #{deepmind_encoder.1} parent=11 // pred_region
        _
      $region52: #{deepmind_encoder.1} parent=11 // pred_fallthru
        _
      // Predicated region
      $region53: #{deepmind_encoder.1} parent=11 // pred_check
        %p456 = pneg %p280
      $region54: #{deepmind_encoder.1} parent=11 // pred_check_branch
        %458 = sbr.rel (%p456) target = $region56
      $region55: #{deepmind_encoder.1} parent=11 // pred_region
        _
      $region56: #{deepmind_encoder.1} parent=11 // pred_fallthru
        _
      // Predicated region
      $region57: #{deepmind_encoder.1} parent=11 // pred_check
        %p459 = pneg %p301
      $region58: #{deepmind_encoder.1} parent=11 // pred_check_branch
        %461 = sbr.rel (%p459) target = $region60
      $region59: #{deepmind_encoder.1} parent=11 // pred_region
        _
      $region60: #{deepmind_encoder.1} parent=11 // pred_fallthru
        _
      // Predicated region
      $region61: #{deepmind_encoder.1} parent=11 // pred_check
        %p462 = pneg %p322
      $region62: #{deepmind_encoder.1} parent=11 // pred_check_branch
        %464 = sbr.rel (%p462) target = $region64
      $region63: #{deepmind_encoder.1} parent=11 // pred_region
        _
      $region64: #{deepmind_encoder.1} parent=11 // pred_fallthru
        _
      // Predicated region
      $region65: #{deepmind_encoder.1} parent=11 // pred_check
        %p465 = pneg %p343
      $region66: #{deepmind_encoder.1} parent=11 // pred_check_branch
        %467 = sbr.rel (%p465) target = $region68
      $region67: #{deepmind_encoder.1} parent=11 // pred_region
        _
      $region68: #{deepmind_encoder.1} parent=11 // pred_fallthru
        _
      // Predicated region
      $region69: #{deepmind_encoder.1} parent=11 // pred_check
        %p468 = pneg %p364
      $region70: #{deepmind_encoder.1} parent=11 // pred_check_branch
        %470 = sbr.rel (%p468) target = $region72
      $region71: #{deepmind_encoder.1} parent=11 // pred_region
        _
      $region72: #{deepmind_encoder.1} parent=11 // pred_fallthru
        _
      // Predicated region
      $region73: #{deepmind_encoder.1} parent=11 // pred_check
        %p471 = pneg %p385
      $region74: #{deepmind_encoder.1} parent=11 // pred_check_branch
        %473 = sbr.rel (%p471) target = $region76
      $region75: #{deepmind_encoder.1} parent=11 // pred_region
        _
      $region76: #{deepmind_encoder.1} parent=11 // pred_fallthru
        _
    $region12: #{deepmind_encoder.1} parent=5 // pred_fallthru
      _
    %p474 = scmp.lt.s32.totalorder %s23, 2
    // Predicated region
    $region77: #{deepmind_encoder.1} parent=5 // pred_check
      %p475 = pneg %p474
    $region78: #{deepmind_encoder.1} parent=5 // pred_check_branch
      %477 = sbr.rel (%p475) target = $region80
    $region79: #{deepmind_encoder.1} parent=5 // pred_region
      // Predicated region
      $region81: #{deepmind_encoder.1} parent=79 // pred_check
        %p478 = pneg %p43
      $region82: #{deepmind_encoder.1} parent=79 // pred_check_branch
        %480 = sbr.rel (%p478) target = $region84
      $region83: #{deepmind_encoder.1} parent=79 // pred_region
        %p481 = scmp.lt.s32.totalorder %s23, 1
        %s482 = scalar_select %p481, %s23, 1
        %s483 = smul.addr %s482, 3
        %s484 = smul.addr %s483, 8
        %s485 = scalar_lea.vmem %s0, %s484
      $region84: #{deepmind_encoder.1} parent=79 // pred_fallthru
        _
    $region80: #{deepmind_encoder.1} parent=5 // pred_fallthru
      _
    %p486 = scmp.le.s32.totalorder 1, %s23
    %p487 = scmp.lt.s32.totalorder %s23, 3
    %p488 = pnand %p486, %p487
    %p489 = pneg %p488
    // Predicated region
    $region85: #{deepmind_encoder.1} parent=5 // pred_check
      _
    $region86: #{deepmind_encoder.1} parent=5 // pred_check_branch
      %491 = sbr.rel (%p488) target = $region88
    $region87: #{deepmind_encoder.1} parent=5 // pred_region
      %s492 = ssub.s32 %s23, 1
      %p493 = scmp.lt.s32.totalorder %s28, 1
      %s494 = scalar_select %p493, %s28, 1
      %s495 = smul.addr %s494, 3
      %s496 = smul.addr %s495, 8
      %s497 = scalar_lea.vmem %s0, %s496
      %p498 = pneg %p49
      %p499 = pneg %p46
      %p500 = pneg %p70
      %p501 = pneg %p67
      %p502 = pneg %p91
      %p503 = pneg %p88
      %p504 = pneg %p112
      %p505 = pneg %p109
      %p506 = pneg %p133
      %p507 = pneg %p130
      %p508 = pneg %p154
      %p509 = pneg %p151
      %p510 = pneg %p175
      %p511 = pneg %p172
      %p512 = pneg %p196
      %p513 = pneg %p193
      %p514 = pneg %p217
      %p515 = pneg %p214
      %p516 = pneg %p238
      %p517 = pneg %p235
      %p518 = pneg %p259
      %p519 = pneg %p256
      %p520 = pneg %p280
      %p521 = pneg %p277
      %p522 = pneg %p301
      %p523 = pneg %p298
      %p524 = pneg %p322
      %p525 = pneg %p319
      %p526 = pneg %p343
      %p527 = pneg %p340
      %p528 = pneg %p364
      %p529 = pneg %p361
      %p530 = pneg %p385
      %p531 = pneg %p382
      %p532 = pneg %p411
      %p533 = pneg %p408
      %p534 = scmp.lt.s32.totalorder %s28, 1
      %s535 = scalar_select %p534, %s28, 1
      %s536 = smul.addr %s535, 4
      %s537 = scalar_lea.vmem %s17, %s536
      %p538 = scmp.lt.s32.totalorder %s28, 1
      %s539 = scalar_select %p538, %s28, 1
      %s540 = smul.addr %s539, 3
      %s541 = smul.addr %s540, 8
      %s542 = scalar_lea.vmem %s0, %s541
      %p543 = scmp.lt.s32.totalorder %s28, 1
      %s544 = scalar_select %p543, %s28, 1
      %s545 = smul.addr %s544, 4
      %s546 = scalar_lea.vmem %s17, %s545
      %v547 = vld [vmem:[%s542] sm:$0xff]
      %v548 = vld [vmem:[%s542 + $0x8] sm:$0xff]
      %v549 = vld [vmem:[%s542 + $0x10] sm:$0xff]
      %v550 = vld [vmem:[%s1] sm:$0xff]
      %v551 = vld [vmem:[%s1 + $0x8] sm:$0xff]
      %v552 = vld [vmem:[%s1 + $0x10] sm:$0xff]
      %v553 = vld [vmem:[%s1 + $0x18] sm:$0xff]
      %v554 = vld [vmem:[%s1 + $0x20] sm:$0xff]
      %v555 = vld [vmem:[%s1 + $0x28] sm:$0xff]
      %v556 = vld [vmem:[%s1 + $0x30] sm:$0xff]
      %v557 = vld [vmem:[%s1 + $0x38] sm:$0xff]
      %v558 = vld [vmem:[%s1 + $0x40] sm:$0xff]
      %v559 = vld [vmem:[%s1 + $0x48] sm:$0xff]
      %v560 = vld [vmem:[%s1 + $0x50] sm:$0xff]
      %v561 = vld [vmem:[%s1 + $0x58] sm:$0xff]
      %v562 = vld [vmem:[%s1 + $0x60] sm:$0xff]
      %v563 = vld [vmem:[%s1 + $0x68] sm:$0xff]
      %v564 = vld [vmem:[%s1 + $0x70] sm:$0xff]
      %v565 = vld [vmem:[%s1 + $0x78] sm:$0xff]
      %v566 = vld [vmem:[%s1 + $0x80] sm:$0xff]
      %v567 = vld [vmem:[%s1 + $0x88] sm:$0xff]
      %v568 = vld [vmem:[%s1 + $0x90] sm:$0xff]
      %v569 = vld [vmem:[%s1 + $0x98] sm:$0xff]
      %v570 = vld [vmem:[%s1 + $0xa0] sm:$0xff]
      %v571 = vld [vmem:[%s1 + $0xa8] sm:$0xff]
      %v572 = vld [vmem:[%s1 + $0xb0] sm:$0xff]
      %v573 = vld [vmem:[%s1 + $0xb8] sm:$0xff]
      %v574 = vld [vmem:[%s1 + $0xc0] sm:$0xff]
      %v575 = vld [vmem:[%s1 + $0xc8] sm:$0xff]
      %v576 = vld [vmem:[%s1 + $0xd0] sm:$0xff]
      %v577 = vld [vmem:[%s1 + $0xd8] sm:$0xff]
      %v578 = vld [vmem:[%s1 + $0xe0] sm:$0xff]
      %v579 = vld [vmem:[%s1 + $0xe8] sm:$0xff]
      %v580 = vld [vmem:[%s1 + $0xf0] sm:$0xff]
      %v581 = vld [vmem:[%s1 + $0xf8] sm:$0xff]
      %v582 = vld [vmem:[%s1 + $0x100] sm:$0xff]
      %v583 = vld [vmem:[%s1 + $0x108] sm:$0xff]
      %v584 = vld [vmem:[%s1 + $0x110] sm:$0xff]
      %v585 = vld [vmem:[%s1 + $0x118] sm:$0xff]
      %v586 = vld [vmem:[%s1 + $0x120] sm:$0xff]
      %v587 = vld [vmem:[%s1 + $0x128] sm:$0xff]
      %v588 = vld [vmem:[%s1 + $0x130] sm:$0xff]
      %v589 = vld [vmem:[%s1 + $0x138] sm:$0xff]
      %v590 = vld [vmem:[%s1 + $0x140] sm:$0xff]
      %v591 = vld [vmem:[%s1 + $0x148] sm:$0xff]
      %v592 = vld [vmem:[%s1 + $0x150] sm:$0xff]
      %v593 = vld [vmem:[%s1 + $0x158] sm:$0xff]
      %v594 = vld [vmem:[%s1 + $0x160] sm:$0xff]
      %v595 = vld [vmem:[%s1 + $0x168] sm:$0xff]
      %v596 = vld [vmem:[%s1 + $0x170] sm:$0xff]
      %v597 = vld [vmem:[%s1 + $0x178] sm:$0xff]
      %v598 = vld [vmem:[%s2] sm:$0x1]
      %v600 = vlaneseq
      %v601 = vshrl.u32 %v600, 7
      %v602 = vsub.s32 0, %v601
      %v603 = vrot.slane %v598, %v602
      %605 = vmatprep.subr.mxu0 0.0
      %606 = vmatpush1.msra.mxu0 %v550
      %607 = vmatprep.subr.mxu0 0.0
      %608 = vmatpush1.msra.mxu0 %v551
      %609 = vmatprep.subr.mxu0 0.0
      %610 = vmatpush1.msra.mxu0 %v552
      %611 = vmatprep.subr.mxu0 0.0
      %612 = vmatpush1.msra.mxu0 %v553
      %613 = vmatprep.subr.mxu0 0.0
      %614 = vmatpush1.msra.mxu0 %v554
      %615 = vmatprep.subr.mxu0 0.0
      %616 = vmatpush1.msra.mxu0 %v555
      %617 = vmatprep.subr.mxu0 0.0
      %618 = vmatpush1.msra.mxu0 %v556
      %619 = vmatprep.subr.mxu0 0.0
      %620 = vmatpush1.msra.mxu0 %v557
      %621 = vmatprep.subr.mxu0 0.0
      %622 = vmatpush1.msra.mxu0 %v558
      %623 = vmatprep.subr.mxu0 0.0
      %624 = vmatpush1.msra.mxu0 %v559
      %625 = vmatprep.subr.mxu0 0.0
      %626 = vmatpush1.msra.mxu0 %v560
      %627 = vmatprep.subr.mxu0 0.0
      %628 = vmatpush1.msra.mxu0 %v561
      %629 = vmatprep.subr.mxu0 0.0
      %630 = vmatpush1.msra.mxu0 %v562
      %631 = vmatprep.subr.mxu0 0.0
      %632 = vmatpush1.msra.mxu0 %v563
      %633 = vmatprep.subr.mxu0 0.0
      %634 = vmatpush1.msra.mxu0 %v564
      %635 = vmatprep.subr.mxu0 0.0
      %636 = vmatpush1.msra.mxu0 %v565
      %637 = vmatprep.subr.mxu0 0.0
      %638 = vmatpush1.msra.mxu0 %v566
      %639 = vmatprep.subr.mxu0 0.0
      %640 = vmatpush1.msra.mxu0 %v567
      %641 = vmatprep.subr.mxu0 0.0
      %642 = vmatpush1.msra.mxu0 %v568
      %643 = vmatprep.subr.mxu0 0.0
      %644 = vmatpush1.msra.mxu0 %v569
      %645 = vmatprep.subr.mxu0 0.0
      %646 = vmatpush1.msra.mxu0 %v570
      %647 = vmatprep.subr.mxu0 0.0
      %648 = vmatpush1.msra.mxu0 %v571
      %649 = vmatprep.subr.mxu0 0.0
      %650 = vmatpush1.msra.mxu0 %v572
      %651 = vmatprep.subr.mxu0 0.0
      %652 = vmatpush1.msra.mxu0 %v573
      %653 = vmatprep.subr.mxu0 0.0
      %654 = vmatpush1.msra.mxu0 %v574
      %655 = vmatprep.subr.mxu0 0.0
      %656 = vmatpush1.msra.mxu0 %v575
      %657 = vmatprep.subr.mxu0 0.0
      %658 = vmatpush1.msra.mxu0 %v576
      %659 = vmatprep.subr.mxu0 0.0
      %660 = vmatpush1.msra.mxu0 %v577
      %661 = vmatprep.subr.mxu0 0.0
      %662 = vmatpush1.msra.mxu0 %v578
      %663 = vmatprep.subr.mxu0 0.0
      %664 = vmatpush1.msra.mxu0 %v579
      %665 = vmatprep.subr.mxu0 0.0
      %666 = vmatpush1.msra.mxu0 %v580
      %667 = vmatprep.subr.mxu0 0.0
      %668 = vmatpush1.msra.mxu0 %v581
      %669 = vmatprep.mubr.f32.mxu0 %v548
      %670 = vmatmul.mubr.f32.gmra.mrb[0].mxu0 %v547
      %v671 = vpop.f32.mrb[0].mxu0
      %v672 = vadd.f32 %v603, %v671
      %v673 = vpop.f32.mrb[0].mxu0
      %674 = vdwg.mxu0
      %675 = vmatprep.subr.mxu0 0.0
      %676 = vmatpush1.msra.mxu0 %v582
      %677 = vmatprep.subr.mxu0 0.0
      %678 = vmatpush1.msra.mxu0 %v583
      %679 = vmatprep.subr.mxu0 0.0
      %680 = vmatpush1.msra.mxu0 %v584
      %681 = vmatprep.subr.mxu0 0.0
      %682 = vmatpush1.msra.mxu0 %v585
      %683 = vmatprep.subr.mxu0 0.0
      %684 = vmatpush1.msra.mxu0 %v586
      %685 = vmatprep.subr.mxu0 0.0
      %686 = vmatpush1.msra.mxu0 %v587
      %687 = vmatprep.subr.mxu0 0.0
      %688 = vmatpush1.msra.mxu0 %v588
      %689 = vmatprep.subr.mxu0 0.0
      %690 = vmatpush1.msra.mxu0 %v589
      %691 = vmatprep.subr.mxu0 0.0
      %692 = vmatpush1.msra.mxu0 %v590
      %693 = vmatprep.subr.mxu0 0.0
      %694 = vmatpush1.msra.mxu0 %v591
      %695 = vmatprep.subr.mxu0 0.0
      %696 = vmatpush1.msra.mxu0 %v592
      %697 = vmatprep.subr.mxu0 0.0
      %698 = vmatpush1.msra.mxu0 %v593
      %699 = vmatprep.subr.mxu0 0.0
      %700 = vmatpush1.msra.mxu0 %v594
      %701 = vmatprep.subr.mxu0 0.0
      %702 = vmatpush1.msra.mxu0 %v595
      %703 = vmatprep.subr.mxu0 0.0
      %704 = vmatpush1.msra.mxu0 %v596
      %705 = vmatprep.subr.mxu0 0.0
      %706 = vmatpush1.msra.mxu0 %v597
      %707 = vmatprep.subr.mxu0 0.0
      %708 = vmatpush1.msra.mxu0 0.0
      %709 = vmatprep.subr.mxu0 0.0
      %710 = vmatpush1.msra.mxu0 0.0
      %711 = vmatprep.subr.mxu0 0.0
      %712 = vmatpush1.msra.mxu0 0.0
      %713 = vmatprep.subr.mxu0 0.0
      %714 = vmatpush1.msra.mxu0 0.0
      %715 = vmatprep.subr.mxu0 0.0
      %716 = vmatpush1.msra.mxu0 0.0
      %717 = vmatprep.subr.mxu0 0.0
      %718 = vmatpush1.msra.mxu0 0.0
      %719 = vmatprep.subr.mxu0 0.0
      %720 = vmatpush1.msra.mxu0 0.0
      %721 = vmatprep.subr.mxu0 0.0
      %722 = vmatpush1.msra.mxu0 0.0
      %723 = vmatprep.subr.mxu0 0.0
      %724 = vmatpush1.msra.mxu0 0.0
      %725 = vmatprep.subr.mxu0 0.0
      %726 = vmatpush1.msra.mxu0 0.0
      %727 = vmatprep.subr.mxu0 0.0
      %728 = vmatpush1.msra.mxu0 0.0
      %729 = vmatprep.subr.mxu0 0.0
      %730 = vmatpush1.msra.mxu0 0.0
      %731 = vmatprep.subr.mxu0 0.0
      %732 = vmatpush1.msra.mxu0 0.0
      %733 = vmatprep.subr.mxu0 0.0
      %734 = vmatpush1.msra.mxu0 0.0
      %735 = vmatprep.subr.mxu0 0.0
      %736 = vmatpush1.msra.mxu0 0.0
      %737 = vmatprep.subr.mxu0 0.0
      %738 = vmatpush1.msra.mxu0 0.0
      %739 = vmatprep.mubr.f32.mxu0 0.0
      %740 = vmatmul.mubr.f32.gmra.mrb[0].mxu0 %v549
      %v741 = vpop.f32.mrb[0].mxu0
      %v742 = vadd.f32 %v672, %v741
      %v743 = vpop.f32.mrb[0].mxu0
      %744 = vdwg.mxu0
      %v745 = vmax.f32 %v742, 0.0
      %v746 = vld [vmem:[%s3] sm:$0xf]
      %vm747 = vcmask 64512
      %v749 = vsel %vm747, %v746, 0
      %751 = vmatprep.subr.mxu0 0.0
      %752 = vmatpush1.msra.mxu0 %v745
      %753 = vmatprep.subr.mxu0 0.0
      %754 = vmatpush1.msra.mxu0 0.0
      %755 = vmatprep.subr.mxu0 0.0
      %756 = vmatpush1.msra.mxu0 0.0
      %757 = vmatprep.subr.mxu0 0.0
      %758 = vmatpush1.msra.mxu0 0.0
      %759 = vmatprep.subr.mxu0 0.0
      %760 = vmatpush1.msra.mxu0 0.0
      %761 = vmatprep.subr.mxu0 0.0
      %762 = vmatpush1.msra.mxu0 0.0
      %763 = vmatprep.subr.mxu0 0.0
      %764 = vmatpush1.msra.mxu0 0.0
      %765 = vmatprep.subr.mxu0 0.0
      %766 = vmatpush1.msra.mxu0 0.0
      %767 = vmatprep.subr.mxu0 0.0
      %768 = vmatpush1.msra.mxu0 0.0
      %769 = vmatprep.subr.mxu0 0.0
      %770 = vmatpush1.msra.mxu0 0.0
      %771 = vmatprep.subr.mxu0 0.0
      %772 = vmatpush1.msra.mxu0 0.0
      %773 = vmatprep.subr.mxu0 0.0
      %774 = vmatpush1.msra.mxu0 0.0
      %775 = vmatprep.subr.mxu0 0.0
      %776 = vmatpush1.msra.mxu0 0.0
      %777 = vmatprep.subr.mxu0 0.0
      %778 = vmatpush1.msra.mxu0 0.0
      %779 = vmatprep.subr.mxu0 0.0
      %780 = vmatpush1.msra.mxu0 0.0
      %781 = vmatprep.subr.mxu0 0.0
      %782 = vmatpush1.msra.mxu0 0.0
      %783 = vmatprep.subr.mxu0 0.0
      %784 = vmatpush1.msra.mxu0 0.0
      %785 = vmatprep.subr.mxu0 0.0
      %786 = vmatpush1.msra.mxu0 0.0
      %787 = vmatprep.subr.mxu0 0.0
      %788 = vmatpush1.msra.mxu0 0.0
      %789 = vmatprep.subr.mxu0 0.0
      %790 = vmatpush1.msra.mxu0 0.0
      %791 = vmatprep.subr.mxu0 0.0
      %792 = vmatpush1.msra.mxu0 0.0
      %793 = vmatprep.subr.mxu0 0.0
      %794 = vmatpush1.msra.mxu0 0.0
      %795 = vmatprep.subr.mxu0 0.0
      %796 = vmatpush1.msra.mxu0 0.0
      %797 = vmatprep.subr.mxu0 0.0
      %798 = vmatpush1.msra.mxu0 0.0
      %799 = vmatprep.subr.mxu0 0.0
      %800 = vmatpush1.msra.mxu0 0.0
      %801 = vmatprep.subr.mxu0 0.0
      %802 = vmatpush1.msra.mxu0 0.0
      %803 = vmatprep.subr.mxu0 0.0
      %804 = vmatpush1.msra.mxu0 0.0
      %805 = vmatprep.subr.mxu0 0.0
      %806 = vmatpush1.msra.mxu0 0.0
      %807 = vmatprep.subr.mxu0 0.0
      %808 = vmatpush1.msra.mxu0 0.0
      %809 = vmatprep.subr.mxu0 0.0
      %810 = vmatpush1.msra.mxu0 0.0
      %811 = vmatprep.subr.mxu0 0.0
      %812 = vmatpush1.msra.mxu0 0.0
      %813 = vmatprep.subr.mxu0 0.0
      %814 = vmatpush1.msra.mxu0 0.0
      %815 = vmatprep.mubr.f32.mxu0 0.0
      %816 = vmatmul.mubr.f32.gmra.mrb[0].mxu0 %v749
      %v817 = vpop.f32.mrb[0].mxu0
      %v818 = vadd.f32 0.0, %v817
      %v819 = vpop.f32.mrb[0].mxu0
      %820 = vdwg.mxu0
      %v821 = vld [vmem:[%s4] sm:$0xff]
      %v822 = vld [vmem:[%s4 + $0x8] sm:$0xff]
      %v823 = vld [vmem:[%s4 + $0x10] sm:$0xff]
      %v824 = vld [vmem:[%s4 + $0x18] sm:$0xff]
      %v825 = vld [vmem:[%s4 + $0x20] sm:$0xff]
      %v826 = vld [vmem:[%s4 + $0x28] sm:$0xff]
      %v827 = vld [vmem:[%s4 + $0x30] sm:$0xff]
      %v828 = vld [vmem:[%s4 + $0x38] sm:$0xff]
      %v829 = vld [vmem:[%s4 + $0x40] sm:$0xff]
      %v830 = vld [vmem:[%s4 + $0x48] sm:$0xff]
      %v831 = vld [vmem:[%s4 + $0x50] sm:$0xff]
      %v832 = vld [vmem:[%s4 + $0x58] sm:$0xff]
      %v833 = vld [vmem:[%s4 + $0x60] sm:$0xff]
      %v834 = vld [vmem:[%s4 + $0x68] sm:$0xff]
      %v835 = vld [vmem:[%s4 + $0x70] sm:$0xff]
      %v836 = vld [vmem:[%s4 + $0x78] sm:$0xff]
      %s837 = scalar_lea.vmem %s3, 4
      %v838 = vld [vmem:[%s837] sm:$0xf]
      %v840 = vsel %vm747, %v838, 0
      %842 = vmatprep.subr.mxu0 0.0
      %843 = vmatpush1.msra.mxu0 %v745
      %844 = vmatprep.subr.mxu0 0.0
      %845 = vmatpush1.msra.mxu0 0.0
      %846 = vmatprep.subr.mxu0 0.0
      %847 = vmatpush1.msra.mxu0 0.0
      %848 = vmatprep.subr.mxu0 0.0
      %849 = vmatpush1.msra.mxu0 0.0
      %850 = vmatprep.subr.mxu0 0.0
      %851 = vmatpush1.msra.mxu0 0.0
      %852 = vmatprep.subr.mxu0 0.0
      %853 = vmatpush1.msra.mxu0 0.0
      %854 = vmatprep.subr.mxu0 0.0
      %855 = vmatpush1.msra.mxu0 0.0
      %856 = vmatprep.subr.mxu0 0.0
      %857 = vmatpush1.msra.mxu0 0.0
      %858 = vmatprep.subr.mxu0 0.0
      %859 = vmatpush1.msra.mxu0 0.0
      %860 = vmatprep.subr.mxu0 0.0
      %861 = vmatpush1.msra.mxu0 0.0
      %862 = vmatprep.subr.mxu0 0.0
      %863 = vmatpush1.msra.mxu0 0.0
      %864 = vmatprep.subr.mxu0 0.0
      %865 = vmatpush1.msra.mxu0 0.0
      %866 = vmatprep.subr.mxu0 0.0
      %867 = vmatpush1.msra.mxu0 0.0
      %868 = vmatprep.subr.mxu0 0.0
      %869 = vmatpush1.msra.mxu0 0.0
      %870 = vmatprep.subr.mxu0 0.0
      %871 = vmatpush1.msra.mxu0 0.0
      %872 = vmatprep.subr.mxu0 0.0
      %873 = vmatpush1.msra.mxu0 0.0
      %874 = vmatprep.subr.mxu0 0.0
      %875 = vmatpush1.msra.mxu0 0.0
      %876 = vmatprep.subr.mxu0 0.0
      %877 = vmatpush1.msra.mxu0 0.0
      %878 = vmatprep.subr.mxu0 0.0
      %879 = vmatpush1.msra.mxu0 0.0
      %880 = vmatprep.subr.mxu0 0.0
      %881 = vmatpush1.msra.mxu0 0.0
      %882 = vmatprep.subr.mxu0 0.0
      %883 = vmatpush1.msra.mxu0 0.0
      %884 = vmatprep.subr.mxu0 0.0
      %885 = vmatpush1.msra.mxu0 0.0
      %886 = vmatprep.subr.mxu0 0.0
      %887 = vmatpush1.msra.mxu0 0.0
      %888 = vmatprep.subr.mxu0 0.0
      %889 = vmatpush1.msra.mxu0 0.0
      %890 = vmatprep.subr.mxu0 0.0
      %891 = vmatpush1.msra.mxu0 0.0
      %892 = vmatprep.subr.mxu0 0.0
      %893 = vmatpush1.msra.mxu0 0.0
      %894 = vmatprep.subr.mxu0 0.0
      %895 = vmatpush1.msra.mxu0 0.0
      %896 = vmatprep.subr.mxu0 0.0
      %897 = vmatpush1.msra.mxu0 0.0
      %898 = vmatprep.subr.mxu0 0.0
      %899 = vmatpush1.msra.mxu0 0.0
      %900 = vmatprep.subr.mxu0 0.0
      %901 = vmatpush1.msra.mxu0 0.0
      %902 = vmatprep.subr.mxu0 0.0
      %903 = vmatpush1.msra.mxu0 0.0
      %904 = vmatprep.subr.mxu0 0.0
      %905 = vmatpush1.msra.mxu0 0.0
      %906 = vmatprep.mubr.f32.mxu0 0.0
      %907 = vmatmul.mubr.f32.gmra.mrb[0].mxu0 %v840
      %v908 = vpop.f32.mrb[0].mxu0
      %v909 = vadd.f32 0.0, %v908
      %v910 = vpop.f32.mrb[0].mxu0
      %911 = vdwg.mxu0
      %s912 = scalar_lea.vmem %s4, 128
      %v913 = vld [vmem:[%s912] sm:$0xff]
      %v914 = vld [vmem:[%s912 + $0x8] sm:$0xff]
      %v915 = vld [vmem:[%s912 + $0x10] sm:$0xff]
      %v916 = vld [vmem:[%s912 + $0x18] sm:$0xff]
      %v917 = vld [vmem:[%s912 + $0x20] sm:$0xff]
      %v918 = vld [vmem:[%s912 + $0x28] sm:$0xff]
      %v919 = vld [vmem:[%s912 + $0x30] sm:$0xff]
      %v920 = vld [vmem:[%s912 + $0x38] sm:$0xff]
      %v921 = vld [vmem:[%s912 + $0x40] sm:$0xff]
      %v922 = vld [vmem:[%s912 + $0x48] sm:$0xff]
      %v923 = vld [vmem:[%s912 + $0x50] sm:$0xff]
      %v924 = vld [vmem:[%s912 + $0x58] sm:$0xff]
      %v925 = vld [vmem:[%s912 + $0x60] sm:$0xff]
      %v926 = vld [vmem:[%s912 + $0x68] sm:$0xff]
      %v927 = vld [vmem:[%s912 + $0x70] sm:$0xff]
      %v928 = vld [vmem:[%s912 + $0x78] sm:$0xff]
      %929 = vmatprep.subr.mxu0 0.0
      %930 = vmatpush1.msra.mxu0 %v913
      %931 = vmatprep.subr.mxu0 0.0
      %932 = vmatpush1.msra.mxu0 %v914
      %933 = vmatprep.subr.mxu0 0.0
      %934 = vmatpush1.msra.mxu0 %v915
      %935 = vmatprep.subr.mxu0 0.0
      %936 = vmatpush1.msra.mxu0 %v916
      %937 = vmatprep.subr.mxu0 0.0
      %938 = vmatpush1.msra.mxu0 %v917
      %939 = vmatprep.subr.mxu0 0.0
      %940 = vmatpush1.msra.mxu0 %v918
      %941 = vmatprep.subr.mxu0 0.0
      %942 = vmatpush1.msra.mxu0 %v919
      %943 = vmatprep.subr.mxu0 0.0
      %944 = vmatpush1.msra.mxu0 %v920
      %945 = vmatprep.subr.mxu0 0.0
      %946 = vmatpush1.msra.mxu0 %v921
      %947 = vmatprep.subr.mxu0 0.0
      %948 = vmatpush1.msra.mxu0 %v922
      %949 = vmatprep.subr.mxu0 0.0
      %950 = vmatpush1.msra.mxu0 %v923
      %951 = vmatprep.subr.mxu0 0.0
      %952 = vmatpush1.msra.mxu0 %v924
      %953 = vmatprep.subr.mxu0 0.0
      %954 = vmatpush1.msra.mxu0 %v925
      %955 = vmatprep.subr.mxu0 0.0
      %956 = vmatpush1.msra.mxu0 %v926
      %957 = vmatprep.subr.mxu0 0.0
      %958 = vmatpush1.msra.mxu0 %v927
      %959 = vmatprep.subr.mxu0 0.0
      %960 = vmatpush1.msra.mxu0 %v928
      %961 = vmatprep.subr.mxu0 0.0
      %962 = vmatpush1.msra.mxu0 0.0
      %963 = vmatprep.subr.mxu0 0.0
      %964 = vmatpush1.msra.mxu0 0.0
      %965 = vmatprep.subr.mxu0 0.0
      %966 = vmatpush1.msra.mxu0 0.0
      %967 = vmatprep.subr.mxu0 0.0
      %968 = vmatpush1.msra.mxu0 0.0
      %969 = vmatprep.subr.mxu0 0.0
      %970 = vmatpush1.msra.mxu0 0.0
      %971 = vmatprep.subr.mxu0 0.0
      %972 = vmatpush1.msra.mxu0 0.0
      %973 = vmatprep.subr.mxu0 0.0
      %974 = vmatpush1.msra.mxu0 0.0
      %975 = vmatprep.subr.mxu0 0.0
      %976 = vmatpush1.msra.mxu0 0.0
      %977 = vmatprep.subr.mxu0 0.0
      %978 = vmatpush1.msra.mxu0 0.0
      %979 = vmatprep.subr.mxu0 0.0
      %980 = vmatpush1.msra.mxu0 0.0
      %981 = vmatprep.subr.mxu0 0.0
      %982 = vmatpush1.msra.mxu0 0.0
      %983 = vmatprep.subr.mxu0 0.0
      %984 = vmatpush1.msra.mxu0 0.0
      %985 = vmatprep.subr.mxu0 0.0
      %986 = vmatpush1.msra.mxu0 0.0
      %987 = vmatprep.subr.mxu0 0.0
      %988 = vmatpush1.msra.mxu0 0.0
      %989 = vmatprep.subr.mxu0 0.0
      %990 = vmatpush1.msra.mxu0 0.0
      %991 = vmatprep.subr.mxu0 0.0
      %992 = vmatpush1.msra.mxu0 0.0
      %993 = vmatprep.mubr.f32.mxu0 0.0
      %994 = vmatmul.mubr.f32.gmra.mrb[0].mxu0 %v909
      %v995 = vpop.f32.mrb[0].mxu0
      %v996 = vadd.f32 0.0, %v995
      %v997 = vpop.f32.mrb[0].mxu0
      %998 = vdwg.mxu0
      %999 = vmatprep.subr.mxu0 0.0
      %1000 = vmatpush1.msra.mxu0 %v821
      %1001 = vmatprep.subr.mxu0 0.0
      %1002 = vmatpush1.msra.mxu0 %v822
      %1003 = vmatprep.subr.mxu0 0.0
      %1004 = vmatpush1.msra.mxu0 %v823
      %1005 = vmatprep.subr.mxu0 0.0
      %1006 = vmatpush1.msra.mxu0 %v824
      %1007 = vmatprep.subr.mxu0 0.0
      %1008 = vmatpush1.msra.mxu0 %v825
      %1009 = vmatprep.subr.mxu0 0.0
      %1010 = vmatpush1.msra.mxu0 %v826
      %1011 = vmatprep.subr.mxu0 0.0
      %1012 = vmatpush1.msra.mxu0 %v827
      %1013 = vmatprep.subr.mxu0 0.0
      %1014 = vmatpush1.msra.mxu0 %v828
      %1015 = vmatprep.subr.mxu0 0.0
      %1016 = vmatpush1.msra.mxu0 %v829
      %1017 = vmatprep.subr.mxu0 0.0
      %1018 = vmatpush1.msra.mxu0 %v830
      %1019 = vmatprep.subr.mxu0 0.0
      %1020 = vmatpush1.msra.mxu0 %v831
      %1021 = vmatprep.subr.mxu0 0.0
      %1022 = vmatpush1.msra.mxu0 %v832
      %1023 = vmatprep.subr.mxu0 0.0
      %1024 = vmatpush1.msra.mxu0 %v833
      %1025 = vmatprep.subr.mxu0 0.0
      %1026 = vmatpush1.msra.mxu0 %v834
      %1027 = vmatprep.subr.mxu0 0.0
      %1028 = vmatpush1.msra.mxu0 %v835
      %1029 = vmatprep.subr.mxu0 0.0
      %1030 = vmatpush1.msra.mxu0 %v836
      %1031 = vmatprep.subr.mxu0 0.0
      %1032 = vmatpush1.msra.mxu0 0.0
      %1033 = vmatprep.subr.mxu0 0.0
      %1034 = vmatpush1.msra.mxu0 0.0
      %1035 = vmatprep.subr.mxu0 0.0
      %1036 = vmatpush1.msra.mxu0 0.0
      %1037 = vmatprep.subr.mxu0 0.0
      %1038 = vmatpush1.msra.mxu0 0.0
      %1039 = vmatprep.subr.mxu0 0.0
      %1040 = vmatpush1.msra.mxu0 0.0
      %1041 = vmatprep.subr.mxu0 0.0
      %1042 = vmatpush1.msra.mxu0 0.0
      %1043 = vmatprep.subr.mxu0 0.0
      %1044 = vmatpush1.msra.mxu0 0.0
      %1045 = vmatprep.subr.mxu0 0.0
      %1046 = vmatpush1.msra.mxu0 0.0
      %1047 = vmatprep.subr.mxu0 0.0
      %1048 = vmatpush1.msra.mxu0 0.0
      %1049 = vmatprep.subr.mxu0 0.0
      %1050 = vmatpush1.msra.mxu0 0.0
      %1051 = vmatprep.subr.mxu0 0.0
      %1052 = vmatpush1.msra.mxu0 0.0
      %1053 = vmatprep.subr.mxu0 0.0
      %1054 = vmatpush1.msra.mxu0 0.0
      %1055 = vmatprep.subr.mxu0 0.0
      %1056 = vmatpush1.msra.mxu0 0.0
      %1057 = vmatprep.subr.mxu0 0.0
      %1058 = vmatpush1.msra.mxu0 0.0
      %1059 = vmatprep.subr.mxu0 0.0
      %1060 = vmatpush1.msra.mxu0 0.0
      %1061 = vmatprep.subr.mxu0 0.0
      %1062 = vmatpush1.msra.mxu0 0.0
      %1063 = vmatprep.mubr.f32.mxu0 0.0
      %1064 = vmatmul.mubr.f32.gmra.mrb[0].mxu0 %v818
      %v1065 = vpop.f32.mrb[0].mxu0
      %v1066 = vadd.f32 %v996, %v1065
      %v1067 = vpop.f32.mrb[0].mxu0
      %1068 = vdwg.mxu0
      %s1069 = scalar_lea.vmem %s3, 8
      %v1070 = vld [vmem:[%s1069] sm:$0xf]
      %v1072 = vsel %vm747, %v1070, 0
      %1074 = vmatprep.subr.mxu0 0.0
      %1075 = vmatpush1.msra.mxu0 %v745
      %1076 = vmatprep.subr.mxu0 0.0
      %1077 = vmatpush1.msra.mxu0 0.0
      %1078 = vmatprep.subr.mxu0 0.0
      %1079 = vmatpush1.msra.mxu0 0.0
      %1080 = vmatprep.subr.mxu0 0.0
      %1081 = vmatpush1.msra.mxu0 0.0
      %1082 = vmatprep.subr.mxu0 0.0
      %1083 = vmatpush1.msra.mxu0 0.0
      %1084 = vmatprep.subr.mxu0 0.0
      %1085 = vmatpush1.msra.mxu0 0.0
      %1086 = vmatprep.subr.mxu0 0.0
      %1087 = vmatpush1.msra.mxu0 0.0
      %1088 = vmatprep.subr.mxu0 0.0
      %1089 = vmatpush1.msra.mxu0 0.0
      %1090 = vmatprep.subr.mxu0 0.0
      %1091 = vmatpush1.msra.mxu0 0.0
      %1092 = vmatprep.subr.mxu0 0.0
      %1093 = vmatpush1.msra.mxu0 0.0
      %1094 = vmatprep.subr.mxu0 0.0
      %1095 = vmatpush1.msra.mxu0 0.0
      %1096 = vmatprep.subr.mxu0 0.0
      %1097 = vmatpush1.msra.mxu0 0.0
      %1098 = vmatprep.subr.mxu0 0.0
      %1099 = vmatpush1.msra.mxu0 0.0
      %1100 = vmatprep.subr.mxu0 0.0
      %1101 = vmatpush1.msra.mxu0 0.0
      %1102 = vmatprep.subr.mxu0 0.0
      %1103 = vmatpush1.msra.mxu0 0.0
      %1104 = vmatprep.subr.mxu0 0.0
      %1105 = vmatpush1.msra.mxu0 0.0
      %1106 = vmatprep.subr.mxu0 0.0
      %1107 = vmatpush1.msra.mxu0 0.0
      %1108 = vmatprep.subr.mxu0 0.0
      %1109 = vmatpush1.msra.mxu0 0.0
      %1110 = vmatprep.subr.mxu0 0.0
      %1111 = vmatpush1.msra.mxu0 0.0
      %1112 = vmatprep.subr.mxu0 0.0
      %1113 = vmatpush1.msra.mxu0 0.0
      %1114 = vmatprep.subr.mxu0 0.0
      %1115 = vmatpush1.msra.mxu0 0.0
      %1116 = vmatprep.subr.mxu0 0.0
      %1117 = vmatpush1.msra.mxu0 0.0
      %1118 = vmatprep.subr.mxu0 0.0
      %1119 = vmatpush1.msra.mxu0 0.0
      %1120 = vmatprep.subr.mxu0 0.0
      %1121 = vmatpush1.msra.mxu0 0.0
      %1122 = vmatprep.subr.mxu0 0.0
      %1123 = vmatpush1.msra.mxu0 0.0
      %1124 = vmatprep.subr.mxu0 0.0
      %1125 = vmatpush1.msra.mxu0 0.0
      %1126 = vmatprep.subr.mxu0 0.0
      %1127 = vmatpush1.msra.mxu0 0.0
      %1128 = vmatprep.subr.mxu0 0.0
      %1129 = vmatpush1.msra.mxu0 0.0
      %1130 = vmatprep.subr.mxu0 0.0
      %1131 = vmatpush1.msra.mxu0 0.0
      %1132 = vmatprep.subr.mxu0 0.0
      %1133 = vmatpush1.msra.mxu0 0.0
      %1134 = vmatprep.subr.mxu0 0.0
      %1135 = vmatpush1.msra.mxu0 0.0
      %1136 = vmatprep.subr.mxu0 0.0
      %1137 = vmatpush1.msra.mxu0 0.0
      %1138 = vmatprep.mubr.f32.mxu0 0.0
      %1139 = vmatmul.mubr.f32.gmra.mrb[0].mxu0 %v1072
      %v1140 = vpop.f32.mrb[0].mxu0
      %v1141 = vadd.f32 0.0, %v1140
      %v1142 = vpop.f32.mrb[0].mxu0
      %1143 = vdwg.mxu0
      %s1144 = scalar_lea.vmem %s4, 256
      %v1145 = vld [vmem:[%s1144] sm:$0xff]
      %v1146 = vld [vmem:[%s1144 + $0x8] sm:$0xff]
      %v1147 = vld [vmem:[%s1144 + $0x10] sm:$0xff]
      %v1148 = vld [vmem:[%s1144 + $0x18] sm:$0xff]
      %v1149 = vld [vmem:[%s1144 + $0x20] sm:$0xff]
      %v1150 = vld [vmem:[%s1144 + $0x28] sm:$0xff]
      %v1151 = vld [vmem:[%s1144 + $0x30] sm:$0xff]
      %v1152 = vld [vmem:[%s1144 + $0x38] sm:$0xff]
      %v1153 = vld [vmem:[%s1144 + $0x40] sm:$0xff]
      %v1154 = vld [vmem:[%s1144 + $0x48] sm:$0xff]
      %v1155 = vld [vmem:[%s1144 + $0x50] sm:$0xff]
      %v1156 = vld [vmem:[%s1144 + $0x58] sm:$0xff]
      %v1157 = vld [vmem:[%s1144 + $0x60] sm:$0xff]
      %v1158 = vld [vmem:[%s1144 + $0x68] sm:$0xff]
      %v1159 = vld [vmem:[%s1144 + $0x70] sm:$0xff]
      %v1160 = vld [vmem:[%s1144 + $0x78] sm:$0xff]
      %1161 = vmatprep.subr.mxu0 0.0
      %1162 = vmatpush1.msra.mxu0 %v1145
      %1163 = vmatprep.subr.mxu0 0.0
      %1164 = vmatpush1.msra.mxu0 %v1146
      %1165 = vmatprep.subr.mxu0 0.0
      %1166 = vmatpush1.msra.mxu0 %v1147
      %1167 = vmatprep.subr.mxu0 0.0
      %1168 = vmatpush1.msra.mxu0 %v1148
      %1169 = vmatprep.subr.mxu0 0.0
      %1170 = vmatpush1.msra.mxu0 %v1149
      %1171 = vmatprep.subr.mxu0 0.0
      %1172 = vmatpush1.msra.mxu0 %v1150
      %1173 = vmatprep.subr.mxu0 0.0
      %1174 = vmatpush1.msra.mxu0 %v1151
      %1175 = vmatprep.subr.mxu0 0.0
      %1176 = vmatpush1.msra.mxu0 %v1152
      %1177 = vmatprep.subr.mxu0 0.0
      %1178 = vmatpush1.msra.mxu0 %v1153
      %1179 = vmatprep.subr.mxu0 0.0
      %1180 = vmatpush1.msra.mxu0 %v1154
      %1181 = vmatprep.subr.mxu0 0.0
      %1182 = vmatpush1.msra.mxu0 %v1155
      %1183 = vmatprep.subr.mxu0 0.0
      %1184 = vmatpush1.msra.mxu0 %v1156
      %1185 = vmatprep.subr.mxu0 0.0
      %1186 = vmatpush1.msra.mxu0 %v1157
      %1187 = vmatprep.subr.mxu0 0.0
      %1188 = vmatpush1.msra.mxu0 %v1158
      %1189 = vmatprep.subr.mxu0 0.0
      %1190 = vmatpush1.msra.mxu0 %v1159
      %1191 = vmatprep.subr.mxu0 0.0
      %1192 = vmatpush1.msra.mxu0 %v1160
      %1193 = vmatprep.subr.mxu0 0.0
      %1194 = vmatpush1.msra.mxu0 0.0
      %1195 = vmatprep.subr.mxu0 0.0
      %1196 = vmatpush1.msra.mxu0 0.0
      %1197 = vmatprep.subr.mxu0 0.0
      %1198 = vmatpush1.msra.mxu0 0.0
      %1199 = vmatprep.subr.mxu0 0.0
      %1200 = vmatpush1.msra.mxu0 0.0
      %1201 = vmatprep.subr.mxu0 0.0
      %1202 = vmatpush1.msra.mxu0 0.0
      %1203 = vmatprep.subr.mxu0 0.0
      %1204 = vmatpush1.msra.mxu0 0.0
      %1205 = vmatprep.subr.mxu0 0.0
      %1206 = vmatpush1.msra.mxu0 0.0
      %1207 = vmatprep.subr.mxu0 0.0
      %1208 = vmatpush1.msra.mxu0 0.0
      %1209 = vmatprep.subr.mxu0 0.0
      %1210 = vmatpush1.msra.mxu0 0.0
      %1211 = vmatprep.subr.mxu0 0.0
      %1212 = vmatpush1.msra.mxu0 0.0
      %1213 = vmatprep.subr.mxu0 0.0
      %1214 = vmatpush1.msra.mxu0 0.0
      %1215 = vmatprep.subr.mxu0 0.0
      %1216 = vmatpush1.msra.mxu0 0.0
      %1217 = vmatprep.subr.mxu0 0.0
      %1218 = vmatpush1.msra.mxu0 0.0
      %1219 = vmatprep.subr.mxu0 0.0
      %1220 = vmatpush1.msra.mxu0 0.0
      %1221 = vmatprep.subr.mxu0 0.0
      %1222 = vmatpush1.msra.mxu0 0.0
      %1223 = vmatprep.subr.mxu0 0.0
      %1224 = vmatpush1.msra.mxu0 0.0
      %1225 = vmatprep.mubr.f32.mxu0 0.0
      %1226 = vmatmul.mubr.f32.gmra.mrb[0].mxu0 %v1141
      %v1227 = vpop.f32.mrb[0].mxu0
      %v1228 = vadd.f32 0.0, %v1227
      %v1229 = vpop.f32.mrb[0].mxu0
      %1230 = vdwg.mxu0
      %v1231 = vadd.f32 %v1066, %v1228
      %s1232 = scalar_lea.vmem %s3, 12
      %v1233 = vld [vmem:[%s1232] sm:$0xf]
      %v1235 = vsel %vm747, %v1233, 0
      %1237 = vmatprep.subr.mxu0 0.0
      %1238 = vmatpush1.msra.mxu0 %v745
      %1239 = vmatprep.subr.mxu0 0.0
      %1240 = vmatpush1.msra.mxu0 0.0
      %1241 = vmatprep.subr.mxu0 0.0
      %1242 = vmatpush1.msra.mxu0 0.0
      %1243 = vmatprep.subr.mxu0 0.0
      %1244 = vmatpush1.msra.mxu0 0.0
      %1245 = vmatprep.subr.mxu0 0.0
      %1246 = vmatpush1.msra.mxu0 0.0
      %1247 = vmatprep.subr.mxu0 0.0
      %1248 = vmatpush1.msra.mxu0 0.0
      %1249 = vmatprep.subr.mxu0 0.0
      %1250 = vmatpush1.msra.mxu0 0.0
      %1251 = vmatprep.subr.mxu0 0.0
      %1252 = vmatpush1.msra.mxu0 0.0
      %1253 = vmatprep.subr.mxu0 0.0
      %1254 = vmatpush1.msra.mxu0 0.0
      %1255 = vmatprep.subr.mxu0 0.0
      %1256 = vmatpush1.msra.mxu0 0.0
      %1257 = vmatprep.subr.mxu0 0.0
      %1258 = vmatpush1.msra.mxu0 0.0
      %1259 = vmatprep.subr.mxu0 0.0
      %1260 = vmatpush1.msra.mxu0 0.0
      %1261 = vmatprep.subr.mxu0 0.0
      %1262 = vmatpush1.msra.mxu0 0.0
      %1263 = vmatprep.subr.mxu0 0.0
      %1264 = vmatpush1.msra.mxu0 0.0
      %1265 = vmatprep.subr.mxu0 0.0
      %1266 = vmatpush1.msra.mxu0 0.0
      %1267 = vmatprep.subr.mxu0 0.0
      %1268 = vmatpush1.msra.mxu0 0.0
      %1269 = vmatprep.subr.mxu0 0.0
      %1270 = vmatpush1.msra.mxu0 0.0
      %1271 = vmatprep.subr.mxu0 0.0
      %1272 = vmatpush1.msra.mxu0 0.0
      %1273 = vmatprep.subr.mxu0 0.0
      %1274 = vmatpush1.msra.mxu0 0.0
      %1275 = vmatprep.subr.mxu0 0.0
      %1276 = vmatpush1.msra.mxu0 0.0
      %1277 = vmatprep.subr.mxu0 0.0
      %1278 = vmatpush1.msra.mxu0 0.0
      %1279 = vmatprep.subr.mxu0 0.0
      %1280 = vmatpush1.msra.mxu0 0.0
      %1281 = vmatprep.subr.mxu0 0.0
      %1282 = vmatpush1.msra.mxu0 0.0
      %1283 = vmatprep.subr.mxu0 0.0
      %1284 = vmatpush1.msra.mxu0 0.0
      %1285 = vmatprep.subr.mxu0 0.0
      %1286 = vmatpush1.msra.mxu0 0.0
      %1287 = vmatprep.subr.mxu0 0.0
      %1288 = vmatpush1.msra.mxu0 0.0
      %1289 = vmatprep.subr.mxu0 0.0
      %1290 = vmatpush1.msra.mxu0 0.0
      %1291 = vmatprep.subr.mxu0 0.0
      %1292 = vmatpush1.msra.mxu0 0.0
      %1293 = vmatprep.subr.mxu0 0.0
      %1294 = vmatpush1.msra.mxu0 0.0
      %1295 = vmatprep.subr.mxu0 0.0
      %1296 = vmatpush1.msra.mxu0 0.0
      %1297 = vmatprep.subr.mxu0 0.0
      %1298 = vmatpush1.msra.mxu0 0.0
      %1299 = vmatprep.subr.mxu0 0.0
      %1300 = vmatpush1.msra.mxu0 0.0
      %1301 = vmatprep.mubr.f32.mxu0 0.0
      %1302 = vmatmul.mubr.f32.gmra.mrb[0].mxu0 %v1235
      %v1303 = vpop.f32.mrb[0].mxu0
      %v1304 = vadd.f32 0.0, %v1303
      %v1305 = vpop.f32.mrb[0].mxu0
      %1306 = vdwg.mxu0
      %s1307 = scalar_lea.vmem %s4, 384
      %v1308 = vld [vmem:[%s1307] sm:$0xff]
      %v1309 = vld [vmem:[%s1307 + $0x8] sm:$0xff]
      %v1310 = vld [vmem:[%s1307 + $0x10] sm:$0xff]
      %v1311 = vld [vmem:[%s1307 + $0x18] sm:$0xff]
      %v1312 = vld [vmem:[%s1307 + $0x20] sm:$0xff]
      %v1313 = vld [vmem:[%s1307 + $0x28] sm:$0xff]
      %v1314 = vld [vmem:[%s1307 + $0x30] sm:$0xff]
      %v1315 = vld [vmem:[%s1307 + $0x38] sm:$0xff]
      %v1316 = vld [vmem:[%s1307 + $0x40] sm:$0xff]
      %v1317 = vld [vmem:[%s1307 + $0x48] sm:$0xff]
      %v1318 = vld [vmem:[%s1307 + $0x50] sm:$0xff]
      %v1319 = vld [vmem:[%s1307 + $0x58] sm:$0xff]
      %v1320 = vld [vmem:[%s1307 + $0x60] sm:$0xff]
      %v1321 = vld [vmem:[%s1307 + $0x68] sm:$0xff]
      %v1322 = vld [vmem:[%s1307 + $0x70] sm:$0xff]
      %v1323 = vld [vmem:[%s1307 + $0x78] sm:$0xff]
      %1324 = vmatprep.subr.mxu0 0.0
      %1325 = vmatpush1.msra.mxu0 %v1308
      %1326 = vmatprep.subr.mxu0 0.0
      %1327 = vmatpush1.msra.mxu0 %v1309
      %1328 = vmatprep.subr.mxu0 0.0
      %1329 = vmatpush1.msra.mxu0 %v1310
      %1330 = vmatprep.subr.mxu0 0.0
      %1331 = vmatpush1.msra.mxu0 %v1311
      %1332 = vmatprep.subr.mxu0 0.0
      %1333 = vmatpush1.msra.mxu0 %v1312
      %1334 = vmatprep.subr.mxu0 0.0
      %1335 = vmatpush1.msra.mxu0 %v1313
      %1336 = vmatprep.subr.mxu0 0.0
      %1337 = vmatpush1.msra.mxu0 %v1314
      %1338 = vmatprep.subr.mxu0 0.0
      %1339 = vmatpush1.msra.mxu0 %v1315
      %1340 = vmatprep.subr.mxu0 0.0
      %1341 = vmatpush1.msra.mxu0 %v1316
      %1342 = vmatprep.subr.mxu0 0.0
      %1343 = vmatpush1.msra.mxu0 %v1317
      %1344 = vmatprep.subr.mxu0 0.0
      %1345 = vmatpush1.msra.mxu0 %v1318
      %1346 = vmatprep.subr.mxu0 0.0
      %1347 = vmatpush1.msra.mxu0 %v1319
      %1348 = vmatprep.subr.mxu0 0.0
      %1349 = vmatpush1.msra.mxu0 %v1320
      %1350 = vmatprep.subr.mxu0 0.0
      %1351 = vmatpush1.msra.mxu0 %v1321
      %1352 = vmatprep.subr.mxu0 0.0
      %1353 = vmatpush1.msra.mxu0 %v1322
      %1354 = vmatprep.subr.mxu0 0.0
      %1355 = vmatpush1.msra.mxu0 %v1323
      %1356 = vmatprep.subr.mxu0 0.0
      %1357 = vmatpush1.msra.mxu0 0.0
      %1358 = vmatprep.subr.mxu0 0.0
      %1359 = vmatpush1.msra.mxu0 0.0
      %1360 = vmatprep.subr.mxu0 0.0
      %1361 = vmatpush1.msra.mxu0 0.0
      %1362 = vmatprep.subr.mxu0 0.0
      %1363 = vmatpush1.msra.mxu0 0.0
      %1364 = vmatprep.subr.mxu0 0.0
      %1365 = vmatpush1.msra.mxu0 0.0
      %1366 = vmatprep.subr.mxu0 0.0
      %1367 = vmatpush1.msra.mxu0 0.0
      %1368 = vmatprep.subr.mxu0 0.0
      %1369 = vmatpush1.msra.mxu0 0.0
      %1370 = vmatprep.subr.mxu0 0.0
      %1371 = vmatpush1.msra.mxu0 0.0
      %1372 = vmatprep.subr.mxu0 0.0
      %1373 = vmatpush1.msra.mxu0 0.0
      %1374 = vmatprep.subr.mxu0 0.0
      %1375 = vmatpush1.msra.mxu0 0.0
      %1376 = vmatprep.subr.mxu0 0.0
      %1377 = vmatpush1.msra.mxu0 0.0
      %1378 = vmatprep.subr.mxu0 0.0
      %1379 = vmatpush1.msra.mxu0 0.0
      %1380 = vmatprep.subr.mxu0 0.0
      %1381 = vmatpush1.msra.mxu0 0.0
      %1382 = vmatprep.subr.mxu0 0.0
      %1383 = vmatpush1.msra.mxu0 0.0
      %1384 = vmatprep.subr.mxu0 0.0
      %1385 = vmatpush1.msra.mxu0 0.0
      %1386 = vmatprep.subr.mxu0 0.0
      %1387 = vmatpush1.msra.mxu0 0.0
      %1388 = vmatprep.mubr.f32.mxu0 0.0
      %1389 = vmatmul.mubr.f32.gmra.mrb[0].mxu0 %v1304
      %v1390 = vpop.f32.mrb[0].mxu0
      %v1391 = vadd.f32 0.0, %v1390
      %v1392 = vpop.f32.mrb[0].mxu0
      %1393 = vdwg.mxu0
      %v1394 = vadd.f32 %v1231, %v1391
      %v1395 = vld [vmem:[%s5] sm:$0x1]
      %v1397 = vlaneseq
      %v1398 = vshrl.u32 %v1397, 7
      %v1399 = vsub.s32 0, %v1398
      %v1400 = vrot.slane %v1395, %v1399
      %v1402 = vadd.f32 %v1394, %v1400
      %v1403 = vmax.f32 %v1402, 0.0
      %v1404 = vld [vmem:[%s6] sm:$0xf]
      %vm1405 = vcmask 31744
      %v1407 = vsel %vm1405, %v1404, 0
      %vm1409 = vcmask 1043456
      %v1411 = vsel %vm1409, %v1403, 0
      %1413 = vmatprep.subr.mxu0 0.0
      %1414 = vmatpush1.msra.mxu0 %v1411
      %1415 = vmatprep.subr.mxu0 0.0
      %1416 = vmatpush1.msra.mxu0 0.0
      %1417 = vmatprep.subr.mxu0 0.0
      %1418 = vmatpush1.msra.mxu0 0.0
      %1419 = vmatprep.subr.mxu0 0.0
      %1420 = vmatpush1.msra.mxu0 0.0
      %1421 = vmatprep.subr.mxu0 0.0
      %1422 = vmatpush1.msra.mxu0 0.0
      %1423 = vmatprep.subr.mxu0 0.0
      %1424 = vmatpush1.msra.mxu0 0.0
      %1425 = vmatprep.subr.mxu0 0.0
      %1426 = vmatpush1.msra.mxu0 0.0
      %1427 = vmatprep.subr.mxu0 0.0
      %1428 = vmatpush1.msra.mxu0 0.0
      %1429 = vmatprep.subr.mxu0 0.0
      %1430 = vmatpush1.msra.mxu0 0.0
      %1431 = vmatprep.subr.mxu0 0.0
      %1432 = vmatpush1.msra.mxu0 0.0
      %1433 = vmatprep.subr.mxu0 0.0
      %1434 = vmatpush1.msra.mxu0 0.0
      %1435 = vmatprep.subr.mxu0 0.0
      %1436 = vmatpush1.msra.mxu0 0.0
      %1437 = vmatprep.subr.mxu0 0.0
      %1438 = vmatpush1.msra.mxu0 0.0
      %1439 = vmatprep.subr.mxu0 0.0
      %1440 = vmatpush1.msra.mxu0 0.0
      %1441 = vmatprep.subr.mxu0 0.0
      %1442 = vmatpush1.msra.mxu0 0.0
      %1443 = vmatprep.subr.mxu0 0.0
      %1444 = vmatpush1.msra.mxu0 0.0
      %1445 = vmatprep.subr.mxu0 0.0
      %1446 = vmatpush1.msra.mxu0 0.0
      %1447 = vmatprep.subr.mxu0 0.0
      %1448 = vmatpush1.msra.mxu0 0.0
      %1449 = vmatprep.subr.mxu0 0.0
      %1450 = vmatpush1.msra.mxu0 0.0
      %1451 = vmatprep.subr.mxu0 0.0
      %1452 = vmatpush1.msra.mxu0 0.0
      %1453 = vmatprep.subr.mxu0 0.0
      %1454 = vmatpush1.msra.mxu0 0.0
      %1455 = vmatprep.subr.mxu0 0.0
      %1456 = vmatpush1.msra.mxu0 0.0
      %1457 = vmatprep.subr.mxu0 0.0
      %1458 = vmatpush1.msra.mxu0 0.0
      %1459 = vmatprep.subr.mxu0 0.0
      %1460 = vmatpush1.msra.mxu0 0.0
      %1461 = vmatprep.subr.mxu0 0.0
      %1462 = vmatpush1.msra.mxu0 0.0
      %1463 = vmatprep.subr.mxu0 0.0
      %1464 = vmatpush1.msra.mxu0 0.0
      %1465 = vmatprep.subr.mxu0 0.0
      %1466 = vmatpush1.msra.mxu0 0.0
      %1467 = vmatprep.subr.mxu0 0.0
      %1468 = vmatpush1.msra.mxu0 0.0
      %1469 = vmatprep.subr.mxu0 0.0
      %1470 = vmatpush1.msra.mxu0 0.0
      %1471 = vmatprep.subr.mxu0 0.0
      %1472 = vmatpush1.msra.mxu0 0.0
      %1473 = vmatprep.subr.mxu0 0.0
      %1474 = vmatpush1.msra.mxu0 0.0
      %1475 = vmatprep.subr.mxu0 0.0
      %1476 = vmatpush1.msra.mxu0 0.0
      %1477 = vmatprep.mubr.f32.mxu0 0.0
      %1478 = vmatmul.mubr.f32.gmra.mrb[0].mxu0 %v1407
      %v1479 = vpop.f32.mrb[0].mxu0
      %v1480 = vadd.f32 0.0, %v1479
      %v1481 = vpop.f32.mrb[0].mxu0
      %1482 = vdwg.mxu0
      %v1483 = vld [vmem:[%s7] sm:$0xff]
      %v1484 = vld [vmem:[%s7 + $0x8] sm:$0xff]
      %v1485 = vld [vmem:[%s7 + $0x10] sm:$0xff]
      %v1486 = vld [vmem:[%s7 + $0x18] sm:$0xff]
      %v1487 = vld [vmem:[%s7 + $0x20] sm:$0xff]
      %v1488 = vld [vmem:[%s7 + $0x28] sm:$0xff]
      %v1489 = vld [vmem:[%s7 + $0x30] sm:$0xff]
      %v1490 = vld [vmem:[%s7 + $0x38] sm:$0xff]
      %v1491 = vld [vmem:[%s7 + $0x40] sm:$0xff]
      %v1492 = vld [vmem:[%s7 + $0x48] sm:$0xff]
      %v1493 = vld [vmem:[%s7 + $0x50] sm:$0xff]
      %v1494 = vld [vmem:[%s7 + $0x58] sm:$0xff]
      %v1495 = vld [vmem:[%s7 + $0x60] sm:$0xff]
      %v1496 = vld [vmem:[%s7 + $0x68] sm:$0xff]
      %v1497 = vld [vmem:[%s7 + $0x70] sm:$0xff]
      %v1498 = vld [vmem:[%s7 + $0x78] sm:$0xff]
      %s1499 = scalar_lea.vmem %s6, 4
      %v1500 = vld [vmem:[%s1499] sm:$0xf]
      %v1502 = vsel %vm1405, %v1500, 0
      %1504 = vmatprep.subr.mxu0 0.0
      %1505 = vmatpush1.msra.mxu0 %v1411
      %1506 = vmatprep.subr.mxu0 0.0
      %1507 = vmatpush1.msra.mxu0 0.0
      %1508 = vmatprep.subr.mxu0 0.0
      %1509 = vmatpush1.msra.mxu0 0.0
      %1510 = vmatprep.subr.mxu0 0.0
      %1511 = vmatpush1.msra.mxu0 0.0
      %1512 = vmatprep.subr.mxu0 0.0
      %1513 = vmatpush1.msra.mxu0 0.0
      %1514 = vmatprep.subr.mxu0 0.0
      %1515 = vmatpush1.msra.mxu0 0.0
      %1516 = vmatprep.subr.mxu0 0.0
      %1517 = vmatpush1.msra.mxu0 0.0
      %1518 = vmatprep.subr.mxu0 0.0
      %1519 = vmatpush1.msra.mxu0 0.0
      %1520 = vmatprep.subr.mxu0 0.0
      %1521 = vmatpush1.msra.mxu0 0.0
      %1522 = vmatprep.subr.mxu0 0.0
      %1523 = vmatpush1.msra.mxu0 0.0
      %1524 = vmatprep.subr.mxu0 0.0
      %1525 = vmatpush1.msra.mxu0 0.0
      %1526 = vmatprep.subr.mxu0 0.0
      %1527 = vmatpush1.msra.mxu0 0.0
      %1528 = vmatprep.subr.mxu0 0.0
      %1529 = vmatpush1.msra.mxu0 0.0
      %1530 = vmatprep.subr.mxu0 0.0
      %1531 = vmatpush1.msra.mxu0 0.0
      %1532 = vmatprep.subr.mxu0 0.0
      %1533 = vmatpush1.msra.mxu0 0.0
      %1534 = vmatprep.subr.mxu0 0.0
      %1535 = vmatpush1.msra.mxu0 0.0
      %1536 = vmatprep.subr.mxu0 0.0
      %1537 = vmatpush1.msra.mxu0 0.0
      %1538 = vmatprep.subr.mxu0 0.0
      %1539 = vmatpush1.msra.mxu0 0.0
      %1540 = vmatprep.subr.mxu0 0.0
      %1541 = vmatpush1.msra.mxu0 0.0
      %1542 = vmatprep.subr.mxu0 0.0
      %1543 = vmatpush1.msra.mxu0 0.0
      %1544 = vmatprep.subr.mxu0 0.0
      %1545 = vmatpush1.msra.mxu0 0.0
      %1546 = vmatprep.subr.mxu0 0.0
      %1547 = vmatpush1.msra.mxu0 0.0
      %1548 = vmatprep.subr.mxu0 0.0
      %1549 = vmatpush1.msra.mxu0 0.0
      %1550 = vmatprep.subr.mxu0 0.0
      %1551 = vmatpush1.msra.mxu0 0.0
      %1552 = vmatprep.subr.mxu0 0.0
      %1553 = vmatpush1.msra.mxu0 0.0
      %1554 = vmatprep.subr.mxu0 0.0
      %1555 = vmatpush1.msra.mxu0 0.0
      %1556 = vmatprep.subr.mxu0 0.0
      %1557 = vmatpush1.msra.mxu0 0.0
      %1558 = vmatprep.subr.mxu0 0.0
      %1559 = vmatpush1.msra.mxu0 0.0
      %1560 = vmatprep.subr.mxu0 0.0
      %1561 = vmatpush1.msra.mxu0 0.0
      %1562 = vmatprep.subr.mxu0 0.0
      %1563 = vmatpush1.msra.mxu0 0.0
      %1564 = vmatprep.subr.mxu0 0.0
      %1565 = vmatpush1.msra.mxu0 0.0
      %1566 = vmatprep.subr.mxu0 0.0
      %1567 = vmatpush1.msra.mxu0 0.0
      %1568 = vmatprep.mubr.f32.mxu0 0.0
      %1569 = vmatmul.mubr.f32.gmra.mrb[0].mxu0 %v1502
      %v1570 = vpop.f32.mrb[0].mxu0
      %v1571 = vadd.f32 0.0, %v1570
      %v1572 = vpop.f32.mrb[0].mxu0
      %1573 = vdwg.mxu0
      %s1574 = scalar_lea.vmem %s7, 128
      %v1575 = vld [vmem:[%s1574] sm:$0xff]
      %v1576 = vld [vmem:[%s1574 + $0x8] sm:$0xff]
      %v1577 = vld [vmem:[%s1574 + $0x10] sm:$0xff]
      %v1578 = vld [vmem:[%s1574 + $0x18] sm:$0xff]
      %v1579 = vld [vmem:[%s1574 + $0x20] sm:$0xff]
      %v1580 = vld [vmem:[%s1574 + $0x28] sm:$0xff]
      %v1581 = vld [vmem:[%s1574 + $0x30] sm:$0xff]
      %v1582 = vld [vmem:[%s1574 + $0x38] sm:$0xff]
      %v1583 = vld [vmem:[%s1574 + $0x40] sm:$0xff]
      %v1584 = vld [vmem:[%s1574 + $0x48] sm:$0xff]
      %v1585 = vld [vmem:[%s1574 + $0x50] sm:$0xff]
      %v1586 = vld [vmem:[%s1574 + $0x58] sm:$0xff]
      %v1587 = vld [vmem:[%s1574 + $0x60] sm:$0xff]
      %v1588 = vld [vmem:[%s1574 + $0x68] sm:$0xff]
      %v1589 = vld [vmem:[%s1574 + $0x70] sm:$0xff]
      %v1590 = vld [vmem:[%s1574 + $0x78] sm:$0xff]
      %1591 = vmatprep.subr.mxu0 0.0
      %1592 = vmatpush1.msra.mxu0 %v1575
      %1593 = vmatprep.subr.mxu0 0.0
      %1594 = vmatpush1.msra.mxu0 %v1576
      %1595 = vmatprep.subr.mxu0 0.0
      %1596 = vmatpush1.msra.mxu0 %v1577
      %1597 = vmatprep.subr.mxu0 0.0
      %1598 = vmatpush1.msra.mxu0 %v1578
      %1599 = vmatprep.subr.mxu0 0.0
      %1600 = vmatpush1.msra.mxu0 %v1579
      %1601 = vmatprep.subr.mxu0 0.0
      %1602 = vmatpush1.msra.mxu0 %v1580
      %1603 = vmatprep.subr.mxu0 0.0
      %1604 = vmatpush1.msra.mxu0 %v1581
      %1605 = vmatprep.subr.mxu0 0.0
      %1606 = vmatpush1.msra.mxu0 %v1582
      %1607 = vmatprep.subr.mxu0 0.0
      %1608 = vmatpush1.msra.mxu0 %v1583
      %1609 = vmatprep.subr.mxu0 0.0
      %1610 = vmatpush1.msra.mxu0 %v1584
      %1611 = vmatprep.subr.mxu0 0.0
      %1612 = vmatpush1.msra.mxu0 %v1585
      %1613 = vmatprep.subr.mxu0 0.0
      %1614 = vmatpush1.msra.mxu0 %v1586
      %1615 = vmatprep.subr.mxu0 0.0
      %1616 = vmatpush1.msra.mxu0 %v1587
      %1617 = vmatprep.subr.mxu0 0.0
      %1618 = vmatpush1.msra.mxu0 %v1588
      %1619 = vmatprep.subr.mxu0 0.0
      %1620 = vmatpush1.msra.mxu0 %v1589
      %1621 = vmatprep.subr.mxu0 0.0
      %1622 = vmatpush1.msra.mxu0 %v1590
      %1623 = vmatprep.subr.mxu0 0.0
      %1624 = vmatpush1.msra.mxu0 0.0
      %1625 = vmatprep.subr.mxu0 0.0
      %1626 = vmatpush1.msra.mxu0 0.0
      %1627 = vmatprep.subr.mxu0 0.0
      %1628 = vmatpush1.msra.mxu0 0.0
      %1629 = vmatprep.subr.mxu0 0.0
      %1630 = vmatpush1.msra.mxu0 0.0
      %1631 = vmatprep.subr.mxu0 0.0
      %1632 = vmatpush1.msra.mxu0 0.0
      %1633 = vmatprep.subr.mxu0 0.0
      %1634 = vmatpush1.msra.mxu0 0.0
      %1635 = vmatprep.subr.mxu0 0.0
      %1636 = vmatpush1.msra.mxu0 0.0
      %1637 = vmatprep.subr.mxu0 0.0
      %1638 = vmatpush1.msra.mxu0 0.0
      %1639 = vmatprep.subr.mxu0 0.0
      %1640 = vmatpush1.msra.mxu0 0.0
      %1641 = vmatprep.subr.mxu0 0.0
      %1642 = vmatpush1.msra.mxu0 0.0
      %1643 = vmatprep.subr.mxu0 0.0
      %1644 = vmatpush1.msra.mxu0 0.0
      %1645 = vmatprep.subr.mxu0 0.0
      %1646 = vmatpush1.msra.mxu0 0.0
      %1647 = vmatprep.subr.mxu0 0.0
      %1648 = vmatpush1.msra.mxu0 0.0
      %1649 = vmatprep.subr.mxu0 0.0
      %1650 = vmatpush1.msra.mxu0 0.0
      %1651 = vmatprep.subr.mxu0 0.0
      %1652 = vmatpush1.msra.mxu0 0.0
      %1653 = vmatprep.subr.mxu0 0.0
      %1654 = vmatpush1.msra.mxu0 0.0
      %1655 = vmatprep.mubr.f32.mxu0 0.0
      %1656 = vmatmul.mubr.f32.gmra.mrb[0].mxu0 %v1571
      %v1657 = vpop.f32.mrb[0].mxu0
      %v1658 = vadd.f32 0.0, %v1657
      %v1659 = vpop.f32.mrb[0].mxu0
      %1660 = vdwg.mxu0
      %1661 = vmatprep.subr.mxu0 0.0
      %1662 = vmatpush1.msra.mxu0 %v1483
      %1663 = vmatprep.subr.mxu0 0.0
      %1664 = vmatpush1.msra.mxu0 %v1484
      %1665 = vmatprep.subr.mxu0 0.0
      %1666 = vmatpush1.msra.mxu0 %v1485
      %1667 = vmatprep.subr.mxu0 0.0
      %1668 = vmatpush1.msra.mxu0 %v1486
      %1669 = vmatprep.subr.mxu0 0.0
      %1670 = vmatpush1.msra.mxu0 %v1487
      %1671 = vmatprep.subr.mxu0 0.0
      %1672 = vmatpush1.msra.mxu0 %v1488
      %1673 = vmatprep.subr.mxu0 0.0
      %1674 = vmatpush1.msra.mxu0 %v1489
      %1675 = vmatprep.subr.mxu0 0.0
      %1676 = vmatpush1.msra.mxu0 %v1490
      %1677 = vmatprep.subr.mxu0 0.0
      %1678 = vmatpush1.msra.mxu0 %v1491
      %1679 = vmatprep.subr.mxu0 0.0
      %1680 = vmatpush1.msra.mxu0 %v1492
      %1681 = vmatprep.subr.mxu0 0.0
      %1682 = vmatpush1.msra.mxu0 %v1493
      %1683 = vmatprep.subr.mxu0 0.0
      %1684 = vmatpush1.msra.mxu0 %v1494
      %1685 = vmatprep.subr.mxu0 0.0
      %1686 = vmatpush1.msra.mxu0 %v1495
      %1687 = vmatprep.subr.mxu0 0.0
      %1688 = vmatpush1.msra.mxu0 %v1496
      %1689 = vmatprep.subr.mxu0 0.0
      %1690 = vmatpush1.msra.mxu0 %v1497
      %1691 = vmatprep.subr.mxu0 0.0
      %1692 = vmatpush1.msra.mxu0 %v1498
      %1693 = vmatprep.subr.mxu0 0.0
      %1694 = vmatpush1.msra.mxu0 0.0
      %1695 = vmatprep.subr.mxu0 0.0
      %1696 = vmatpush1.msra.mxu0 0.0
      %1697 = vmatprep.subr.mxu0 0.0
      %1698 = vmatpush1.msra.mxu0 0.0
      %1699 = vmatprep.subr.mxu0 0.0
      %1700 = vmatpush1.msra.mxu0 0.0
      %1701 = vmatprep.subr.mxu0 0.0
      %1702 = vmatpush1.msra.mxu0 0.0
      %1703 = vmatprep.subr.mxu0 0.0
      %1704 = vmatpush1.msra.mxu0 0.0
      %1705 = vmatprep.subr.mxu0 0.0
      %1706 = vmatpush1.msra.mxu0 0.0
      %1707 = vmatprep.subr.mxu0 0.0
      %1708 = vmatpush1.msra.mxu0 0.0
      %1709 = vmatprep.subr.mxu0 0.0
      %1710 = vmatpush1.msra.mxu0 0.0
      %1711 = vmatprep.subr.mxu0 0.0
      %1712 = vmatpush1.msra.mxu0 0.0
      %1713 = vmatprep.subr.mxu0 0.0
      %1714 = vmatpush1.msra.mxu0 0.0
      %1715 = vmatprep.subr.mxu0 0.0
      %1716 = vmatpush1.msra.mxu0 0.0
      %1717 = vmatprep.subr.mxu0 0.0
      %1718 = vmatpush1.msra.mxu0 0.0
      %1719 = vmatprep.subr.mxu0 0.0
      %1720 = vmatpush1.msra.mxu0 0.0
      %1721 = vmatprep.subr.mxu0 0.0
      %1722 = vmatpush1.msra.mxu0 0.0
      %1723 = vmatprep.subr.mxu0 0.0
      %1724 = vmatpush1.msra.mxu0 0.0
      %1725 = vmatprep.mubr.f32.mxu0 0.0
      %1726 = vmatmul.mubr.f32.gmra.mrb[0].mxu0 %v1480
      %v1727 = vpop.f32.mrb[0].mxu0
      %v1728 = vadd.f32 %v1658, %v1727
      %v1729 = vpop.f32.mrb[0].mxu0
      %1730 = vdwg.mxu0
      %s1731 = scalar_lea.vmem %s6, 8
      %v1732 = vld [vmem:[%s1731] sm:$0xf]
      %v1734 = vsel %vm1405, %v1732, 0
      %1736 = vmatprep.subr.mxu0 0.0
      %1737 = vmatpush1.msra.mxu0 %v1411
      %1738 = vmatprep.subr.mxu0 0.0
      %1739 = vmatpush1.msra.mxu0 0.0
      %1740 = vmatprep.subr.mxu0 0.0
      %1741 = vmatpush1.msra.mxu0 0.0
      %1742 = vmatprep.subr.mxu0 0.0
      %1743 = vmatpush1.msra.mxu0 0.0
      %1744 = vmatprep.subr.mxu0 0.0
      %1745 = vmatpush1.msra.mxu0 0.0
      %1746 = vmatprep.subr.mxu0 0.0
      %1747 = vmatpush1.msra.mxu0 0.0
      %1748 = vmatprep.subr.mxu0 0.0
      %1749 = vmatpush1.msra.mxu0 0.0
      %1750 = vmatprep.subr.mxu0 0.0
      %1751 = vmatpush1.msra.mxu0 0.0
      %1752 = vmatprep.subr.mxu0 0.0
      %1753 = vmatpush1.msra.mxu0 0.0
      %1754 = vmatprep.subr.mxu0 0.0
      %1755 = vmatpush1.msra.mxu0 0.0
      %1756 = vmatprep.subr.mxu0 0.0
      %1757 = vmatpush1.msra.mxu0 0.0
      %1758 = vmatprep.subr.mxu0 0.0
      %1759 = vmatpush1.msra.mxu0 0.0
      %1760 = vmatprep.subr.mxu0 0.0
      %1761 = vmatpush1.msra.mxu0 0.0
      %1762 = vmatprep.subr.mxu0 0.0
      %1763 = vmatpush1.msra.mxu0 0.0
      %1764 = vmatprep.subr.mxu0 0.0
      %1765 = vmatpush1.msra.mxu0 0.0
      %1766 = vmatprep.subr.mxu0 0.0
      %1767 = vmatpush1.msra.mxu0 0.0
      %1768 = vmatprep.subr.mxu0 0.0
      %1769 = vmatpush1.msra.mxu0 0.0
      %1770 = vmatprep.subr.mxu0 0.0
      %1771 = vmatpush1.msra.mxu0 0.0
      %1772 = vmatprep.subr.mxu0 0.0
      %1773 = vmatpush1.msra.mxu0 0.0
      %1774 = vmatprep.subr.mxu0 0.0
      %1775 = vmatpush1.msra.mxu0 0.0
      %1776 = vmatprep.subr.mxu0 0.0
      %1777 = vmatpush1.msra.mxu0 0.0
      %1778 = vmatprep.subr.mxu0 0.0
      %1779 = vmatpush1.msra.mxu0 0.0
      %1780 = vmatprep.subr.mxu0 0.0
      %1781 = vmatpush1.msra.mxu0 0.0
      %1782 = vmatprep.subr.mxu0 0.0
      %1783 = vmatpush1.msra.mxu0 0.0
      %1784 = vmatprep.subr.mxu0 0.0
      %1785 = vmatpush1.msra.mxu0 0.0
      %1786 = vmatprep.subr.mxu0 0.0
      %1787 = vmatpush1.msra.mxu0 0.0
      %1788 = vmatprep.subr.mxu0 0.0
      %1789 = vmatpush1.msra.mxu0 0.0
      %1790 = vmatprep.subr.mxu0 0.0
      %1791 = vmatpush1.msra.mxu0 0.0
      %1792 = vmatprep.subr.mxu0 0.0
      %1793 = vmatpush1.msra.mxu0 0.0
      %1794 = vmatprep.subr.mxu0 0.0
      %1795 = vmatpush1.msra.mxu0 0.0
      %1796 = vmatprep.subr.mxu0 0.0
      %1797 = vmatpush1.msra.mxu0 0.0
      %1798 = vmatprep.subr.mxu0 0.0
      %1799 = vmatpush1.msra.mxu0 0.0
      %1800 = vmatprep.mubr.f32.mxu0 0.0
      %1801 = vmatmul.mubr.f32.gmra.mrb[0].mxu0 %v1734
      %v1802 = vpop.f32.mrb[0].mxu0
      %v1803 = vadd.f32 0.0, %v1802
      %v1804 = vpop.f32.mrb[0].mxu0
      %1805 = vdwg.mxu0
      %s1806 = scalar_lea.vmem %s7, 256
      %v1807 = vld [vmem:[%s1806] sm:$0xff]
      %v1808 = vld [vmem:[%s1806 + $0x8] sm:$0xff]
      %v1809 = vld [vmem:[%s1806 + $0x10] sm:$0xff]
      %v1810 = vld [vmem:[%s1806 + $0x18] sm:$0xff]
      %v1811 = vld [vmem:[%s1806 + $0x20] sm:$0xff]
      %v1812 = vld [vmem:[%s1806 + $0x28] sm:$0xff]
      %v1813 = vld [vmem:[%s1806 + $0x30] sm:$0xff]
      %v1814 = vld [vmem:[%s1806 + $0x38] sm:$0xff]
      %v1815 = vld [vmem:[%s1806 + $0x40] sm:$0xff]
      %v1816 = vld [vmem:[%s1806 + $0x48] sm:$0xff]
      %v1817 = vld [vmem:[%s1806 + $0x50] sm:$0xff]
      %v1818 = vld [vmem:[%s1806 + $0x58] sm:$0xff]
      %v1819 = vld [vmem:[%s1806 + $0x60] sm:$0xff]
      %v1820 = vld [vmem:[%s1806 + $0x68] sm:$0xff]
      %v1821 = vld [vmem:[%s1806 + $0x70] sm:$0xff]
      %v1822 = vld [vmem:[%s1806 + $0x78] sm:$0xff]
      %1823 = vmatprep.subr.mxu0 0.0
      %1824 = vmatpush1.msra.mxu0 %v1807
      %1825 = vmatprep.subr.mxu0 0.0
      %1826 = vmatpush1.msra.mxu0 %v1808
      %1827 = vmatprep.subr.mxu0 0.0
      %1828 = vmatpush1.msra.mxu0 %v1809
      %1829 = vmatprep.subr.mxu0 0.0
      %1830 = vmatpush1.msra.mxu0 %v1810
      %1831 = vmatprep.subr.mxu0 0.0
      %1832 = vmatpush1.msra.mxu0 %v1811
      %1833 = vmatprep.subr.mxu0 0.0
      %1834 = vmatpush1.msra.mxu0 %v1812
      %1835 = vmatprep.subr.mxu0 0.0
      %1836 = vmatpush1.msra.mxu0 %v1813
      %1837 = vmatprep.subr.mxu0 0.0
      %1838 = vmatpush1.msra.mxu0 %v1814
      %1839 = vmatprep.subr.mxu0 0.0
      %1840 = vmatpush1.msra.mxu0 %v1815
      %1841 = vmatprep.subr.mxu0 0.0
      %1842 = vmatpush1.msra.mxu0 %v1816
      %1843 = vmatprep.subr.mxu0 0.0
      %1844 = vmatpush1.msra.mxu0 %v1817
      %1845 = vmatprep.subr.mxu0 0.0
      %1846 = vmatpush1.msra.mxu0 %v1818
      %1847 = vmatprep.subr.mxu0 0.0
      %1848 = vmatpush1.msra.mxu0 %v1819
      %1849 = vmatprep.subr.mxu0 0.0
      %1850 = vmatpush1.msra.mxu0 %v1820
      %1851 = vmatprep.subr.mxu0 0.0
      %1852 = vmatpush1.msra.mxu0 %v1821
      %1853 = vmatprep.subr.mxu0 0.0
      %1854 = vmatpush1.msra.mxu0 %v1822
      %1855 = vmatprep.subr.mxu0 0.0
      %1856 = vmatpush1.msra.mxu0 0.0
      %1857 = vmatprep.subr.mxu0 0.0
      %1858 = vmatpush1.msra.mxu0 0.0
      %1859 = vmatprep.subr.mxu0 0.0
      %1860 = vmatpush1.msra.mxu0 0.0
      %1861 = vmatprep.subr.mxu0 0.0
      %1862 = vmatpush1.msra.mxu0 0.0
      %1863 = vmatprep.subr.mxu0 0.0
      %1864 = vmatpush1.msra.mxu0 0.0
      %1865 = vmatprep.subr.mxu0 0.0
      %1866 = vmatpush1.msra.mxu0 0.0
      %1867 = vmatprep.subr.mxu0 0.0
      %1868 = vmatpush1.msra.mxu0 0.0
      %1869 = vmatprep.subr.mxu0 0.0
      %1870 = vmatpush1.msra.mxu0 0.0
      %1871 = vmatprep.subr.mxu0 0.0
      %1872 = vmatpush1.msra.mxu0 0.0
      %1873 = vmatprep.subr.mxu0 0.0
      %1874 = vmatpush1.msra.mxu0 0.0
      %1875 = vmatprep.subr.mxu0 0.0
      %1876 = vmatpush1.msra.mxu0 0.0
      %1877 = vmatprep.subr.mxu0 0.0
      %1878 = vmatpush1.msra.mxu0 0.0
      %1879 = vmatprep.subr.mxu0 0.0
      %1880 = vmatpush1.msra.mxu0 0.0
      %1881 = vmatprep.subr.mxu0 0.0
      %1882 = vmatpush1.msra.mxu0 0.0
      %1883 = vmatprep.subr.mxu0 0.0
      %1884 = vmatpush1.msra.mxu0 0.0
      %1885 = vmatprep.subr.mxu0 0.0
      %1886 = vmatpush1.msra.mxu0 0.0
      %1887 = vmatprep.mubr.f32.mxu0 0.0
      %1888 = vmatmul.mubr.f32.gmra.mrb[0].mxu0 %v1803
      %v1889 = vpop.f32.mrb[0].mxu0
      %v1890 = vadd.f32 0.0, %v1889
      %v1891 = vpop.f32.mrb[0].mxu0
      %1892 = vdwg.mxu0
      %v1893 = vadd.f32 %v1728, %v1890
      %v1894 = vld [vmem:[%s8] sm:$0x1]
      %v1896 = vlaneseq
      %v1897 = vshrl.u32 %v1896, 7
      %v1898 = vsub.s32 0, %v1897
      %v1899 = vrot.slane %v1894, %v1898
      %v1901 = vadd.f32 %v1893, %v1899
      %v1902 = vmax.f32 %v1901, 0.0
      %v1904 = vsel %vm1409, %v1902, 0
      %1906 = vmatprep.subr.mxu0 0.0
      %1907 = vmatpush1.msra.mxu0 %v1904
      %1908 = vmatprep.subr.mxu0 0.0
      %1909 = vmatpush1.msra.mxu0 0.0
      %1910 = vmatprep.subr.mxu0 0.0
      %1911 = vmatpush1.msra.mxu0 0.0
      %1912 = vmatprep.subr.mxu0 0.0
      %1913 = vmatpush1.msra.mxu0 0.0
      %1914 = vmatprep.subr.mxu0 0.0
      %1915 = vmatpush1.msra.mxu0 0.0
      %1916 = vmatprep.subr.mxu0 0.0
      %1917 = vmatpush1.msra.mxu0 0.0
      %1918 = vmatprep.subr.mxu0 0.0
      %1919 = vmatpush1.msra.mxu0 0.0
      %1920 = vmatprep.subr.mxu0 0.0
      %1921 = vmatpush1.msra.mxu0 0.0
      %1922 = vmatprep.subr.mxu0 0.0
      %1923 = vmatpush1.msra.mxu0 0.0
      %1924 = vmatprep.subr.mxu0 0.0
      %1925 = vmatpush1.msra.mxu0 0.0
      %1926 = vmatprep.subr.mxu0 0.0
      %1927 = vmatpush1.msra.mxu0 0.0
      %1928 = vmatprep.subr.mxu0 0.0
      %1929 = vmatpush1.msra.mxu0 0.0
      %1930 = vmatprep.subr.mxu0 0.0
      %1931 = vmatpush1.msra.mxu0 0.0
      %1932 = vmatprep.subr.mxu0 0.0
      %1933 = vmatpush1.msra.mxu0 0.0
      %1934 = vmatprep.subr.mxu0 0.0
      %1935 = vmatpush1.msra.mxu0 0.0
      %1936 = vmatprep.subr.mxu0 0.0
      %1937 = vmatpush1.msra.mxu0 0.0
      %1938 = vmatprep.subr.mxu0 0.0
      %1939 = vmatpush1.msra.mxu0 0.0
      %1940 = vmatprep.subr.mxu0 0.0
      %1941 = vmatpush1.msra.mxu0 0.0
      %1942 = vmatprep.subr.mxu0 0.0
      %1943 = vmatpush1.msra.mxu0 0.0
      %1944 = vmatprep.subr.mxu0 0.0
      %1945 = vmatpush1.msra.mxu0 0.0
      %1946 = vmatprep.subr.mxu0 0.0
      %1947 = vmatpush1.msra.mxu0 0.0
      %1948 = vmatprep.subr.mxu0 0.0
      %1949 = vmatpush1.msra.mxu0 0.0
      %1950 = vmatprep.subr.mxu0 0.0
      %1951 = vmatpush1.msra.mxu0 0.0
      %1952 = vmatprep.subr.mxu0 0.0
      %1953 = vmatpush1.msra.mxu0 0.0
      %1954 = vmatprep.subr.mxu0 0.0
      %1955 = vmatpush1.msra.mxu0 0.0
      %1956 = vmatprep.subr.mxu0 0.0
      %1957 = vmatpush1.msra.mxu0 0.0
      %1958 = vmatprep.subr.mxu0 0.0
      %1959 = vmatpush1.msra.mxu0 0.0
      %1960 = vmatprep.subr.mxu0 0.0
      %1961 = vmatpush1.msra.mxu0 0.0
      %1962 = vmatprep.subr.mxu0 0.0
      %1963 = vmatpush1.msra.mxu0 0.0
      %1964 = vmatprep.subr.mxu0 0.0
      %1965 = vmatpush1.msra.mxu0 0.0
      %1966 = vmatprep.subr.mxu0 0.0
      %1967 = vmatpush1.msra.mxu0 0.0
      %1968 = vmatprep.subr.mxu0 0.0
      %1969 = vmatpush1.msra.mxu0 0.0
      %1970 = vmatprep.mubr.f32.mxu0 0.0
      %1971 = vmatmul.mubr.f32.gmra.mrb[0].mxu0 %v1407
      %v1972 = vpop.f32.mrb[0].mxu0
      %v1973 = vadd.f32 0.0, %v1972
      %v1974 = vpop.f32.mrb[0].mxu0
      %1975 = vdwg.mxu0
      %v1976 = vld [vmem:[%s9] sm:$0xff]
      %v1977 = vld [vmem:[%s9 + $0x8] sm:$0xff]
      %v1978 = vld [vmem:[%s9 + $0x10] sm:$0xff]
      %v1979 = vld [vmem:[%s9 + $0x18] sm:$0xff]
      %v1980 = vld [vmem:[%s9 + $0x20] sm:$0xff]
      %v1981 = vld [vmem:[%s9 + $0x28] sm:$0xff]
      %v1982 = vld [vmem:[%s9 + $0x30] sm:$0xff]
      %v1983 = vld [vmem:[%s9 + $0x38] sm:$0xff]
      %v1984 = vld [vmem:[%s9 + $0x40] sm:$0xff]
      %v1985 = vld [vmem:[%s9 + $0x48] sm:$0xff]
      %v1986 = vld [vmem:[%s9 + $0x50] sm:$0xff]
      %v1987 = vld [vmem:[%s9 + $0x58] sm:$0xff]
      %v1988 = vld [vmem:[%s9 + $0x60] sm:$0xff]
      %v1989 = vld [vmem:[%s9 + $0x68] sm:$0xff]
      %v1990 = vld [vmem:[%s9 + $0x70] sm:$0xff]
      %v1991 = vld [vmem:[%s9 + $0x78] sm:$0xff]
      %1992 = vmatprep.subr.mxu0 0.0
      %1993 = vmatpush1.msra.mxu0 %v1904
      %1994 = vmatprep.subr.mxu0 0.0
      %1995 = vmatpush1.msra.mxu0 0.0
      %1996 = vmatprep.subr.mxu0 0.0
      %1997 = vmatpush1.msra.mxu0 0.0
      %1998 = vmatprep.subr.mxu0 0.0
      %1999 = vmatpush1.msra.mxu0 0.0
      %2000 = vmatprep.subr.mxu0 0.0
      %2001 = vmatpush1.msra.mxu0 0.0
      %2002 = vmatprep.subr.mxu0 0.0
      %2003 = vmatpush1.msra.mxu0 0.0
      %2004 = vmatprep.subr.mxu0 0.0
      %2005 = vmatpush1.msra.mxu0 0.0
      %2006 = vmatprep.subr.mxu0 0.0
      %2007 = vmatpush1.msra.mxu0 0.0
      %2008 = vmatprep.subr.mxu0 0.0
      %2009 = vmatpush1.msra.mxu0 0.0
      %2010 = vmatprep.subr.mxu0 0.0
      %2011 = vmatpush1.msra.mxu0 0.0
      %2012 = vmatprep.subr.mxu0 0.0
      %2013 = vmatpush1.msra.mxu0 0.0
      %2014 = vmatprep.subr.mxu0 0.0
      %2015 = vmatpush1.msra.mxu0 0.0
      %2016 = vmatprep.subr.mxu0 0.0
      %2017 = vmatpush1.msra.mxu0 0.0
      %2018 = vmatprep.subr.mxu0 0.0
      %2019 = vmatpush1.msra.mxu0 0.0
      %2020 = vmatprep.subr.mxu0 0.0
      %2021 = vmatpush1.msra.mxu0 0.0
      %2022 = vmatprep.subr.mxu0 0.0
      %2023 = vmatpush1.msra.mxu0 0.0
      %2024 = vmatprep.subr.mxu0 0.0
      %2025 = vmatpush1.msra.mxu0 0.0
      %2026 = vmatprep.subr.mxu0 0.0
      %2027 = vmatpush1.msra.mxu0 0.0
      %2028 = vmatprep.subr.mxu0 0.0
      %2029 = vmatpush1.msra.mxu0 0.0
      %2030 = vmatprep.subr.mxu0 0.0
      %2031 = vmatpush1.msra.mxu0 0.0
      %2032 = vmatprep.subr.mxu0 0.0
      %2033 = vmatpush1.msra.mxu0 0.0
      %2034 = vmatprep.subr.mxu0 0.0
      %2035 = vmatpush1.msra.mxu0 0.0
      %2036 = vmatprep.subr.mxu0 0.0
      %2037 = vmatpush1.msra.mxu0 0.0
      %2038 = vmatprep.subr.mxu0 0.0
      %2039 = vmatpush1.msra.mxu0 0.0
      %2040 = vmatprep.subr.mxu0 0.0
      %2041 = vmatpush1.msra.mxu0 0.0
      %2042 = vmatprep.subr.mxu0 0.0
      %2043 = vmatpush1.msra.mxu0 0.0
      %2044 = vmatprep.subr.mxu0 0.0
      %2045 = vmatpush1.msra.mxu0 0.0
      %2046 = vmatprep.subr.mxu0 0.0
      %2047 = vmatpush1.msra.mxu0 0.0
      %2048 = vmatprep.subr.mxu0 0.0
      %2049 = vmatpush1.msra.mxu0 0.0
      %2050 = vmatprep.subr.mxu0 0.0
      %2051 = vmatpush1.msra.mxu0 0.0
      %2052 = vmatprep.subr.mxu0 0.0
      %2053 = vmatpush1.msra.mxu0 0.0
      %2054 = vmatprep.subr.mxu0 0.0
      %2055 = vmatpush1.msra.mxu0 0.0
      %2056 = vmatprep.mubr.f32.mxu0 0.0
      %2057 = vmatmul.mubr.f32.gmra.mrb[0].mxu0 %v1502
      %v2058 = vpop.f32.mrb[0].mxu0
      %v2059 = vadd.f32 0.0, %v2058
      %v2060 = vpop.f32.mrb[0].mxu0
      %2061 = vdwg.mxu0
      %s2062 = scalar_lea.vmem %s9, 128
      %v2063 = vld [vmem:[%s2062] sm:$0xff]
      %v2064 = vld [vmem:[%s2062 + $0x8] sm:$0xff]
      %v2065 = vld [vmem:[%s2062 + $0x10] sm:$0xff]
      %v2066 = vld [vmem:[%s2062 + $0x18] sm:$0xff]
      %v2067 = vld [vmem:[%s2062 + $0x20] sm:$0xff]
      %v2068 = vld [vmem:[%s2062 + $0x28] sm:$0xff]
      %v2069 = vld [vmem:[%s2062 + $0x30] sm:$0xff]
      %v2070 = vld [vmem:[%s2062 + $0x38] sm:$0xff]
      %v2071 = vld [vmem:[%s2062 + $0x40] sm:$0xff]
      %v2072 = vld [vmem:[%s2062 + $0x48] sm:$0xff]
      %v2073 = vld [vmem:[%s2062 + $0x50] sm:$0xff]
      %v2074 = vld [vmem:[%s2062 + $0x58] sm:$0xff]
      %v2075 = vld [vmem:[%s2062 + $0x60] sm:$0xff]
      %v2076 = vld [vmem:[%s2062 + $0x68] sm:$0xff]
      %v2077 = vld [vmem:[%s2062 + $0x70] sm:$0xff]
      %v2078 = vld [vmem:[%s2062 + $0x78] sm:$0xff]
      %2079 = vmatprep.subr.mxu0 0.0
      %2080 = vmatpush1.msra.mxu0 %v2063
      %2081 = vmatprep.subr.mxu0 0.0
      %2082 = vmatpush1.msra.mxu0 %v2064
      %2083 = vmatprep.subr.mxu0 0.0
      %2084 = vmatpush1.msra.mxu0 %v2065
      %2085 = vmatprep.subr.mxu0 0.0
      %2086 = vmatpush1.msra.mxu0 %v2066
      %2087 = vmatprep.subr.mxu0 0.0
      %2088 = vmatpush1.msra.mxu0 %v2067
      %2089 = vmatprep.subr.mxu0 0.0
      %2090 = vmatpush1.msra.mxu0 %v2068
      %2091 = vmatprep.subr.mxu0 0.0
      %2092 = vmatpush1.msra.mxu0 %v2069
      %2093 = vmatprep.subr.mxu0 0.0
      %2094 = vmatpush1.msra.mxu0 %v2070
      %2095 = vmatprep.subr.mxu0 0.0
      %2096 = vmatpush1.msra.mxu0 %v2071
      %2097 = vmatprep.subr.mxu0 0.0
      %2098 = vmatpush1.msra.mxu0 %v2072
      %2099 = vmatprep.subr.mxu0 0.0
      %2100 = vmatpush1.msra.mxu0 %v2073
      %2101 = vmatprep.subr.mxu0 0.0
      %2102 = vmatpush1.msra.mxu0 %v2074
      %2103 = vmatprep.subr.mxu0 0.0
      %2104 = vmatpush1.msra.mxu0 %v2075
      %2105 = vmatprep.subr.mxu0 0.0
      %2106 = vmatpush1.msra.mxu0 %v2076
      %2107 = vmatprep.subr.mxu0 0.0
      %2108 = vmatpush1.msra.mxu0 %v2077
      %2109 = vmatprep.subr.mxu0 0.0
      %2110 = vmatpush1.msra.mxu0 %v2078
      %2111 = vmatprep.subr.mxu0 0.0
      %2112 = vmatpush1.msra.mxu0 0.0
      %2113 = vmatprep.subr.mxu0 0.0
      %2114 = vmatpush1.msra.mxu0 0.0
      %2115 = vmatprep.subr.mxu0 0.0
      %2116 = vmatpush1.msra.mxu0 0.0
      %2117 = vmatprep.subr.mxu0 0.0
      %2118 = vmatpush1.msra.mxu0 0.0
      %2119 = vmatprep.subr.mxu0 0.0
      %2120 = vmatpush1.msra.mxu0 0.0
      %2121 = vmatprep.subr.mxu0 0.0
      %2122 = vmatpush1.msra.mxu0 0.0
      %2123 = vmatprep.subr.mxu0 0.0
      %2124 = vmatpush1.msra.mxu0 0.0
      %2125 = vmatprep.subr.mxu0 0.0
      %2126 = vmatpush1.msra.mxu0 0.0
      %2127 = vmatprep.subr.mxu0 0.0
      %2128 = vmatpush1.msra.mxu0 0.0
      %2129 = vmatprep.subr.mxu0 0.0
      %2130 = vmatpush1.msra.mxu0 0.0
      %2131 = vmatprep.subr.mxu0 0.0
      %2132 = vmatpush1.msra.mxu0 0.0
      %2133 = vmatprep.subr.mxu0 0.0
      %2134 = vmatpush1.msra.mxu0 0.0
      %2135 = vmatprep.subr.mxu0 0.0
      %2136 = vmatpush1.msra.mxu0 0.0
      %2137 = vmatprep.subr.mxu0 0.0
      %2138 = vmatpush1.msra.mxu0 0.0
      %2139 = vmatprep.subr.mxu0 0.0
      %2140 = vmatpush1.msra.mxu0 0.0
      %2141 = vmatprep.subr.mxu0 0.0
      %2142 = vmatpush1.msra.mxu0 0.0
      %2143 = vmatprep.mubr.f32.mxu0 0.0
      %2144 = vmatmul.mubr.f32.gmra.mrb[0].mxu0 %v2059
      %v2145 = vpop.f32.mrb[0].mxu0
      %v2146 = vadd.f32 0.0, %v2145
      %v2147 = vpop.f32.mrb[0].mxu0
      %2148 = vdwg.mxu0
      %2149 = vmatprep.subr.mxu0 0.0
      %2150 = vmatpush1.msra.mxu0 %v1976
      %2151 = vmatprep.subr.mxu0 0.0
      %2152 = vmatpush1.msra.mxu0 %v1977
      %2153 = vmatprep.subr.mxu0 0.0
      %2154 = vmatpush1.msra.mxu0 %v1978
      %2155 = vmatprep.subr.mxu0 0.0
      %2156 = vmatpush1.msra.mxu0 %v1979
      %2157 = vmatprep.subr.mxu0 0.0
      %2158 = vmatpush1.msra.mxu0 %v1980
      %2159 = vmatprep.subr.mxu0 0.0
      %2160 = vmatpush1.msra.mxu0 %v1981
      %2161 = vmatprep.subr.mxu0 0.0
      %2162 = vmatpush1.msra.mxu0 %v1982
      %2163 = vmatprep.subr.mxu0 0.0
      %2164 = vmatpush1.msra.mxu0 %v1983
      %2165 = vmatprep.subr.mxu0 0.0
      %2166 = vmatpush1.msra.mxu0 %v1984
      %2167 = vmatprep.subr.mxu0 0.0
      %2168 = vmatpush1.msra.mxu0 %v1985
      %2169 = vmatprep.subr.mxu0 0.0
      %2170 = vmatpush1.msra.mxu0 %v1986
      %2171 = vmatprep.subr.mxu0 0.0
      %2172 = vmatpush1.msra.mxu0 %v1987
      %2173 = vmatprep.subr.mxu0 0.0
      %2174 = vmatpush1.msra.mxu0 %v1988
      %2175 = vmatprep.subr.mxu0 0.0
      %2176 = vmatpush1.msra.mxu0 %v1989
      %2177 = vmatprep.subr.mxu0 0.0
      %2178 = vmatpush1.msra.mxu0 %v1990
      %2179 = vmatprep.subr.mxu0 0.0
      %2180 = vmatpush1.msra.mxu0 %v1991
      %2181 = vmatprep.subr.mxu0 0.0
      %2182 = vmatpush1.msra.mxu0 0.0
      %2183 = vmatprep.subr.mxu0 0.0
      %2184 = vmatpush1.msra.mxu0 0.0
      %2185 = vmatprep.subr.mxu0 0.0
      %2186 = vmatpush1.msra.mxu0 0.0
      %2187 = vmatprep.subr.mxu0 0.0
      %2188 = vmatpush1.msra.mxu0 0.0
      %2189 = vmatprep.subr.mxu0 0.0
      %2190 = vmatpush1.msra.mxu0 0.0
      %2191 = vmatprep.subr.mxu0 0.0
      %2192 = vmatpush1.msra.mxu0 0.0
      %2193 = vmatprep.subr.mxu0 0.0
      %2194 = vmatpush1.msra.mxu0 0.0
      %2195 = vmatprep.subr.mxu0 0.0
      %2196 = vmatpush1.msra.mxu0 0.0
      %2197 = vmatprep.subr.mxu0 0.0
      %2198 = vmatpush1.msra.mxu0 0.0
      %2199 = vmatprep.subr.mxu0 0.0
      %2200 = vmatpush1.msra.mxu0 0.0
      %2201 = vmatprep.subr.mxu0 0.0
      %2202 = vmatpush1.msra.mxu0 0.0
      %2203 = vmatprep.subr.mxu0 0.0
      %2204 = vmatpush1.msra.mxu0 0.0
      %2205 = vmatprep.subr.mxu0 0.0
      %2206 = vmatpush1.msra.mxu0 0.0
      %2207 = vmatprep.subr.mxu0 0.0
      %2208 = vmatpush1.msra.mxu0 0.0
      %2209 = vmatprep.subr.mxu0 0.0
      %2210 = vmatpush1.msra.mxu0 0.0
      %2211 = vmatprep.subr.mxu0 0.0
      %2212 = vmatpush1.msra.mxu0 0.0
      %2213 = vmatprep.mubr.f32.mxu0 0.0
      %2214 = vmatmul.mubr.f32.gmra.mrb[0].mxu0 %v1973
      %v2215 = vpop.f32.mrb[0].mxu0
      %v2216 = vadd.f32 %v2146, %v2215
      %v2217 = vpop.f32.mrb[0].mxu0
      %2218 = vdwg.mxu0
      %2219 = vmatprep.subr.mxu0 0.0
      %2220 = vmatpush1.msra.mxu0 %v1904
      %2221 = vmatprep.subr.mxu0 0.0
      %2222 = vmatpush1.msra.mxu0 0.0
      %2223 = vmatprep.subr.mxu0 0.0
      %2224 = vmatpush1.msra.mxu0 0.0
      %2225 = vmatprep.subr.mxu0 0.0
      %2226 = vmatpush1.msra.mxu0 0.0
      %2227 = vmatprep.subr.mxu0 0.0
      %2228 = vmatpush1.msra.mxu0 0.0
      %2229 = vmatprep.subr.mxu0 0.0
      %2230 = vmatpush1.msra.mxu0 0.0
      %2231 = vmatprep.subr.mxu0 0.0
      %2232 = vmatpush1.msra.mxu0 0.0
      %2233 = vmatprep.subr.mxu0 0.0
      %2234 = vmatpush1.msra.mxu0 0.0
      %2235 = vmatprep.subr.mxu0 0.0
      %2236 = vmatpush1.msra.mxu0 0.0
      %2237 = vmatprep.subr.mxu0 0.0
      %2238 = vmatpush1.msra.mxu0 0.0
      %2239 = vmatprep.subr.mxu0 0.0
      %2240 = vmatpush1.msra.mxu0 0.0
      %2241 = vmatprep.subr.mxu0 0.0
      %2242 = vmatpush1.msra.mxu0 0.0
      %2243 = vmatprep.subr.mxu0 0.0
      %2244 = vmatpush1.msra.mxu0 0.0
      %2245 = vmatprep.subr.mxu0 0.0
      %2246 = vmatpush1.msra.mxu0 0.0
      %2247 = vmatprep.subr.mxu0 0.0
      %2248 = vmatpush1.msra.mxu0 0.0
      %2249 = vmatprep.subr.mxu0 0.0
      %2250 = vmatpush1.msra.mxu0 0.0
      %2251 = vmatprep.subr.mxu0 0.0
      %2252 = vmatpush1.msra.mxu0 0.0
      %2253 = vmatprep.subr.mxu0 0.0
      %2254 = vmatpush1.msra.mxu0 0.0
      %2255 = vmatprep.subr.mxu0 0.0
      %2256 = vmatpush1.msra.mxu0 0.0
      %2257 = vmatprep.subr.mxu0 0.0
      %2258 = vmatpush1.msra.mxu0 0.0
      %2259 = vmatprep.subr.mxu0 0.0
      %2260 = vmatpush1.msra.mxu0 0.0
      %2261 = vmatprep.subr.mxu0 0.0
      %2262 = vmatpush1.msra.mxu0 0.0
      %2263 = vmatprep.subr.mxu0 0.0
      %2264 = vmatpush1.msra.mxu0 0.0
      %2265 = vmatprep.subr.mxu0 0.0
      %2266 = vmatpush1.msra.mxu0 0.0
      %2267 = vmatprep.subr.mxu0 0.0
      %2268 = vmatpush1.msra.mxu0 0.0
      %2269 = vmatprep.subr.mxu0 0.0
      %2270 = vmatpush1.msra.mxu0 0.0
      %2271 = vmatprep.subr.mxu0 0.0
      %2272 = vmatpush1.msra.mxu0 0.0
      %2273 = vmatprep.subr.mxu0 0.0
      %2274 = vmatpush1.msra.mxu0 0.0
      %2275 = vmatprep.subr.mxu0 0.0
      %2276 = vmatpush1.msra.mxu0 0.0
      %2277 = vmatprep.subr.mxu0 0.0
      %2278 = vmatpush1.msra.mxu0 0.0
      %2279 = vmatprep.subr.mxu0 0.0
      %2280 = vmatpush1.msra.mxu0 0.0
      %2281 = vmatprep.subr.mxu0 0.0
      %2282 = vmatpush1.msra.mxu0 0.0
      %2283 = vmatprep.mubr.f32.mxu0 0.0
      %2284 = vmatmul.mubr.f32.gmra.mrb[0].mxu0 %v1734
      %v2285 = vpop.f32.mrb[0].mxu0
      %v2286 = vadd.f32 0.0, %v2285
      %v2287 = vpop.f32.mrb[0].mxu0
      %2288 = vdwg.mxu0
      %s2289 = scalar_lea.vmem %s9, 256
      %v2290 = vld [vmem:[%s2289] sm:$0xff]
      %v2291 = vld [vmem:[%s2289 + $0x8] sm:$0xff]
      %v2292 = vld [vmem:[%s2289 + $0x10] sm:$0xff]
      %v2293 = vld [vmem:[%s2289 + $0x18] sm:$0xff]
      %v2294 = vld [vmem:[%s2289 + $0x20] sm:$0xff]
      %v2295 = vld [vmem:[%s2289 + $0x28] sm:$0xff]
      %v2296 = vld [vmem:[%s2289 + $0x30] sm:$0xff]
      %v2297 = vld [vmem:[%s2289 + $0x38] sm:$0xff]
      %v2298 = vld [vmem:[%s2289 + $0x40] sm:$0xff]
      %v2299 = vld [vmem:[%s2289 + $0x48] sm:$0xff]
      %v2300 = vld [vmem:[%s2289 + $0x50] sm:$0xff]
      %v2301 = vld [vmem:[%s2289 + $0x58] sm:$0xff]
      %v2302 = vld [vmem:[%s2289 + $0x60] sm:$0xff]
      %v2303 = vld [vmem:[%s2289 + $0x68] sm:$0xff]
      %v2304 = vld [vmem:[%s2289 + $0x70] sm:$0xff]
      %v2305 = vld [vmem:[%s2289 + $0x78] sm:$0xff]
      %2306 = vmatprep.subr.mxu0 0.0
      %2307 = vmatpush1.msra.mxu0 %v2290
      %2308 = vmatprep.subr.mxu0 0.0
      %2309 = vmatpush1.msra.mxu0 %v2291
      %2310 = vmatprep.subr.mxu0 0.0
      %2311 = vmatpush1.msra.mxu0 %v2292
      %2312 = vmatprep.subr.mxu0 0.0
      %2313 = vmatpush1.msra.mxu0 %v2293
      %2314 = vmatprep.subr.mxu0 0.0
      %2315 = vmatpush1.msra.mxu0 %v2294
      %2316 = vmatprep.subr.mxu0 0.0
      %2317 = vmatpush1.msra.mxu0 %v2295
      %2318 = vmatprep.subr.mxu0 0.0
      %2319 = vmatpush1.msra.mxu0 %v2296
      %2320 = vmatprep.subr.mxu0 0.0
      %2321 = vmatpush1.msra.mxu0 %v2297
      %2322 = vmatprep.subr.mxu0 0.0
      %2323 = vmatpush1.msra.mxu0 %v2298
      %2324 = vmatprep.subr.mxu0 0.0
      %2325 = vmatpush1.msra.mxu0 %v2299
      %2326 = vmatprep.subr.mxu0 0.0
      %2327 = vmatpush1.msra.mxu0 %v2300
      %2328 = vmatprep.subr.mxu0 0.0
      %2329 = vmatpush1.msra.mxu0 %v2301
      %2330 = vmatprep.subr.mxu0 0.0
      %2331 = vmatpush1.msra.mxu0 %v2302
      %2332 = vmatprep.subr.mxu0 0.0
      %2333 = vmatpush1.msra.mxu0 %v2303
      %2334 = vmatprep.subr.mxu0 0.0
      %2335 = vmatpush1.msra.mxu0 %v2304
      %2336 = vmatprep.subr.mxu0 0.0
      %2337 = vmatpush1.msra.mxu0 %v2305
      %2338 = vmatprep.subr.mxu0 0.0
      %2339 = vmatpush1.msra.mxu0 0.0
      %2340 = vmatprep.subr.mxu0 0.0
      %2341 = vmatpush1.msra.mxu0 0.0
      %2342 = vmatprep.subr.mxu0 0.0
      %2343 = vmatpush1.msra.mxu0 0.0
      %2344 = vmatprep.subr.mxu0 0.0
      %2345 = vmatpush1.msra.mxu0 0.0
      %2346 = vmatprep.subr.mxu0 0.0
      %2347 = vmatpush1.msra.mxu0 0.0
      %2348 = vmatprep.subr.mxu0 0.0
      %2349 = vmatpush1.msra.mxu0 0.0
      %2350 = vmatprep.subr.mxu0 0.0
      %2351 = vmatpush1.msra.mxu0 0.0
      %2352 = vmatprep.subr.mxu0 0.0
      %2353 = vmatpush1.msra.mxu0 0.0
      %2354 = vmatprep.subr.mxu0 0.0
      %2355 = vmatpush1.msra.mxu0 0.0
      %2356 = vmatprep.subr.mxu0 0.0
      %2357 = vmatpush1.msra.mxu0 0.0
      %2358 = vmatprep.subr.mxu0 0.0
      %2359 = vmatpush1.msra.mxu0 0.0
      %2360 = vmatprep.subr.mxu0 0.0
      %2361 = vmatpush1.msra.mxu0 0.0
      %2362 = vmatprep.subr.mxu0 0.0
      %2363 = vmatpush1.msra.mxu0 0.0
      %2364 = vmatprep.subr.mxu0 0.0
      %2365 = vmatpush1.msra.mxu0 0.0
      %2366 = vmatprep.subr.mxu0 0.0
      %2367 = vmatpush1.msra.mxu0 0.0
      %2368 = vmatprep.subr.mxu0 0.0
      %2369 = vmatpush1.msra.mxu0 0.0
      %2370 = vmatprep.mubr.f32.mxu0 0.0
      %2371 = vmatmul.mubr.f32.gmra.mrb[0].mxu0 %v2286
      %v2372 = vpop.f32.mrb[0].mxu0
      %v2373 = vadd.f32 0.0, %v2372
      %v2374 = vpop.f32.mrb[0].mxu0
      %2375 = vdwg.mxu0
      %v2376 = vadd.f32 %v2216, %v2373
      %v2377 = vld [vmem:[%s10] sm:$0x1]
      %v2379 = vlaneseq
      %v2380 = vshrl.u32 %v2379, 7
      %v2381 = vsub.s32 0, %v2380
      %v2382 = vrot.slane %v2377, %v2381
      %v2384 = vadd.f32 %v2376, %v2382
      %v2385 = vmax.f32 %v2384, 0.0
      %v2386 = vld [vmem:[%s11] sm:$0xff]
      %v2387 = vld [vmem:[%s11 + $0x8] sm:$0xff]
      %v2388 = vld [vmem:[%s11 + $0x10] sm:$0xff]
      %v2389 = vld [vmem:[%s11 + $0x18] sm:$0xff]
      %v2390 = vld [vmem:[%s12] sm:$0x1]
      %v2392 = vlaneseq
      %v2393 = vshrl.u32 %v2392, 7
      %v2394 = vsub.s32 0, %v2393
      %v2395 = vrot.slane %v2390, %v2394
      %vm2397 = vcmask 261120
      %v2399 = vsel %vm2397, %v2385, 0
      %2401 = vmatprep.subr.mxu0 0.0
      %2402 = vmatpush1.msra.mxu0 %v2386
      %2403 = vmatprep.subr.mxu0 0.0
      %2404 = vmatpush1.msra.mxu0 %v2387
      %2405 = vmatprep.subr.mxu0 0.0
      %2406 = vmatpush1.msra.mxu0 %v2388
      %2407 = vmatprep.subr.mxu0 0.0
      %2408 = vmatpush1.msra.mxu0 %v2389
      %2409 = vmatprep.subr.mxu0 0.0
      %2410 = vmatpush1.msra.mxu0 0.0
      %2411 = vmatprep.subr.mxu0 0.0
      %2412 = vmatpush1.msra.mxu0 0.0
      %2413 = vmatprep.subr.mxu0 0.0
      %2414 = vmatpush1.msra.mxu0 0.0
      %2415 = vmatprep.subr.mxu0 0.0
      %2416 = vmatpush1.msra.mxu0 0.0
      %2417 = vmatprep.subr.mxu0 0.0
      %2418 = vmatpush1.msra.mxu0 0.0
      %2419 = vmatprep.subr.mxu0 0.0
      %2420 = vmatpush1.msra.mxu0 0.0
      %2421 = vmatprep.subr.mxu0 0.0
      %2422 = vmatpush1.msra.mxu0 0.0
      %2423 = vmatprep.subr.mxu0 0.0
      %2424 = vmatpush1.msra.mxu0 0.0
      %2425 = vmatprep.subr.mxu0 0.0
      %2426 = vmatpush1.msra.mxu0 0.0
      %2427 = vmatprep.subr.mxu0 0.0
      %2428 = vmatpush1.msra.mxu0 0.0
      %2429 = vmatprep.subr.mxu0 0.0
      %2430 = vmatpush1.msra.mxu0 0.0
      %2431 = vmatprep.subr.mxu0 0.0
      %2432 = vmatpush1.msra.mxu0 0.0
      %2433 = vmatprep.subr.mxu0 0.0
      %2434 = vmatpush1.msra.mxu0 0.0
      %2435 = vmatprep.subr.mxu0 0.0
      %2436 = vmatpush1.msra.mxu0 0.0
      %2437 = vmatprep.subr.mxu0 0.0
      %2438 = vmatpush1.msra.mxu0 0.0
      %2439 = vmatprep.subr.mxu0 0.0
      %2440 = vmatpush1.msra.mxu0 0.0
      %2441 = vmatprep.subr.mxu0 0.0
      %2442 = vmatpush1.msra.mxu0 0.0
      %2443 = vmatprep.subr.mxu0 0.0
      %2444 = vmatpush1.msra.mxu0 0.0
      %2445 = vmatprep.subr.mxu0 0.0
      %2446 = vmatpush1.msra.mxu0 0.0
      %2447 = vmatprep.subr.mxu0 0.0
      %2448 = vmatpush1.msra.mxu0 0.0
      %2449 = vmatprep.subr.mxu0 0.0
      %2450 = vmatpush1.msra.mxu0 0.0
      %2451 = vmatprep.subr.mxu0 0.0
      %2452 = vmatpush1.msra.mxu0 0.0
      %2453 = vmatprep.subr.mxu0 0.0
      %2454 = vmatpush1.msra.mxu0 0.0
      %2455 = vmatprep.subr.mxu0 0.0
      %2456 = vmatpush1.msra.mxu0 0.0
      %2457 = vmatprep.subr.mxu0 0.0
      %2458 = vmatpush1.msra.mxu0 0.0
      %2459 = vmatprep.subr.mxu0 0.0
      %2460 = vmatpush1.msra.mxu0 0.0
      %2461 = vmatprep.subr.mxu0 0.0
      %2462 = vmatpush1.msra.mxu0 0.0
      %2463 = vmatprep.subr.mxu0 0.0
      %2464 = vmatpush1.msra.mxu0 0.0
      %2465 = vmatprep.mubr.f32.mxu0 0.0
      %2466 = vmatmul.mubr.f32.gmra.mrb[0].mxu0 %v2399
      %v2467 = vpop.f32.mrb[0].mxu0
      %v2468 = vadd.f32 %v2395, %v2467
      %v2469 = vpop.f32.mrb[0].mxu0
      %2470 = vdwg.mxu0
      %v2471 = vadd.f32 %v2468, %v1902
      %v2472 = vmax.f32 %v2471, 0.0
      %v2474 = vsel %vm1409, %v2472, 0
      %2476 = vmatprep.subr.mxu0 0.0
      %2477 = vmatpush1.msra.mxu0 %v2474
      %2478 = vmatprep.subr.mxu0 0.0
      %2479 = vmatpush1.msra.mxu0 0.0
      %2480 = vmatprep.subr.mxu0 0.0
      %2481 = vmatpush1.msra.mxu0 0.0
      %2482 = vmatprep.subr.mxu0 0.0
      %2483 = vmatpush1.msra.mxu0 0.0
      %2484 = vmatprep.subr.mxu0 0.0
      %2485 = vmatpush1.msra.mxu0 0.0
      %2486 = vmatprep.subr.mxu0 0.0
      %2487 = vmatpush1.msra.mxu0 0.0
      %2488 = vmatprep.subr.mxu0 0.0
      %2489 = vmatpush1.msra.mxu0 0.0
      %2490 = vmatprep.subr.mxu0 0.0
      %2491 = vmatpush1.msra.mxu0 0.0
      %2492 = vmatprep.subr.mxu0 0.0
      %2493 = vmatpush1.msra.mxu0 0.0
      %2494 = vmatprep.subr.mxu0 0.0
      %2495 = vmatpush1.msra.mxu0 0.0
      %2496 = vmatprep.subr.mxu0 0.0
      %2497 = vmatpush1.msra.mxu0 0.0
      %2498 = vmatprep.subr.mxu0 0.0
      %2499 = vmatpush1.msra.mxu0 0.0
      %2500 = vmatprep.subr.mxu0 0.0
      %2501 = vmatpush1.msra.mxu0 0.0
      %2502 = vmatprep.subr.mxu0 0.0
      %2503 = vmatpush1.msra.mxu0 0.0
      %2504 = vmatprep.subr.mxu0 0.0
      %2505 = vmatpush1.msra.mxu0 0.0
      %2506 = vmatprep.subr.mxu0 0.0
      %2507 = vmatpush1.msra.mxu0 0.0
      %2508 = vmatprep.subr.mxu0 0.0
      %2509 = vmatpush1.msra.mxu0 0.0
      %2510 = vmatprep.subr.mxu0 0.0
      %2511 = vmatpush1.msra.mxu0 0.0
      %2512 = vmatprep.subr.mxu0 0.0
      %2513 = vmatpush1.msra.mxu0 0.0
      %2514 = vmatprep.subr.mxu0 0.0
      %2515 = vmatpush1.msra.mxu0 0.0
      %2516 = vmatprep.subr.mxu0 0.0
      %2517 = vmatpush1.msra.mxu0 0.0
      %2518 = vmatprep.subr.mxu0 0.0
      %2519 = vmatpush1.msra.mxu0 0.0
      %2520 = vmatprep.subr.mxu0 0.0
      %2521 = vmatpush1.msra.mxu0 0.0
      %2522 = vmatprep.subr.mxu0 0.0
      %2523 = vmatpush1.msra.mxu0 0.0
      %2524 = vmatprep.subr.mxu0 0.0
      %2525 = vmatpush1.msra.mxu0 0.0
      %2526 = vmatprep.subr.mxu0 0.0
      %2527 = vmatpush1.msra.mxu0 0.0
      %2528 = vmatprep.subr.mxu0 0.0
      %2529 = vmatpush1.msra.mxu0 0.0
      %2530 = vmatprep.subr.mxu0 0.0
      %2531 = vmatpush1.msra.mxu0 0.0
      %2532 = vmatprep.subr.mxu0 0.0
      %2533 = vmatpush1.msra.mxu0 0.0
      %2534 = vmatprep.subr.mxu0 0.0
      %2535 = vmatpush1.msra.mxu0 0.0
      %2536 = vmatprep.subr.mxu0 0.0
      %2537 = vmatpush1.msra.mxu0 0.0
      %2538 = vmatprep.subr.mxu0 0.0
      %2539 = vmatpush1.msra.mxu0 0.0
      %2540 = vmatprep.mubr.f32.mxu0 0.0
      %2541 = vmatmul.mubr.f32.gmra.mrb[0].mxu0 %v1407
      %v2542 = vpop.f32.mrb[0].mxu0
      %v2543 = vadd.f32 0.0, %v2542
      %v2544 = vpop.f32.mrb[0].mxu0
      %2545 = vdwg.mxu0
      %v2546 = vld [vmem:[%s13] sm:$0xff]
      %v2547 = vld [vmem:[%s13 + $0x8] sm:$0xff]
      %v2548 = vld [vmem:[%s13 + $0x10] sm:$0xff]
      %v2549 = vld [vmem:[%s13 + $0x18] sm:$0xff]
      %v2550 = vld [vmem:[%s13 + $0x20] sm:$0xff]
      %v2551 = vld [vmem:[%s13 + $0x28] sm:$0xff]
      %v2552 = vld [vmem:[%s13 + $0x30] sm:$0xff]
      %v2553 = vld [vmem:[%s13 + $0x38] sm:$0xff]
      %v2554 = vld [vmem:[%s13 + $0x40] sm:$0xff]
      %v2555 = vld [vmem:[%s13 + $0x48] sm:$0xff]
      %v2556 = vld [vmem:[%s13 + $0x50] sm:$0xff]
      %v2557 = vld [vmem:[%s13 + $0x58] sm:$0xff]
      %v2558 = vld [vmem:[%s13 + $0x60] sm:$0xff]
      %v2559 = vld [vmem:[%s13 + $0x68] sm:$0xff]
      %v2560 = vld [vmem:[%s13 + $0x70] sm:$0xff]
      %v2561 = vld [vmem:[%s13 + $0x78] sm:$0xff]
      %2562 = vmatprep.subr.mxu0 0.0
      %2563 = vmatpush1.msra.mxu0 %v2474
      %2564 = vmatprep.subr.mxu0 0.0
      %2565 = vmatpush1.msra.mxu0 0.0
      %2566 = vmatprep.subr.mxu0 0.0
      %2567 = vmatpush1.msra.mxu0 0.0
      %2568 = vmatprep.subr.mxu0 0.0
      %2569 = vmatpush1.msra.mxu0 0.0
      %2570 = vmatprep.subr.mxu0 0.0
      %2571 = vmatpush1.msra.mxu0 0.0
      %2572 = vmatprep.subr.mxu0 0.0
      %2573 = vmatpush1.msra.mxu0 0.0
      %2574 = vmatprep.subr.mxu0 0.0
      %2575 = vmatpush1.msra.mxu0 0.0
      %2576 = vmatprep.subr.mxu0 0.0
      %2577 = vmatpush1.msra.mxu0 0.0
      %2578 = vmatprep.subr.mxu0 0.0
      %2579 = vmatpush1.msra.mxu0 0.0
      %2580 = vmatprep.subr.mxu0 0.0
      %2581 = vmatpush1.msra.mxu0 0.0
      %2582 = vmatprep.subr.mxu0 0.0
      %2583 = vmatpush1.msra.mxu0 0.0
      %2584 = vmatprep.subr.mxu0 0.0
      %2585 = vmatpush1.msra.mxu0 0.0
      %2586 = vmatprep.subr.mxu0 0.0
      %2587 = vmatpush1.msra.mxu0 0.0
      %2588 = vmatprep.subr.mxu0 0.0
      %2589 = vmatpush1.msra.mxu0 0.0
      %2590 = vmatprep.subr.mxu0 0.0
      %2591 = vmatpush1.msra.mxu0 0.0
      %2592 = vmatprep.subr.mxu0 0.0
      %2593 = vmatpush1.msra.mxu0 0.0
      %2594 = vmatprep.subr.mxu0 0.0
      %2595 = vmatpush1.msra.mxu0 0.0
      %2596 = vmatprep.subr.mxu0 0.0
      %2597 = vmatpush1.msra.mxu0 0.0
      %2598 = vmatprep.subr.mxu0 0.0
      %2599 = vmatpush1.msra.mxu0 0.0
      %2600 = vmatprep.subr.mxu0 0.0
      %2601 = vmatpush1.msra.mxu0 0.0
      %2602 = vmatprep.subr.mxu0 0.0
      %2603 = vmatpush1.msra.mxu0 0.0
      %2604 = vmatprep.subr.mxu0 0.0
      %2605 = vmatpush1.msra.mxu0 0.0
      %2606 = vmatprep.subr.mxu0 0.0
      %2607 = vmatpush1.msra.mxu0 0.0
      %2608 = vmatprep.subr.mxu0 0.0
      %2609 = vmatpush1.msra.mxu0 0.0
      %2610 = vmatprep.subr.mxu0 0.0
      %2611 = vmatpush1.msra.mxu0 0.0
      %2612 = vmatprep.subr.mxu0 0.0
      %2613 = vmatpush1.msra.mxu0 0.0
      %2614 = vmatprep.subr.mxu0 0.0
      %2615 = vmatpush1.msra.mxu0 0.0
      %2616 = vmatprep.subr.mxu0 0.0
      %2617 = vmatpush1.msra.mxu0 0.0
      %2618 = vmatprep.subr.mxu0 0.0
      %2619 = vmatpush1.msra.mxu0 0.0
      %2620 = vmatprep.subr.mxu0 0.0
      %2621 = vmatpush1.msra.mxu0 0.0
      %2622 = vmatprep.subr.mxu0 0.0
      %2623 = vmatpush1.msra.mxu0 0.0
      %2624 = vmatprep.subr.mxu0 0.0
      %2625 = vmatpush1.msra.mxu0 0.0
      %2626 = vmatprep.mubr.f32.mxu0 0.0
      %2627 = vmatmul.mubr.f32.gmra.mrb[0].mxu0 %v1502
      %v2628 = vpop.f32.mrb[0].mxu0
      %v2629 = vadd.f32 0.0, %v2628
      %v2630 = vpop.f32.mrb[0].mxu0
      %2631 = vdwg.mxu0
      %s2632 = scalar_lea.vmem %s13, 128
      %v2633 = vld [vmem:[%s2632] sm:$0xff]
      %v2634 = vld [vmem:[%s2632 + $0x8] sm:$0xff]
      %v2635 = vld [vmem:[%s2632 + $0x10] sm:$0xff]
      %v2636 = vld [vmem:[%s2632 + $0x18] sm:$0xff]
      %v2637 = vld [vmem:[%s2632 + $0x20] sm:$0xff]
      %v2638 = vld [vmem:[%s2632 + $0x28] sm:$0xff]
      %v2639 = vld [vmem:[%s2632 + $0x30] sm:$0xff]
      %v2640 = vld [vmem:[%s2632 + $0x38] sm:$0xff]
      %v2641 = vld [vmem:[%s2632 + $0x40] sm:$0xff]
      %v2642 = vld [vmem:[%s2632 + $0x48] sm:$0xff]
      %v2643 = vld [vmem:[%s2632 + $0x50] sm:$0xff]
      %v2644 = vld [vmem:[%s2632 + $0x58] sm:$0xff]
      %v2645 = vld [vmem:[%s2632 + $0x60] sm:$0xff]
      %v2646 = vld [vmem:[%s2632 + $0x68] sm:$0xff]
      %v2647 = vld [vmem:[%s2632 + $0x70] sm:$0xff]
      %v2648 = vld [vmem:[%s2632 + $0x78] sm:$0xff]
      %2649 = vmatprep.subr.mxu0 0.0
      %2650 = vmatpush1.msra.mxu0 %v2633
      %2651 = vmatprep.subr.mxu0 0.0
      %2652 = vmatpush1.msra.mxu0 %v2634
      %2653 = vmatprep.subr.mxu0 0.0
      %2654 = vmatpush1.msra.mxu0 %v2635
      %2655 = vmatprep.subr.mxu0 0.0
      %2656 = vmatpush1.msra.mxu0 %v2636
      %2657 = vmatprep.subr.mxu0 0.0
      %2658 = vmatpush1.msra.mxu0 %v2637
      %2659 = vmatprep.subr.mxu0 0.0
      %2660 = vmatpush1.msra.mxu0 %v2638
      %2661 = vmatprep.subr.mxu0 0.0
      %2662 = vmatpush1.msra.mxu0 %v2639
      %2663 = vmatprep.subr.mxu0 0.0
      %2664 = vmatpush1.msra.mxu0 %v2640
      %2665 = vmatprep.subr.mxu0 0.0
      %2666 = vmatpush1.msra.mxu0 %v2641
      %2667 = vmatprep.subr.mxu0 0.0
      %2668 = vmatpush1.msra.mxu0 %v2642
      %2669 = vmatprep.subr.mxu0 0.0
      %2670 = vmatpush1.msra.mxu0 %v2643
      %2671 = vmatprep.subr.mxu0 0.0
      %2672 = vmatpush1.msra.mxu0 %v2644
      %2673 = vmatprep.subr.mxu0 0.0
      %2674 = vmatpush1.msra.mxu0 %v2645
      %2675 = vmatprep.subr.mxu0 0.0
      %2676 = vmatpush1.msra.mxu0 %v2646
      %2677 = vmatprep.subr.mxu0 0.0
      %2678 = vmatpush1.msra.mxu0 %v2647
      %2679 = vmatprep.subr.mxu0 0.0
      %2680 = vmatpush1.msra.mxu0 %v2648
      %2681 = vmatprep.subr.mxu0 0.0
      %2682 = vmatpush1.msra.mxu0 0.0
      %2683 = vmatprep.subr.mxu0 0.0
      %2684 = vmatpush1.msra.mxu0 0.0
      %2685 = vmatprep.subr.mxu0 0.0
      %2686 = vmatpush1.msra.mxu0 0.0
      %2687 = vmatprep.subr.mxu0 0.0
      %2688 = vmatpush1.msra.mxu0 0.0
      %2689 = vmatprep.subr.mxu0 0.0
      %2690 = vmatpush1.msra.mxu0 0.0
      %2691 = vmatprep.subr.mxu0 0.0
      %2692 = vmatpush1.msra.mxu0 0.0
      %2693 = vmatprep.subr.mxu0 0.0
      %2694 = vmatpush1.msra.mxu0 0.0
      %2695 = vmatprep.subr.mxu0 0.0
      %2696 = vmatpush1.msra.mxu0 0.0
      %2697 = vmatprep.subr.mxu0 0.0
      %2698 = vmatpush1.msra.mxu0 0.0
      %2699 = vmatprep.subr.mxu0 0.0
      %2700 = vmatpush1.msra.mxu0 0.0
      %2701 = vmatprep.subr.mxu0 0.0
      %2702 = vmatpush1.msra.mxu0 0.0
      %2703 = vmatprep.subr.mxu0 0.0
      %2704 = vmatpush1.msra.mxu0 0.0
      %2705 = vmatprep.subr.mxu0 0.0
      %2706 = vmatpush1.msra.mxu0 0.0
      %2707 = vmatprep.subr.mxu0 0.0
      %2708 = vmatpush1.msra.mxu0 0.0
      %2709 = vmatprep.subr.mxu0 0.0
      %2710 = vmatpush1.msra.mxu0 0.0
      %2711 = vmatprep.subr.mxu0 0.0
      %2712 = vmatpush1.msra.mxu0 0.0
      %2713 = vmatprep.mubr.f32.mxu0 0.0
      %2714 = vmatmul.mubr.f32.gmra.mrb[0].mxu0 %v2629
      %v2715 = vpop.f32.mrb[0].mxu0
      %v2716 = vadd.f32 0.0, %v2715
      %v2717 = vpop.f32.mrb[0].mxu0
      %2718 = vdwg.mxu0
      %2719 = vmatprep.subr.mxu0 0.0
      %2720 = vmatpush1.msra.mxu0 %v2546
      %2721 = vmatprep.subr.mxu0 0.0
      %2722 = vmatpush1.msra.mxu0 %v2547
      %2723 = vmatprep.subr.mxu0 0.0
      %2724 = vmatpush1.msra.mxu0 %v2548
      %2725 = vmatprep.subr.mxu0 0.0
      %2726 = vmatpush1.msra.mxu0 %v2549
      %2727 = vmatprep.subr.mxu0 0.0
      %2728 = vmatpush1.msra.mxu0 %v2550
      %2729 = vmatprep.subr.mxu0 0.0
      %2730 = vmatpush1.msra.mxu0 %v2551
      %2731 = vmatprep.subr.mxu0 0.0
      %2732 = vmatpush1.msra.mxu0 %v2552
      %2733 = vmatprep.subr.mxu0 0.0
      %2734 = vmatpush1.msra.mxu0 %v2553
      %2735 = vmatprep.subr.mxu0 0.0
      %2736 = vmatpush1.msra.mxu0 %v2554
      %2737 = vmatprep.subr.mxu0 0.0
      %2738 = vmatpush1.msra.mxu0 %v2555
      %2739 = vmatprep.subr.mxu0 0.0
      %2740 = vmatpush1.msra.mxu0 %v2556
      %2741 = vmatprep.subr.mxu0 0.0
      %2742 = vmatpush1.msra.mxu0 %v2557
      %2743 = vmatprep.subr.mxu0 0.0
      %2744 = vmatpush1.msra.mxu0 %v2558
      %2745 = vmatprep.subr.mxu0 0.0
      %2746 = vmatpush1.msra.mxu0 %v2559
      %2747 = vmatprep.subr.mxu0 0.0
      %2748 = vmatpush1.msra.mxu0 %v2560
      %2749 = vmatprep.subr.mxu0 0.0
      %2750 = vmatpush1.msra.mxu0 %v2561
      %2751 = vmatprep.subr.mxu0 0.0
      %2752 = vmatpush1.msra.mxu0 0.0
      %2753 = vmatprep.subr.mxu0 0.0
      %2754 = vmatpush1.msra.mxu0 0.0
      %2755 = vmatprep.subr.mxu0 0.0
      %2756 = vmatpush1.msra.mxu0 0.0
      %2757 = vmatprep.subr.mxu0 0.0
      %2758 = vmatpush1.msra.mxu0 0.0
      %2759 = vmatprep.subr.mxu0 0.0
      %2760 = vmatpush1.msra.mxu0 0.0
      %2761 = vmatprep.subr.mxu0 0.0
      %2762 = vmatpush1.msra.mxu0 0.0
      %2763 = vmatprep.subr.mxu0 0.0
      %2764 = vmatpush1.msra.mxu0 0.0
      %2765 = vmatprep.subr.mxu0 0.0
      %2766 = vmatpush1.msra.mxu0 0.0
      %2767 = vmatprep.subr.mxu0 0.0
      %2768 = vmatpush1.msra.mxu0 0.0
      %2769 = vmatprep.subr.mxu0 0.0
      %2770 = vmatpush1.msra.mxu0 0.0
      %2771 = vmatprep.subr.mxu0 0.0
      %2772 = vmatpush1.msra.mxu0 0.0
      %2773 = vmatprep.subr.mxu0 0.0
      %2774 = vmatpush1.msra.mxu0 0.0
      %2775 = vmatprep.subr.mxu0 0.0
      %2776 = vmatpush1.msra.mxu0 0.0
      %2777 = vmatprep.subr.mxu0 0.0
      %2778 = vmatpush1.msra.mxu0 0.0
      %2779 = vmatprep.subr.mxu0 0.0
      %2780 = vmatpush1.msra.mxu0 0.0
      %2781 = vmatprep.subr.mxu0 0.0
      %2782 = vmatpush1.msra.mxu0 0.0
      %2783 = vmatprep.mubr.f32.mxu0 0.0
      %2784 = vmatmul.mubr.f32.gmra.mrb[0].mxu0 %v2543
      %v2785 = vpop.f32.mrb[0].mxu0
      %v2786 = vadd.f32 %v2716, %v2785
      %v2787 = vpop.f32.mrb[0].mxu0
      %2788 = vdwg.mxu0
      %2789 = vmatprep.subr.mxu0 0.0
      %2790 = vmatpush1.msra.mxu0 %v2474
      %2791 = vmatprep.subr.mxu0 0.0
      %2792 = vmatpush1.msra.mxu0 0.0
      %2793 = vmatprep.subr.mxu0 0.0
      %2794 = vmatpush1.msra.mxu0 0.0
      %2795 = vmatprep.subr.mxu0 0.0
      %2796 = vmatpush1.msra.mxu0 0.0
      %2797 = vmatprep.subr.mxu0 0.0
      %2798 = vmatpush1.msra.mxu0 0.0
      %2799 = vmatprep.subr.mxu0 0.0
      %2800 = vmatpush1.msra.mxu0 0.0
      %2801 = vmatprep.subr.mxu0 0.0
      %2802 = vmatpush1.msra.mxu0 0.0
      %2803 = vmatprep.subr.mxu0 0.0
      %2804 = vmatpush1.msra.mxu0 0.0
      %2805 = vmatprep.subr.mxu0 0.0
      %2806 = vmatpush1.msra.mxu0 0.0
      %2807 = vmatprep.subr.mxu0 0.0
      %2808 = vmatpush1.msra.mxu0 0.0
      %2809 = vmatprep.subr.mxu0 0.0
      %2810 = vmatpush1.msra.mxu0 0.0
      %2811 = vmatprep.subr.mxu0 0.0
      %2812 = vmatpush1.msra.mxu0 0.0
      %2813 = vmatprep.subr.mxu0 0.0
      %2814 = vmatpush1.msra.mxu0 0.0
      %2815 = vmatprep.subr.mxu0 0.0
      %2816 = vmatpush1.msra.mxu0 0.0
      %2817 = vmatprep.subr.mxu0 0.0
      %2818 = vmatpush1.msra.mxu0 0.0
      %2819 = vmatprep.subr.mxu0 0.0
      %2820 = vmatpush1.msra.mxu0 0.0
      %2821 = vmatprep.subr.mxu0 0.0
      %2822 = vmatpush1.msra.mxu0 0.0
      %2823 = vmatprep.subr.mxu0 0.0
      %2824 = vmatpush1.msra.mxu0 0.0
      %2825 = vmatprep.subr.mxu0 0.0
      %2826 = vmatpush1.msra.mxu0 0.0
      %2827 = vmatprep.subr.mxu0 0.0
      %2828 = vmatpush1.msra.mxu0 0.0
      %2829 = vmatprep.subr.mxu0 0.0
      %2830 = vmatpush1.msra.mxu0 0.0
      %2831 = vmatprep.subr.mxu0 0.0
      %2832 = vmatpush1.msra.mxu0 0.0
      %2833 = vmatprep.subr.mxu0 0.0
      %2834 = vmatpush1.msra.mxu0 0.0
      %2835 = vmatprep.subr.mxu0 0.0
      %2836 = vmatpush1.msra.mxu0 0.0
      %2837 = vmatprep.subr.mxu0 0.0
      %2838 = vmatpush1.msra.mxu0 0.0
      %2839 = vmatprep.subr.mxu0 0.0
      %2840 = vmatpush1.msra.mxu0 0.0
      %2841 = vmatprep.subr.mxu0 0.0
      %2842 = vmatpush1.msra.mxu0 0.0
      %2843 = vmatprep.subr.mxu0 0.0
      %2844 = vmatpush1.msra.mxu0 0.0
      %2845 = vmatprep.subr.mxu0 0.0
      %2846 = vmatpush1.msra.mxu0 0.0
      %2847 = vmatprep.subr.mxu0 0.0
      %2848 = vmatpush1.msra.mxu0 0.0
      %2849 = vmatprep.subr.mxu0 0.0
      %2850 = vmatpush1.msra.mxu0 0.0
      %2851 = vmatprep.subr.mxu0 0.0
      %2852 = vmatpush1.msra.mxu0 0.0
      %2853 = vmatprep.mubr.f32.mxu0 0.0
      %2854 = vmatmul.mubr.f32.gmra.mrb[0].mxu0 %v1734
      %v2855 = vpop.f32.mrb[0].mxu0
      %v2856 = vadd.f32 0.0, %v2855
      %v2857 = vpop.f32.mrb[0].mxu0
      %2858 = vdwg.mxu0
      %s2859 = scalar_lea.vmem %s13, 256
      %v2860 = vld [vmem:[%s2859] sm:$0xff]
      %v2861 = vld [vmem:[%s2859 + $0x8] sm:$0xff]
      %v2862 = vld [vmem:[%s2859 + $0x10] sm:$0xff]
      %v2863 = vld [vmem:[%s2859 + $0x18] sm:$0xff]
      %v2864 = vld [vmem:[%s2859 + $0x20] sm:$0xff]
      %v2865 = vld [vmem:[%s2859 + $0x28] sm:$0xff]
      %v2866 = vld [vmem:[%s2859 + $0x30] sm:$0xff]
      %v2867 = vld [vmem:[%s2859 + $0x38] sm:$0xff]
      %v2868 = vld [vmem:[%s2859 + $0x40] sm:$0xff]
      %v2869 = vld [vmem:[%s2859 + $0x48] sm:$0xff]
      %v2870 = vld [vmem:[%s2859 + $0x50] sm:$0xff]
      %v2871 = vld [vmem:[%s2859 + $0x58] sm:$0xff]
      %v2872 = vld [vmem:[%s2859 + $0x60] sm:$0xff]
      %v2873 = vld [vmem:[%s2859 + $0x68] sm:$0xff]
      %v2874 = vld [vmem:[%s2859 + $0x70] sm:$0xff]
      %v2875 = vld [vmem:[%s2859 + $0x78] sm:$0xff]
      %2876 = vmatprep.subr.mxu0 0.0
      %2877 = vmatpush1.msra.mxu0 %v2860
      %2878 = vmatprep.subr.mxu0 0.0
      %2879 = vmatpush1.msra.mxu0 %v2861
      %2880 = vmatprep.subr.mxu0 0.0
      %2881 = vmatpush1.msra.mxu0 %v2862
      %2882 = vmatprep.subr.mxu0 0.0
      %2883 = vmatpush1.msra.mxu0 %v2863
      %2884 = vmatprep.subr.mxu0 0.0
      %2885 = vmatpush1.msra.mxu0 %v2864
      %2886 = vmatprep.subr.mxu0 0.0
      %2887 = vmatpush1.msra.mxu0 %v2865
      %2888 = vmatprep.subr.mxu0 0.0
      %2889 = vmatpush1.msra.mxu0 %v2866
      %2890 = vmatprep.subr.mxu0 0.0
      %2891 = vmatpush1.msra.mxu0 %v2867
      %2892 = vmatprep.subr.mxu0 0.0
      %2893 = vmatpush1.msra.mxu0 %v2868
      %2894 = vmatprep.subr.mxu0 0.0
      %2895 = vmatpush1.msra.mxu0 %v2869
      %2896 = vmatprep.subr.mxu0 0.0
      %2897 = vmatpush1.msra.mxu0 %v2870
      %2898 = vmatprep.subr.mxu0 0.0
      %2899 = vmatpush1.msra.mxu0 %v2871
      %2900 = vmatprep.subr.mxu0 0.0
      %2901 = vmatpush1.msra.mxu0 %v2872
      %2902 = vmatprep.subr.mxu0 0.0
      %2903 = vmatpush1.msra.mxu0 %v2873
      %2904 = vmatprep.subr.mxu0 0.0
      %2905 = vmatpush1.msra.mxu0 %v2874
      %2906 = vmatprep.subr.mxu0 0.0
      %2907 = vmatpush1.msra.mxu0 %v2875
      %2908 = vmatprep.subr.mxu0 0.0
      %2909 = vmatpush1.msra.mxu0 0.0
      %2910 = vmatprep.subr.mxu0 0.0
      %2911 = vmatpush1.msra.mxu0 0.0
      %2912 = vmatprep.subr.mxu0 0.0
      %2913 = vmatpush1.msra.mxu0 0.0
      %2914 = vmatprep.subr.mxu0 0.0
      %2915 = vmatpush1.msra.mxu0 0.0
      %2916 = vmatprep.subr.mxu0 0.0
      %2917 = vmatpush1.msra.mxu0 0.0
      %2918 = vmatprep.subr.mxu0 0.0
      %2919 = vmatpush1.msra.mxu0 0.0
      %2920 = vmatprep.subr.mxu0 0.0
      %2921 = vmatpush1.msra.mxu0 0.0
      %2922 = vmatprep.subr.mxu0 0.0
      %2923 = vmatpush1.msra.mxu0 0.0
      %2924 = vmatprep.subr.mxu0 0.0
      %2925 = vmatpush1.msra.mxu0 0.0
      %2926 = vmatprep.subr.mxu0 0.0
      %2927 = vmatpush1.msra.mxu0 0.0
      %2928 = vmatprep.subr.mxu0 0.0
      %2929 = vmatpush1.msra.mxu0 0.0
      %2930 = vmatprep.subr.mxu0 0.0
      %2931 = vmatpush1.msra.mxu0 0.0
      %2932 = vmatprep.subr.mxu0 0.0
      %2933 = vmatpush1.msra.mxu0 0.0
      %2934 = vmatprep.subr.mxu0 0.0
      %2935 = vmatpush1.msra.mxu0 0.0
      %2936 = vmatprep.subr.mxu0 0.0
      %2937 = vmatpush1.msra.mxu0 0.0
      %2938 = vmatprep.subr.mxu0 0.0
      %2939 = vmatpush1.msra.mxu0 0.0
      %2940 = vmatprep.mubr.f32.mxu0 0.0
      %2941 = vmatmul.mubr.f32.gmra.mrb[0].mxu0 %v2856
      %v2942 = vpop.f32.mrb[0].mxu0
      %v2943 = vadd.f32 0.0, %v2942
      %v2944 = vpop.f32.mrb[0].mxu0
      %2945 = vdwg.mxu0
      %v2946 = vadd.f32 %v2786, %v2943
      %v2947 = vld [vmem:[%s14] sm:$0x1]
      %v2949 = vlaneseq
      %v2950 = vshrl.u32 %v2949, 7
      %v2951 = vsub.s32 0, %v2950
      %v2952 = vrot.slane %v2947, %v2951
      %v2954 = vadd.f32 %v2946, %v2952
      %v2955 = vmax.f32 %v2954, 0.0
      %v2956 = vld [vmem:[%s15] sm:$0xff]
      %v2957 = vld [vmem:[%s15 + $0x8] sm:$0xff]
      %v2958 = vld [vmem:[%s15 + $0x10] sm:$0xff]
      %v2959 = vld [vmem:[%s15 + $0x18] sm:$0xff]
      %v2960 = vld [vmem:[%s16] sm:$0x1]
      %v2962 = vlaneseq
      %v2963 = vshrl.u32 %v2962, 7
      %v2964 = vsub.s32 0, %v2963
      %v2965 = vrot.slane %v2960, %v2964
      %v2968 = vsel %vm2397, %v2955, 0
      %2970 = vmatprep.subr.mxu0 0.0
      %2971 = vmatpush1.msra.mxu0 %v2956
      %2972 = vmatprep.subr.mxu0 0.0
      %2973 = vmatpush1.msra.mxu0 %v2957
      %2974 = vmatprep.subr.mxu0 0.0
      %2975 = vmatpush1.msra.mxu0 %v2958
      %2976 = vmatprep.subr.mxu0 0.0
      %2977 = vmatpush1.msra.mxu0 %v2959
      %2978 = vmatprep.subr.mxu0 0.0
      %2979 = vmatpush1.msra.mxu0 0.0
      %2980 = vmatprep.subr.mxu0 0.0
      %2981 = vmatpush1.msra.mxu0 0.0
      %2982 = vmatprep.subr.mxu0 0.0
      %2983 = vmatpush1.msra.mxu0 0.0
      %2984 = vmatprep.subr.mxu0 0.0
      %2985 = vmatpush1.msra.mxu0 0.0
      %2986 = vmatprep.subr.mxu0 0.0
      %2987 = vmatpush1.msra.mxu0 0.0
      %2988 = vmatprep.subr.mxu0 0.0
      %2989 = vmatpush1.msra.mxu0 0.0
      %2990 = vmatprep.subr.mxu0 0.0
      %2991 = vmatpush1.msra.mxu0 0.0
      %2992 = vmatprep.subr.mxu0 0.0
      %2993 = vmatpush1.msra.mxu0 0.0
      %2994 = vmatprep.subr.mxu0 0.0
      %2995 = vmatpush1.msra.mxu0 0.0
      %2996 = vmatprep.subr.mxu0 0.0
      %2997 = vmatpush1.msra.mxu0 0.0
      %2998 = vmatprep.subr.mxu0 0.0
      %2999 = vmatpush1.msra.mxu0 0.0
      %3000 = vmatprep.subr.mxu0 0.0
      %3001 = vmatpush1.msra.mxu0 0.0
      %3002 = vmatprep.subr.mxu0 0.0
      %3003 = vmatpush1.msra.mxu0 0.0
      %3004 = vmatprep.subr.mxu0 0.0
      %3005 = vmatpush1.msra.mxu0 0.0
      %3006 = vmatprep.subr.mxu0 0.0
      %3007 = vmatpush1.msra.mxu0 0.0
      %3008 = vmatprep.subr.mxu0 0.0
      %3009 = vmatpush1.msra.mxu0 0.0
      %3010 = vmatprep.subr.mxu0 0.0
      %3011 = vmatpush1.msra.mxu0 0.0
      %3012 = vmatprep.subr.mxu0 0.0
      %3013 = vmatpush1.msra.mxu0 0.0
      %3014 = vmatprep.subr.mxu0 0.0
      %3015 = vmatpush1.msra.mxu0 0.0
      %3016 = vmatprep.subr.mxu0 0.0
      %3017 = vmatpush1.msra.mxu0 0.0
      %3018 = vmatprep.subr.mxu0 0.0
      %3019 = vmatpush1.msra.mxu0 0.0
      %3020 = vmatprep.subr.mxu0 0.0
      %3021 = vmatpush1.msra.mxu0 0.0
      %3022 = vmatprep.subr.mxu0 0.0
      %3023 = vmatpush1.msra.mxu0 0.0
      %3024 = vmatprep.subr.mxu0 0.0
      %3025 = vmatpush1.msra.mxu0 0.0
      %3026 = vmatprep.subr.mxu0 0.0
      %3027 = vmatpush1.msra.mxu0 0.0
      %3028 = vmatprep.subr.mxu0 0.0
      %3029 = vmatpush1.msra.mxu0 0.0
      %3030 = vmatprep.subr.mxu0 0.0
      %3031 = vmatpush1.msra.mxu0 0.0
      %3032 = vmatprep.subr.mxu0 0.0
      %3033 = vmatpush1.msra.mxu0 0.0
      %3034 = vmatprep.mubr.f32.mxu0 0.0
      %3035 = vmatmul.mubr.f32.gmra.mrb[0].mxu0 %v2968
      %v3036 = vpop.f32.mrb[0].mxu0
      %v3037 = vadd.f32 %v2965, %v3036
      %v3038 = vpop.f32.mrb[0].mxu0
      %3039 = vdwg.mxu0
      %v3040 = vadd.f32 %v3037, %v2472
      %v3041 = vmax.f32 %v3040, 0.0
      %3042 = vst [vmem:[%s546] sm:$0xf] %v3041
      %p3043 = scmp.lt.s32.totalorder %s28, 1
      %s3044 = scalar_select %p3043, %s28, 1
      %s3045 = smul.addr %s3044, 4
      %s3046 = scalar_lea.vmem %s17, %s3045
      // Predicated region
      $region89: #{deepmind_encoder.1} parent=87 // pred_check
        %p3047 = pneg %p408
      $region90: #{deepmind_encoder.1} parent=87 // pred_check_branch
        %3049 = sbr.rel (%p3047) target = $region92
      $region91: #{deepmind_encoder.1} parent=87 // pred_region
        _
      $region92: #{deepmind_encoder.1} parent=87 // pred_fallthru
        _
    $region88: #{deepmind_encoder.1} parent=5 // pred_fallthru
      _
    %p3050 = scmp.le.s32.totalorder 2, %s23
    // Predicated region
    $region93: #{deepmind_encoder.1} parent=5 // pred_check
      %p3051 = pneg %p3050
    $region94: #{deepmind_encoder.1} parent=5 // pred_check_branch
      %3053 = sbr.rel (%p3051) target = $region96
    $region95: #{deepmind_encoder.1} parent=5 // pred_region
      %s3054 = ssub.s32 %s23, 2
      // Predicated region
      $region97: #{deepmind_encoder.1} parent=95 // pred_check
        %p3055 = pneg %p414
      $region98: #{deepmind_encoder.1} parent=95 // pred_check_branch
        %3057 = sbr.rel (%p3055) target = $region100
      $region99: #{deepmind_encoder.1} parent=95 // pred_region
        %p3058 = scmp.lt.s32.totalorder %s29, 1
        %s3059 = scalar_select %p3058, %s29, 1
        %s3060 = smul.addr %s3059, 4
        %s3061 = scalar_lea.vmem %s17, %s3060
      $region100: #{deepmind_encoder.1} parent=95 // pred_fallthru
        _
    $region96: #{deepmind_encoder.1} parent=5 // pred_fallthru
      _
  $region6: #{deepmind_encoder.1} parent=0 // loop_footer
    %s27 = sadd.s32 1, %s23
  $region7: #{deepmind_encoder.1} parent=0 // loop_footer_branch
    %22 = sbr.rel target = $region3
  $region8: #{deepmind_encoder.1} parent=0 // loop_exit
    _

</llo_original>
